<compile_context>
chip_gen: v7x
topology: tpu7x:2x2x1
jax: 0.10.0
libtpu: 0.0.40
codegen_flags: <defaults>
</compile_context>

<pallas_src>
import functools

import numpy as np
import jax
import jax.numpy as jnp
from jax.experimental import pallas as pl
from jax.experimental.pallas import tpu as pltpu

NEG_SLOPE = 0.01   # F.leaky_relu default
BN_EPS = 1e-5      # nn.BatchNorm default


def _lrelu(v):
    return jnp.where(v >= 0.0, v, NEG_SLOPE * v)


# ----------------------------------------------------------------------------
# Single fused kernel: conv1 -> bn1 -> lrelu -> conv2 -> bn2 -> lrelu ->
# flatten -> [heur_fc1 -> bn -> lrelu] -> concat -> fc1 -> bn3 -> lrelu -> fc2
# ----------------------------------------------------------------------------
def _net_kernel(xim_ref, x1_ref, w1c_ref, b1_ref, w2c_ref, b2_ref,
                wh_ref, bh_ref, w1_hbm_ref, b1fc_ref, wfc2_ref, bfc2_ref,
                o_ref,
                y1_scr, y1im_scr, y2_scr, flat_scr, w1_vmem, w1_sem,
                *, n, h, w):
    nhw = n * h * w
    h4, w4 = h - 4, w - 4            # spatial size after two valid 3x3 convs
    n_pos = h4 * w4
    pad = y1_scr.shape[0] - nhw

    # Start the dominant HBM transfer (fc1 weight) immediately; it overlaps
    # the heur branch + both convs and is only waited on right before fc1.
    w1_cp = pltpu.make_async_copy(w1_hbm_ref, w1_vmem, w1_sem)
    w1_cp.start()

    # ---- heur branch: heur_fc1 + heur_batch + leaky_relu ----
    hh = jnp.dot(x1_ref[...], wh_ref[...], preferred_element_type=jnp.float32)
    hh = _lrelu(hh + bh_ref[...])
    flat_scr[:, n_pos * 64:] = hh.astype(jnp.bfloat16)       # concat tail

    # ---- conv1 + bn1 + leaky_relu: one (nhw, 18) x (18, 64) matmul ----
    y1 = jnp.dot(xim_ref[...], w1c_ref[...], preferred_element_type=jnp.float32)
    y1 = _lrelu(y1 + b1_ref[...])
    y1_scr[0:nhw, :] = y1.astype(jnp.bfloat16)
    y1_scr[nhw:, :] = jnp.zeros((pad, 64), jnp.bfloat16)

    # ---- conv2 im2col: 9 shifted copies placed at 64-lane column offsets ----
    for k in range(9):
        i, j = divmod(k, 3)
        d = (i * w + j) * n
        y1im_scr[:, 64 * k:64 * (k + 1)] = y1_scr[d:d + nhw, :]

    # ---- conv2 + bn2 + leaky_relu: one (nhw, 576) x (576, 64) bf16 matmul ----
    acc2 = jnp.dot(y1im_scr[...], w2c_ref[...], preferred_element_type=jnp.float32)
    y2_scr[...] = _lrelu(acc2 + b2_ref[...]).astype(jnp.bfloat16)

    # ---- flatten: pack the valid conv2 positions batch-major into fc1 LHS ----
    # dropout1 == identity at inference.
    for p2 in range(n_pos):
        r2, c2 = divmod(p2, w4)
        d2 = (r2 * w + c2) * n
        flat_scr[:, 64 * p2:64 * (p2 + 1)] = y2_scr[d2:d2 + n, :]

    # ---- fc1 + bn3 + leaky_relu: one (n, 1280) x (1280, 1024) bf16 matmul ----
    w1_cp.wait()
    z = jnp.dot(flat_scr[...], w1_vmem[...], preferred_element_type=jnp.float32)
    z = _lrelu(z + b1fc_ref[...])            # dropout2 == identity

    # ---- fc2 (no BN, no activation) ----
    out = jnp.dot(z, wfc2_ref[...], preferred_element_type=jnp.float32) + bfc2_ref[...]
    o_ref[...] = out.astype(o_ref.dtype)


def build_forward(n, h, w):
    """Returns forward(params, x, x1) for x of shape (n, 2, h, w)."""
    assert h >= 5 and w >= 5, "need two valid 3x3 convs"
    nhw = n * h * w
    pad = (2 * w + 2) * n            # max 3x3 shift in the (r, c, batch) layout
    h4, w4 = h - 4, w - 4
    n_pos = h4 * w4
    fc1_in = n_pos * 64 + 256
    kern = functools.partial(_net_kernel, n=n, h=h, w=w)

    vmem = pltpu.MemorySpace.VMEM
    in_specs = [pl.BlockSpec(memory_space=vmem)] * 12
    in_specs[8] = pl.BlockSpec(memory_space=pl.ANY)   # fc1 weight stays in HBM

    call = pl.pallas_call(
        kern,
        out_shape=jax.ShapeDtypeStruct((n, 12), jnp.float32),
        in_specs=in_specs,
        out_specs=pl.BlockSpec(memory_space=vmem),
        scratch_shapes=[
            pltpu.VMEM((nhw + pad, 64), jnp.bfloat16),   # conv1 out (padded)
            pltpu.VMEM((nhw, 576), jnp.bfloat16),        # conv2 im2col
            pltpu.VMEM((nhw, 64), jnp.bfloat16),         # conv2 out
            pltpu.VMEM((n, fc1_in), jnp.bfloat16),       # fc1 LHS (concat)
            pltpu.VMEM((fc1_in, 1024), jnp.bfloat16),    # fc1 weight landing
            pltpu.SemaphoreType.DMA(()),                 # fc1 weight DMA sem
        ],
        compiler_params=pltpu.CompilerParams(vmem_limit_bytes=32 << 20),
    )

    def forward(params, x, x1):
        # NCHW -> rows ordered (r, c, batch), lanes = cin; conv1 im2col (9
        # shifted copies concatenated on the channel axis) built in XLA —
        # input is ~2 KB so wrapper-side cost is negligible.
        x2d = jnp.transpose(x, (2, 3, 0, 1)).reshape(nhw, 2)
        x2d = jnp.pad(x2d, ((0, pad), (0, 0)))
        cols = [x2d[(i * w + j) * n:(i * w + j) * n + nhw, :]
                for i in range(3) for j in range(3)]
        xim = jnp.concatenate(cols, axis=1)              # (nhw, 18)
        return call(xim, x1,
                    params["w1c"], params["b1"], params["w2c"], params["b2"],
                    params["wh"], params["bh"], params["w1"],
                    params["b1fc"], params["wfc2"], params["bfc2"])

    return forward


# ----------------------------------------------------------------------------
# Parameter init: PyTorch-equivalent initializers, then one-time folding of
# eval-mode BatchNorm, biases and the torch NCHW-flatten permutation into
# kernel-ready weight layouts.
# ----------------------------------------------------------------------------
def init_params(key, row_size, width=8):
    ks = jax.random.split(key, 10)
    h4, w4 = row_size - 4, width - 4
    n_pos = h4 * w4
    fc1_in = n_pos * 64 + 256

    def xavier(k, shape, fan_in, fan_out):
        bound = float(np.sqrt(6.0 / (fan_in + fan_out)))
        return jax.random.uniform(k, shape, jnp.float32, -bound, bound)

    def bias_init(k, shape, fan_in):
        bound = float(1.0 / np.sqrt(fan_in))
        return jax.random.uniform(k, shape, jnp.float32, -bound, bound)

    def bn_identity(c):
        return dict(gamma=jnp.ones((c,), jnp.float32), beta=jnp.zeros((c,), jnp.float32),
                    mean=jnp.zeros((c,), jnp.float32), var=jnp.ones((c,), jnp.float32))

    def bn_fold(bn, lin_bias):
        s = bn["gamma"] * jax.lax.rsqrt(bn["var"] + BN_EPS)
        return s, bn["beta"] + (lin_bias - bn["mean"]) * s

    # torch-layout parameters
    conv1_w = xavier(ks[0], (64, 2, 3, 3), 2 * 9, 64 * 9)
    conv1_b = bias_init(ks[1], (64,), 2 * 9)
    conv2_w = xavier(ks[2], (64, 64, 3, 3), 64 * 9, 64 * 9)
    conv2_b = bias_init(ks[3], (64,), 64 * 9)
    heur_w = xavier(ks[4], (256, 12), 12, 256)
    heur_b = bias_init(ks[5], (256,), 12)
    fc1_w = xavier(ks[6], (1024, fc1_in), fc1_in, 1024)
    fc1_b = bias_init(ks[7], (1024,), fc1_in)
    fc2_w = xavier(ks[8], (12, 1024), 1024, 12)
    fc2_b = bias_init(ks[9], (12,), 1024)

    s1, b1 = bn_fold(bn_identity(64), conv1_b)
    s2, b2 = bn_fold(bn_identity(64), conv2_b)
    sh, bh = bn_fold(bn_identity(256), heur_b)
    s3, b3 = bn_fold(bn_identity(1024), fc1_b)

    p = {}
    # conv1 weights -> rows ordered (kh, kw, cin), BN scale folded into columns
    p["w1c"] = jnp.transpose(conv1_w, (2, 3, 1, 0)).reshape(9 * 2, 64) * s1[None, :]
    p["b1"] = b1.reshape(1, 64)
    # conv2 weights -> im2col layout (kh, kw, cin) rows, bf16 for the MXU
    p["w2c"] = (jnp.transpose(conv2_w, (2, 3, 1, 0)).reshape(9 * 64, 64)
                * s2[None, :]).astype(jnp.bfloat16)
    p["b2"] = b2.reshape(1, 64)
    # heur linear
    p["wh"] = heur_w.T * sh[None, :]
    p["bh"] = bh.reshape(1, 256)
    # fc1: torch flatten index = ch*n_pos + p2  ->  conv-block rows (p2, ch),
    # followed by the 256 heur rows; single concatenated bf16 weight.
    wc = fc1_w[:, :64 * n_pos].reshape(1024, 64, n_pos)           # (out, ch, p2)
    wc = jnp.transpose(wc, (2, 1, 0)).reshape(64 * n_pos, 1024)   # row = p2*64 + ch
    w1a = wc * s3[None, :]
    w1b = fc1_w[:, 64 * n_pos:].T * s3[None, :]                   # (256, 1024)
    p["w1"] = jnp.concatenate([w1a, w1b], axis=0).astype(jnp.bfloat16)
    p["b1fc"] = b3.reshape(1, 1024)
    # fc2
    p["wfc2"] = fc2_w.T                      # (1024, 12)
    p["bfc2"] = fc2_b.reshape(1, 12)
    return p


if __name__ == "__main__":
    row_size = 8        # input height; width 8 => fc1_in = (row_size-4)*4*64 + 256
    width = 8
    batch = 4

    root = jax.random.PRNGKey(0)
    k_params, k_x, k_x1 = jax.random.split(root, 3)

    params = init_params(k_params, row_size, width)
    x = jax.random.normal(k_x, (batch, 2, row_size, width), dtype=jnp.float32)
    x1 = jax.random.normal(k_x1, (batch, 12), dtype=jnp.float32)

    fwd = jax.jit(build_forward(batch, row_size, width))
    out = jax.block_until_ready(fwd(params, x, x1))

    assert out.shape == (batch, 12), out.shape
    assert bool(jnp.all(jnp.isfinite(out)))
    print("KERNEL_OK")
</pallas_src>

<mosaic_0001>
module attributes {stable_mosaic.version = 11 : i64} {
  func.func @_net_kernel(%arg0: memref<256x18xf32, #tpu.memory_space<vmem>>, %arg1: memref<4x12xf32, #tpu.memory_space<vmem>>, %arg2: memref<18x64xf32, #tpu.memory_space<vmem>>, %arg3: memref<1x64xf32, #tpu.memory_space<vmem>>, %arg4: memref<576x64xbf16, #tpu.memory_space<vmem>>, %arg5: memref<1x64xf32, #tpu.memory_space<vmem>>, %arg6: memref<12x256xf32, #tpu.memory_space<vmem>>, %arg7: memref<1x256xf32, #tpu.memory_space<vmem>>, %arg8: memref<1280x1024xbf16, #tpu.memory_space<any>>, %arg9: memref<1x1024xf32, #tpu.memory_space<vmem>>, %arg10: memref<1024x12xf32, #tpu.memory_space<vmem>>, %arg11: memref<1x12xf32, #tpu.memory_space<vmem>>, %arg12: memref<4x12xf32, #tpu.memory_space<vmem>>, %arg13: memref<328x64xbf16, #tpu.memory_space<vmem>>, %arg14: memref<256x576xbf16, #tpu.memory_space<vmem>>, %arg15: memref<256x64xbf16, #tpu.memory_space<vmem>>, %arg16: memref<4x1280xbf16, #tpu.memory_space<vmem>>, %arg17: memref<1280x1024xbf16, #tpu.memory_space<vmem>>, %arg18: memref<!tpu.dma_semaphore, #tpu.memory_space<semaphore_mem>>) attributes {dimension_semantics = [], scalar_prefetch = 0 : i64, scratch_operands = 6 : i64, tpu.core_type = #tpu.core_type<tc>} {
    tpu.enqueue_dma source(%arg8 : memref<1280x1024xbf16, #tpu.memory_space<any>>) target(%arg17 : memref<1280x1024xbf16, #tpu.memory_space<vmem>>) target_semaphore(%arg18 : memref<!tpu.dma_semaphore, #tpu.memory_space<semaphore_mem>>)
    %c0 = arith.constant 0 : index
    %c0_0 = arith.constant 0 : index
    %0 = vector.load %arg1[%c0, %c0_0] : memref<4x12xf32, #tpu.memory_space<vmem>>, vector<4x12xf32>
    %c0_1 = arith.constant 0 : index
    %c0_2 = arith.constant 0 : index
    %1 = vector.load %arg6[%c0_1, %c0_2] : memref<12x256xf32, #tpu.memory_space<vmem>>, vector<12x256xf32>
    %cst = arith.constant dense<0.000000e+00> : vector<4x256xf32>
    %2 = tpu.matmul %0, %1, %cst {dimension_numbers = #tpu.dot_dimension_numbers<[1], [0], [0], [1], [0, 0, 1, 1], [], []>} : vector<4x12xf32>, vector<12x256xf32>, vector<4x256xf32> -> vector<4x256xf32>
    %c0_3 = arith.constant 0 : index
    %c0_4 = arith.constant 0 : index
    %3 = vector.load %arg7[%c0_3, %c0_4] : memref<1x256xf32, #tpu.memory_space<vmem>>, vector<1x256xf32>
    %4 = vector.broadcast %3 : vector<1x256xf32> to vector<4x256xf32>
    %5 = arith.addf %2, %4 : vector<4x256xf32>
    %cst_5 = arith.constant 0.000000e+00 : f32
    %6 = vector.broadcast %cst_5 : f32 to vector<4x256xf32>
    %7 = arith.cmpf oge, %5, %6 : vector<4x256xf32>
    %cst_6 = arith.constant 0.00999999977 : f32
    %8 = vector.broadcast %cst_6 : f32 to vector<4x256xf32>
    %9 = arith.mulf %8, %5 : vector<4x256xf32>
    %10 = arith.select %7, %5, %9 : vector<4x256xi1>, vector<4x256xf32>
    %11 = arith.truncf %10 : vector<4x256xf32> to vector<4x256xbf16>
    %c0_7 = arith.constant 0 : index
    %c1024 = arith.constant 1024 : index
    %12 = vector.load %arg16[%c0_7, %c1024] : memref<4x1280xbf16, #tpu.memory_space<vmem>>, vector<4x256xbf16>
    tpu.vector_store %arg16[%c0_7, %c1024], %11 {strides = array<i32>} : memref<4x1280xbf16, #tpu.memory_space<vmem>>, vector<4x256xbf16>,
    %c0_8 = arith.constant 0 : index
    %c0_9 = arith.constant 0 : index
    %13 = vector.load %arg0[%c0_8, %c0_9] : memref<256x18xf32, #tpu.memory_space<vmem>>, vector<256x18xf32>
    %c0_10 = arith.constant 0 : index
    %c0_11 = arith.constant 0 : index
    %14 = vector.load %arg2[%c0_10, %c0_11] : memref<18x64xf32, #tpu.memory_space<vmem>>, vector<18x64xf32>
    %cst_12 = arith.constant dense<0.000000e+00> : vector<256x64xf32>
    %15 = tpu.matmul %13, %14, %cst_12 {dimension_numbers = #tpu.dot_dimension_numbers<[1], [0], [0], [1], [0, 0, 1, 1], [], []>} : vector<256x18xf32>, vector<18x64xf32>, vector<256x64xf32> -> vector<256x64xf32>
    %c0_13 = arith.constant 0 : index
    %c0_14 = arith.constant 0 : index
    %16 = vector.load %arg3[%c0_13, %c0_14] : memref<1x64xf32, #tpu.memory_space<vmem>>, vector<1x64xf32>
    %17 = vector.broadcast %16 : vector<1x64xf32> to vector<256x64xf32>
    %18 = arith.addf %15, %17 : vector<256x64xf32>
    %cst_15 = arith.constant 0.000000e+00 : f32
    %19 = vector.broadcast %cst_15 : f32 to vector<256x64xf32>
    %20 = arith.cmpf oge, %18, %19 : vector<256x64xf32>
    %cst_16 = arith.constant 0.00999999977 : f32
    %21 = vector.broadcast %cst_16 : f32 to vector<256x64xf32>
    %22 = arith.mulf %21, %18 : vector<256x64xf32>
    %23 = arith.select %20, %18, %22 : vector<256x64xi1>, vector<256x64xf32>
    %24 = arith.truncf %23 : vector<256x64xf32> to vector<256x64xbf16>
    %c0_17 = arith.constant 0 : index
    %c0_18 = arith.constant 0 : index
    %25 = vector.load %arg13[%c0_17, %c0_18] : memref<328x64xbf16, #tpu.memory_space<vmem>>, vector<256x64xbf16>
    tpu.vector_store %arg13[%c0_17, %c0_18], %24 {strides = array<i32>} : memref<328x64xbf16, #tpu.memory_space<vmem>>, vector<256x64xbf16>,
    %cst_19 = arith.constant 0.000000e+00 : bf16
    %26 = vector.broadcast %cst_19 : bf16 to vector<72x64xbf16>
    %c256 = arith.constant 256 : index
    %c0_20 = arith.constant 0 : index
    %27 = vector.load %arg13[%c256, %c0_20] : memref<328x64xbf16, #tpu.memory_space<vmem>>, vector<72x64xbf16>
    tpu.vector_store %arg13[%c256, %c0_20], %26 {strides = array<i32>} : memref<328x64xbf16, #tpu.memory_space<vmem>>, vector<72x64xbf16>,
    %c0_21 = arith.constant 0 : index
    %c0_22 = arith.constant 0 : index
    %28 = vector.load %arg13[%c0_21, %c0_22] : memref<328x64xbf16, #tpu.memory_space<vmem>>, vector<256x64xbf16>
    %c0_23 = arith.constant 0 : index
    %c0_24 = arith.constant 0 : index
    %29 = vector.load %arg14[%c0_23, %c0_24] : memref<256x576xbf16, #tpu.memory_space<vmem>>, vector<256x64xbf16>
    tpu.vector_store %arg14[%c0_23, %c0_24], %28 {strides = array<i32>} : memref<256x576xbf16, #tpu.memory_space<vmem>>, vector<256x64xbf16>,
    %c4 = arith.constant 4 : index
    %c0_25 = arith.constant 0 : index
    %30 = vector.load %arg13[%c4, %c0_25] : memref<328x64xbf16, #tpu.memory_space<vmem>>, vector<256x64xbf16>
    %c0_26 = arith.constant 0 : index
    %c64 = arith.constant 64 : index
    %31 = vector.load %arg14[%c0_26, %c64] : memref<256x576xbf16, #tpu.memory_space<vmem>>, vector<256x64xbf16>
    tpu.vector_store %arg14[%c0_26, %c64], %30 {strides = array<i32>} : memref<256x576xbf16, #tpu.memory_space<vmem>>, vector<256x64xbf16>,
    %c8 = arith.constant 8 : index
    %c0_27 = arith.constant 0 : index
    %32 = vector.load %arg13[%c8, %c0_27] : memref<328x64xbf16, #tpu.memory_space<vmem>>, vector<256x64xbf16>
    %c0_28 = arith.constant 0 : index
    %c128 = arith.constant 128 : index
    %33 = vector.load %arg14[%c0_28, %c128] : memref<256x576xbf16, #tpu.memory_space<vmem>>, vector<256x64xbf16>
    tpu.vector_store %arg14[%c0_28, %c128], %32 {strides = array<i32>} : memref<256x576xbf16, #tpu.memory_space<vmem>>, vector<256x64xbf16>,
    %c32 = arith.constant 32 : index
    %c0_29 = arith.constant 0 : index
    %34 = vector.load %arg13[%c32, %c0_29] : memref<328x64xbf16, #tpu.memory_space<vmem>>, vector<256x64xbf16>
    %c0_30 = arith.constant 0 : index
    %c192 = arith.constant 192 : index
    %35 = vector.load %arg14[%c0_30, %c192] : memref<256x576xbf16, #tpu.memory_space<vmem>>, vector<256x64xbf16>
    tpu.vector_store %arg14[%c0_30, %c192], %34 {strides = array<i32>} : memref<256x576xbf16, #tpu.memory_space<vmem>>, vector<256x64xbf16>,
    %c36 = arith.constant 36 : index
    %c0_31 = arith.constant 0 : index
    %36 = vector.load %arg13[%c36, %c0_31] : memref<328x64xbf16, #tpu.memory_space<vmem>>, vector<256x64xbf16>
    %c0_32 = arith.constant 0 : index
    %c256_33 = arith.constant 256 : index
    %37 = vector.load %arg14[%c0_32, %c256_33] : memref<256x576xbf16, #tpu.memory_space<vmem>>, vector<256x64xbf16>
    tpu.vector_store %arg14[%c0_32, %c256_33], %36 {strides = array<i32>} : memref<256x576xbf16, #tpu.memory_space<vmem>>, vector<256x64xbf16>,
    %c40 = arith.constant 40 : index
    %c0_34 = arith.constant 0 : index
    %38 = vector.load %arg13[%c40, %c0_34] : memref<328x64xbf16, #tpu.memory_space<vmem>>, vector<256x64xbf16>
    %c0_35 = arith.constant 0 : index
    %c320 = arith.constant 320 : index
    %39 = vector.load %arg14[%c0_35, %c320] : memref<256x576xbf16, #tpu.memory_space<vmem>>, vector<256x64xbf16>
    tpu.vector_store %arg14[%c0_35, %c320], %38 {strides = array<i32>} : memref<256x576xbf16, #tpu.memory_space<vmem>>, vector<256x64xbf16>,
    %c64_36 = arith.constant 64 : index
    %c0_37 = arith.constant 0 : index
    %40 = vector.load %arg13[%c64_36, %c0_37] : memref<328x64xbf16, #tpu.memory_space<vmem>>, vector<256x64xbf16>
    %c0_38 = arith.constant 0 : index
    %c384 = arith.constant 384 : index
    %41 = vector.load %arg14[%c0_38, %c384] : memref<256x576xbf16, #tpu.memory_space<vmem>>, vector<256x64xbf16>
    tpu.vector_store %arg14[%c0_38, %c384], %40 {strides = array<i32>} : memref<256x576xbf16, #tpu.memory_space<vmem>>, vector<256x64xbf16>,
    %c68 = arith.constant 68 : index
    %c0_39 = arith.constant 0 : index
    %42 = vector.load %arg13[%c68, %c0_39] : memref<328x64xbf16, #tpu.memory_space<vmem>>, vector<256x64xbf16>
    %c0_40 = arith.constant 0 : index
    %c448 = arith.constant 448 : index
    %43 = vector.load %arg14[%c0_40, %c448] : memref<256x576xbf16, #tpu.memory_space<vmem>>, vector<256x64xbf16>
    tpu.vector_store %arg14[%c0_40, %c448], %42 {strides = array<i32>} : memref<256x576xbf16, #tpu.memory_space<vmem>>, vector<256x64xbf16>,
    %c72 = arith.constant 72 : index
    %c0_41 = arith.constant 0 : index
    %44 = vector.load %arg13[%c72, %c0_41] : memref<328x64xbf16, #tpu.memory_space<vmem>>, vector<256x64xbf16>
    %c0_42 = arith.constant 0 : index
    %c512 = arith.constant 512 : index
    %45 = vector.load %arg14[%c0_42, %c512] : memref<256x576xbf16, #tpu.memory_space<vmem>>, vector<256x64xbf16>
    tpu.vector_store %arg14[%c0_42, %c512], %44 {strides = array<i32>} : memref<256x576xbf16, #tpu.memory_space<vmem>>, vector<256x64xbf16>,
    %c0_43 = arith.constant 0 : index
    %c0_44 = arith.constant 0 : index
    %46 = vector.load %arg14[%c0_43, %c0_44] : memref<256x576xbf16, #tpu.memory_space<vmem>>, vector<256x576xbf16>
    %c0_45 = arith.constant 0 : index
    %c0_46 = arith.constant 0 : index
    %47 = vector.load %arg4[%c0_45, %c0_46] : memref<576x64xbf16, #tpu.memory_space<vmem>>, vector<576x64xbf16>
    %cst_47 = arith.constant dense<0.000000e+00> : vector<256x64xf32>
    %48 = tpu.matmul %46, %47, %cst_47 {dimension_numbers = #tpu.dot_dimension_numbers<[1], [0], [0], [1], [0, 0, 1, 1], [], []>} : vector<256x576xbf16>, vector<576x64xbf16>, vector<256x64xf32> -> vector<256x64xf32>
    %c0_48 = arith.constant 0 : index
    %c0_49 = arith.constant 0 : index
    %49 = vector.load %arg5[%c0_48, %c0_49] : memref<1x64xf32, #tpu.memory_space<vmem>>, vector<1x64xf32>
    %50 = vector.broadcast %49 : vector<1x64xf32> to vector<256x64xf32>
    %51 = arith.addf %48, %50 : vector<256x64xf32>
    %cst_50 = arith.constant 0.000000e+00 : f32
    %52 = vector.broadcast %cst_50 : f32 to vector<256x64xf32>
    %53 = arith.cmpf oge, %51, %52 : vector<256x64xf32>
    %cst_51 = arith.constant 0.00999999977 : f32
    %54 = vector.broadcast %cst_51 : f32 to vector<256x64xf32>
    %55 = arith.mulf %54, %51 : vector<256x64xf32>
    %56 = arith.select %53, %51, %55 : vector<256x64xi1>, vector<256x64xf32>
    %57 = arith.truncf %56 : vector<256x64xf32> to vector<256x64xbf16>
    %c0_52 = arith.constant 0 : index
    %c0_53 = arith.constant 0 : index
    %58 = vector.load %arg15[%c0_52, %c0_53] : memref<256x64xbf16, #tpu.memory_space<vmem>>, vector<256x64xbf16>
    tpu.vector_store %arg15[%c0_52, %c0_53], %57 {strides = array<i32>} : memref<256x64xbf16, #tpu.memory_space<vmem>>, vector<256x64xbf16>,
    %c0_54 = arith.constant 0 : index
    %c0_55 = arith.constant 0 : index
    %59 = vector.load %arg15[%c0_54, %c0_55] : memref<256x64xbf16, #tpu.memory_space<vmem>>, vector<4x64xbf16>
    %c0_56 = arith.constant 0 : index
    %c0_57 = arith.constant 0 : index
    %60 = vector.load %arg16[%c0_56, %c0_57] : memref<4x1280xbf16, #tpu.memory_space<vmem>>, vector<4x64xbf16>
    tpu.vector_store %arg16[%c0_56, %c0_57], %59 {strides = array<i32>} : memref<4x1280xbf16, #tpu.memory_space<vmem>>, vector<4x64xbf16>,
    %c4_58 = arith.constant 4 : index
    %c0_59 = arith.constant 0 : index
    %61 = vector.load %arg15[%c4_58, %c0_59] : memref<256x64xbf16, #tpu.memory_space<vmem>>, vector<4x64xbf16>
    %c0_60 = arith.constant 0 : index
    %c64_61 = arith.constant 64 : index
    %62 = vector.load %arg16[%c0_60, %c64_61] : memref<4x1280xbf16, #tpu.memory_space<vmem>>, vector<4x64xbf16>
    tpu.vector_store %arg16[%c0_60, %c64_61], %61 {strides = array<i32>} : memref<4x1280xbf16, #tpu.memory_space<vmem>>, vector<4x64xbf16>,
    %c8_62 = arith.constant 8 : index
    %c0_63 = arith.constant 0 : index
    %63 = vector.load %arg15[%c8_62, %c0_63] : memref<256x64xbf16, #tpu.memory_space<vmem>>, vector<4x64xbf16>
    %c0_64 = arith.constant 0 : index
    %c128_65 = arith.constant 128 : index
    %64 = vector.load %arg16[%c0_64, %c128_65] : memref<4x1280xbf16, #tpu.memory_space<vmem>>, vector<4x64xbf16>
    tpu.vector_store %arg16[%c0_64, %c128_65], %63 {strides = array<i32>} : memref<4x1280xbf16, #tpu.memory_space<vmem>>, vector<4x64xbf16>,
    %c12 = arith.constant 12 : index
    %c0_66 = arith.constant 0 : index
    %65 = vector.load %arg15[%c12, %c0_66] : memref<256x64xbf16, #tpu.memory_space<vmem>>, vector<4x64xbf16>
    %c0_67 = arith.constant 0 : index
    %c192_68 = arith.constant 192 : index
    %66 = vector.load %arg16[%c0_67, %c192_68] : memref<4x1280xbf16, #tpu.memory_space<vmem>>, vector<4x64xbf16>
    tpu.vector_store %arg16[%c0_67, %c192_68], %65 {strides = array<i32>} : memref<4x1280xbf16, #tpu.memory_space<vmem>>, vector<4x64xbf16>,
    %c32_69 = arith.constant 32 : index
    %c0_70 = arith.constant 0 : index
    %67 = vector.load %arg15[%c32_69, %c0_70] : memref<256x64xbf16, #tpu.memory_space<vmem>>, vector<4x64xbf16>
    %c0_71 = arith.constant 0 : index
    %c256_72 = arith.constant 256 : index
    %68 = vector.load %arg16[%c0_71, %c256_72] : memref<4x1280xbf16, #tpu.memory_space<vmem>>, vector<4x64xbf16>
    tpu.vector_store %arg16[%c0_71, %c256_72], %67 {strides = array<i32>} : memref<4x1280xbf16, #tpu.memory_space<vmem>>, vector<4x64xbf16>,
    %c36_73 = arith.constant 36 : index
    %c0_74 = arith.constant 0 : index
    %69 = vector.load %arg15[%c36_73, %c0_74] : memref<256x64xbf16, #tpu.memory_space<vmem>>, vector<4x64xbf16>
    %c0_75 = arith.constant 0 : index
    %c320_76 = arith.constant 320 : index
    %70 = vector.load %arg16[%c0_75, %c320_76] : memref<4x1280xbf16, #tpu.memory_space<vmem>>, vector<4x64xbf16>
    tpu.vector_store %arg16[%c0_75, %c320_76], %69 {strides = array<i32>} : memref<4x1280xbf16, #tpu.memory_space<vmem>>, vector<4x64xbf16>,
    %c40_77 = arith.constant 40 : index
    %c0_78 = arith.constant 0 : index
    %71 = vector.load %arg15[%c40_77, %c0_78] : memref<256x64xbf16, #tpu.memory_space<vmem>>, vector<4x64xbf16>
    %c0_79 = arith.constant 0 : index
    %c384_80 = arith.constant 384 : index
    %72 = vector.load %arg16[%c0_79, %c384_80] : memref<4x1280xbf16, #tpu.memory_space<vmem>>, vector<4x64xbf16>
    tpu.vector_store %arg16[%c0_79, %c384_80], %71 {strides = array<i32>} : memref<4x1280xbf16, #tpu.memory_space<vmem>>, vector<4x64xbf16>,
    %c44 = arith.constant 44 : index
    %c0_81 = arith.constant 0 : index
    %73 = vector.load %arg15[%c44, %c0_81] : memref<256x64xbf16, #tpu.memory_space<vmem>>, vector<4x64xbf16>
    %c0_82 = arith.constant 0 : index
    %c448_83 = arith.constant 448 : index
    %74 = vector.load %arg16[%c0_82, %c448_83] : memref<4x1280xbf16, #tpu.memory_space<vmem>>, vector<4x64xbf16>
    tpu.vector_store %arg16[%c0_82, %c448_83], %73 {strides = array<i32>} : memref<4x1280xbf16, #tpu.memory_space<vmem>>, vector<4x64xbf16>,
    %c64_84 = arith.constant 64 : index
    %c0_85 = arith.constant 0 : index
    %75 = vector.load %arg15[%c64_84, %c0_85] : memref<256x64xbf16, #tpu.memory_space<vmem>>, vector<4x64xbf16>
    %c0_86 = arith.constant 0 : index
    %c512_87 = arith.constant 512 : index
    %76 = vector.load %arg16[%c0_86, %c512_87] : memref<4x1280xbf16, #tpu.memory_space<vmem>>, vector<4x64xbf16>
    tpu.vector_store %arg16[%c0_86, %c512_87], %75 {strides = array<i32>} : memref<4x1280xbf16, #tpu.memory_space<vmem>>, vector<4x64xbf16>,
    %c68_88 = arith.constant 68 : index
    %c0_89 = arith.constant 0 : index
    %77 = vector.load %arg15[%c68_88, %c0_89] : memref<256x64xbf16, #tpu.memory_space<vmem>>, vector<4x64xbf16>
    %c0_90 = arith.constant 0 : index
    %c576 = arith.constant 576 : index
    %78 = vector.load %arg16[%c0_90, %c576] : memref<4x1280xbf16, #tpu.memory_space<vmem>>, vector<4x64xbf16>
    tpu.vector_store %arg16[%c0_90, %c576], %77 {strides = array<i32>} : memref<4x1280xbf16, #tpu.memory_space<vmem>>, vector<4x64xbf16>,
    %c72_91 = arith.constant 72 : index
    %c0_92 = arith.constant 0 : index
    %79 = vector.load %arg15[%c72_91, %c0_92] : memref<256x64xbf16, #tpu.memory_space<vmem>>, vector<4x64xbf16>
    %c0_93 = arith.constant 0 : index
    %c640 = arith.constant 640 : index
    %80 = vector.load %arg16[%c0_93, %c640] : memref<4x1280xbf16, #tpu.memory_space<vmem>>, vector<4x64xbf16>
    tpu.vector_store %arg16[%c0_93, %c640], %79 {strides = array<i32>} : memref<4x1280xbf16, #tpu.memory_space<vmem>>, vector<4x64xbf16>,
    %c76 = arith.constant 76 : index
    %c0_94 = arith.constant 0 : index
    %81 = vector.load %arg15[%c76, %c0_94] : memref<256x64xbf16, #tpu.memory_space<vmem>>, vector<4x64xbf16>
    %c0_95 = arith.constant 0 : index
    %c704 = arith.constant 704 : index
    %82 = vector.load %arg16[%c0_95, %c704] : memref<4x1280xbf16, #tpu.memory_space<vmem>>, vector<4x64xbf16>
    tpu.vector_store %arg16[%c0_95, %c704], %81 {strides = array<i32>} : memref<4x1280xbf16, #tpu.memory_space<vmem>>, vector<4x64xbf16>,
    %c96 = arith.constant 96 : index
    %c0_96 = arith.constant 0 : index
    %83 = vector.load %arg15[%c96, %c0_96] : memref<256x64xbf16, #tpu.memory_space<vmem>>, vector<4x64xbf16>
    %c0_97 = arith.constant 0 : index
    %c768 = arith.constant 768 : index
    %84 = vector.load %arg16[%c0_97, %c768] : memref<4x1280xbf16, #tpu.memory_space<vmem>>, vector<4x64xbf16>
    tpu.vector_store %arg16[%c0_97, %c768], %83 {strides = array<i32>} : memref<4x1280xbf16, #tpu.memory_space<vmem>>, vector<4x64xbf16>,
    %c100 = arith.constant 100 : index
    %c0_98 = arith.constant 0 : index
    %85 = vector.load %arg15[%c100, %c0_98] : memref<256x64xbf16, #tpu.memory_space<vmem>>, vector<4x64xbf16>
    %c0_99 = arith.constant 0 : index
    %c832 = arith.constant 832 : index
    %86 = vector.load %arg16[%c0_99, %c832] : memref<4x1280xbf16, #tpu.memory_space<vmem>>, vector<4x64xbf16>
    tpu.vector_store %arg16[%c0_99, %c832], %85 {strides = array<i32>} : memref<4x1280xbf16, #tpu.memory_space<vmem>>, vector<4x64xbf16>,
    %c104 = arith.constant 104 : index
    %c0_100 = arith.constant 0 : index
    %87 = vector.load %arg15[%c104, %c0_100] : memref<256x64xbf16, #tpu.memory_space<vmem>>, vector<4x64xbf16>
    %c0_101 = arith.constant 0 : index
    %c896 = arith.constant 896 : index
    %88 = vector.load %arg16[%c0_101, %c896] : memref<4x1280xbf16, #tpu.memory_space<vmem>>, vector<4x64xbf16>
    tpu.vector_store %arg16[%c0_101, %c896], %87 {strides = array<i32>} : memref<4x1280xbf16, #tpu.memory_space<vmem>>, vector<4x64xbf16>,
    %c108 = arith.constant 108 : index
    %c0_102 = arith.constant 0 : index
    %89 = vector.load %arg15[%c108, %c0_102] : memref<256x64xbf16, #tpu.memory_space<vmem>>, vector<4x64xbf16>
    %c0_103 = arith.constant 0 : index
    %c960 = arith.constant 960 : index
    %90 = vector.load %arg16[%c0_103, %c960] : memref<4x1280xbf16, #tpu.memory_space<vmem>>, vector<4x64xbf16>
    tpu.vector_store %arg16[%c0_103, %c960], %89 {strides = array<i32>} : memref<4x1280xbf16, #tpu.memory_space<vmem>>, vector<4x64xbf16>,
    tpu.wait_dma2 semaphore(%arg18 : memref<!tpu.dma_semaphore, #tpu.memory_space<semaphore_mem>>) src(%arg8 : memref<1280x1024xbf16, #tpu.memory_space<any>>) dst(%arg17 : memref<1280x1024xbf16, #tpu.memory_space<vmem>>)
    %c0_104 = arith.constant 0 : index
    %c0_105 = arith.constant 0 : index
    %91 = vector.load %arg16[%c0_104, %c0_105] : memref<4x1280xbf16, #tpu.memory_space<vmem>>, vector<4x1280xbf16>
    %c0_106 = arith.constant 0 : index
    %c0_107 = arith.constant 0 : index
    %92 = vector.load %arg17[%c0_106, %c0_107] : memref<1280x1024xbf16, #tpu.memory_space<vmem>>, vector<1280x1024xbf16>
    %cst_108 = arith.constant dense<0.000000e+00> : vector<4x1024xf32>
    %93 = tpu.matmul %91, %92, %cst_108 {dimension_numbers = #tpu.dot_dimension_numbers<[1], [0], [0], [1], [0, 0, 1, 1], [], []>} : vector<4x1280xbf16>, vector<1280x1024xbf16>, vector<4x1024xf32> -> vector<4x1024xf32>
    %c0_109 = arith.constant 0 : index
    %c0_110 = arith.constant 0 : index
    %94 = vector.load %arg9[%c0_109, %c0_110] : memref<1x1024xf32, #tpu.memory_space<vmem>>, vector<1x1024xf32>
    %95 = vector.broadcast %94 : vector<1x1024xf32> to vector<4x1024xf32>
    %96 = arith.addf %93, %95 : vector<4x1024xf32>
    %cst_111 = arith.constant 0.000000e+00 : f32
    %97 = vector.broadcast %cst_111 : f32 to vector<4x1024xf32>
    %98 = arith.cmpf oge, %96, %97 : vector<4x1024xf32>
    %cst_112 = arith.constant 0.00999999977 : f32
    %99 = vector.broadcast %cst_112 : f32 to vector<4x1024xf32>
    %100 = arith.mulf %99, %96 : vector<4x1024xf32>
    %101 = arith.select %98, %96, %100 : vector<4x1024xi1>, vector<4x1024xf32>
    %c0_113 = arith.constant 0 : index
    %c0_114 = arith.constant 0 : index
    %102 = vector.load %arg10[%c0_113, %c0_114] : memref<1024x12xf32, #tpu.memory_space<vmem>>, vector<1024x12xf32>
    %cst_115 = arith.constant dense<0.000000e+00> : vector<4x12xf32>
    %103 = tpu.matmul %101, %102, %cst_115 {dimension_numbers = #tpu.dot_dimension_numbers<[1], [0], [0], [1], [0, 0, 1, 1], [], []>} : vector<4x1024xf32>, vector<1024x12xf32>, vector<4x12xf32> -> vector<4x12xf32>
    %c0_116 = arith.constant 0 : index
    %c0_117 = arith.constant 0 : index
    %104 = vector.load %arg11[%c0_116, %c0_117] : memref<1x12xf32, #tpu.memory_space<vmem>>, vector<1x12xf32>
    %105 = vector.broadcast %104 : vector<1x12xf32> to vector<4x12xf32>
    %106 = arith.addf %103, %105 : vector<4x12xf32>
    %c0_118 = arith.constant 0 : index
    %c0_119 = arith.constant 0 : index
    %107 = vector.load %arg12[%c0_118, %c0_119] : memref<4x12xf32, #tpu.memory_space<vmem>>, vector<4x12xf32>
    tpu.vector_store %arg12[%c0_118, %c0_119], %106 {strides = array<i32>} : memref<4x12xf32, #tpu.memory_space<vmem>>, vector<4x12xf32>,
    return
  }
}

</mosaic_0001>

<llo_original>
// kernel: forward.1
$region0: #{forward.1}
  #allocation0 [shape = 'u32[]', space=smem, size = 0x4, offset = 0x4, fixed_abs, tag = 'smem constant byte address 0x4 - core index']
  #allocation1 [shape = 'u32[144,128]{1,0:T(1,128)}', space=vmem, size = 0x12000, scoped, tag = 'internal scratch']
  #allocation2 [shape = 'bf16[328,64]{1,0:T(8,128)(2,1)}', space=vmem, size = 0x14800, scoped, tag = 'scratch operand']
  #allocation3 [shape = 'bf16[256,576]{1,0:T(16,128)(2,1)}', space=vmem, size = 0x50000, scoped, tag = 'scratch operand']
  #allocation4 [shape = 'bf16[256,64]{1,0:T(16,128)(2,1)}', space=vmem, size = 0x10000, scoped, tag = 'scratch operand']
  #allocation5 [shape = 'bf16[4,1280]{1,0:T(4,128)(2,1)}', space=vmem, size = 0x2800, scoped, tag = 'scratch operand']
  #allocation6 [shape = 'bf16[1280,1024]{1,0:T(16,128)(2,1)}', space=vmem, size = 0x280000, scoped, tag = 'scratch operand']
  #allocation7 [shape = 's32[1]{0}', space=sflag, size = 0x4, scoped, tag = 'scratch operand']
  #allocation23 [shape = 's32[]', space=sflag, size = 0x4, offset = 0, fixed_abs, tag = 'sflag constant byte address 0x0 - dummy sync flag']
  %s0 = inlined_call_operand.vmem [shape: f32[256,18], index: 0, kind: input, shape index: {}]
  %s1 = inlined_call_operand.hbm [shape: f32[4,12], index: 1, kind: input, shape index: {}]
  %s2 = inlined_call_operand.hbm [shape: f32[18,64], index: 2, kind: input, shape index: {}]
  %s3 = inlined_call_operand.hbm [shape: f32[1,64], index: 3, kind: input, shape index: {}]
  %s4 = inlined_call_operand.vmem [shape: bf16[576,64], index: 4, kind: input, shape index: {}]
  %s5 = inlined_call_operand.hbm [shape: f32[1,64], index: 5, kind: input, shape index: {}]
  %s6 = inlined_call_operand.hbm [shape: f32[12,256], index: 6, kind: input, shape index: {}]
  %s7 = inlined_call_operand.hbm [shape: f32[1,256], index: 7, kind: input, shape index: {}]
  %s8 = inlined_call_operand.hbm [shape: bf16[1280,1024], index: 8, kind: input, shape index: {}]
  %s9 = inlined_call_operand.hbm [shape: f32[1,1024], index: 9, kind: input, shape index: {}]
  %s10 = inlined_call_operand.vmem [shape: f32[1024,12], index: 10, kind: input, shape index: {}]
  %s11 = inlined_call_operand.hbm [shape: f32[1,12], index: 11, kind: input, shape index: {}]
  %s12 = inlined_call_operand.hbm [shape: f32[4,12], index: 12, kind: output, shape index: {}]
  %s13 = sld [smem:[#allocation0]]
  $region86: #{forward.1} parent=0
    _
  %s15 = ssub.s32 1, %s13
  %s16 = scalar_select 0, %s15, %s13
  $region1: #{forward.1} parent=0
    #allocation8 [shape = 'u8[2048]{0}', space=vmem, size = 0x800, scoped, tag = 'input window, operand 1, single buffered']
    #allocation9 [shape = 's32[1]{0}', space=sflag, size = 0x4, scoped, tag = 'scoped memory for forward.1']
    #allocation10 [shape = 's32[1]{0}', space=sflag, size = 0x4, scoped, tag = 'scoped memory for forward.1']
    #allocation11 [shape = 'u8[12288]{0}', space=vmem, size = 0x3000, scoped, tag = 'input window, operand 2, single buffered']
    #allocation12 [shape = 's32[1]{0}', space=sflag, size = 0x4, scoped, tag = 'scoped memory for forward.1']
    #allocation13 [shape = 'u8[512]{0}', space=vmem, size = 0x400, scoped, tag = 'input window, operand 3, single buffered']
    #allocation14 [shape = 'u8[512]{0}', space=vmem, size = 0x400, scoped, tag = 'input window, operand 5, single buffered']
    #allocation15 [shape = 's32[1]{0}', space=sflag, size = 0x4, scoped, tag = 'scoped memory for forward.1']
    #allocation16 [shape = 'u8[16384]{0}', space=vmem, size = 0x4000, scoped, tag = 'input window, operand 6, single buffered']
    #allocation17 [shape = 'u8[1024]{0}', space=vmem, size = 0x400, scoped, tag = 'input window, operand 7, single buffered']
    #allocation18 [shape = 's32[1]{0}', space=sflag, size = 0x4, scoped, tag = 'scoped memory for forward.1']
    #allocation19 [shape = 'u8[4096]{0}', space=vmem, size = 0x1000, scoped, tag = 'input window, operand 9, single buffered']
    #allocation20 [shape = 'u8[512]{0}', space=vmem, size = 0x400, scoped, tag = 'input window, operand 11, single buffered']
    #allocation21 [shape = 's32[1]{0}', space=sflag, size = 0x4, scoped, tag = 'scoped memory for forward.1']
    #allocation22 [shape = 'u8[2048]{0}', space=vmem, size = 0x800, scoped, tag = 'output window, operand 0, single buffered']
    #allocation24 [shape = 'u32[9]{0}', space=smem, size = 0x24, scoped, tag = 'DMA stride descriptor']
    %17 = vsyncpa [#allocation9], 0
    %18 = vsyncpa [#allocation12], 0
    %19 = vsyncpa [#allocation15], 0
    %20 = vsyncpa [#allocation18], 0
    %21 = vsyncpa [#allocation21], 0
    %22 = vsyncpa [#allocation10], 0
    // Predicated region
    $region2: #{forward.1} parent=1 // pred_check
      _
    $region3: #{forward.1} parent=1 // pred_check_branch
      %24 = sbr.rel (0) target = $region5
    $region4: #{forward.1} parent=1 // pred_region
      _
    $region5: #{forward.1} parent=1 // pred_fallthru
      _
    // Predicated region
    $region6: #{forward.1} parent=1 // pred_check
      _
    $region7: #{forward.1} parent=1 // pred_check_branch
      %26 = sbr.rel (0) target = $region9
    $region8: #{forward.1} parent=1 // pred_region
      %s28 = ssub.s32 64, 64
      %29 = vsyncadd [#allocation9], %s28
      %s31 = sshll.u32 [#allocation8], 4
      %s32 = int_to_ptr.vmem [resolvable:$true] %s31
      %34 = dma.hbm_to_vmem [thread:$0]  %s1, 64, %s32, [#allocation9]
    $region9: #{forward.1} parent=1 // pred_fallthru
      _
    // Predicated region
    $region10: #{forward.1} parent=1 // pred_check
      _
    $region11: #{forward.1} parent=1 // pred_check_branch
      %36 = sbr.rel (0) target = $region13
    $region12: #{forward.1} parent=1 // pred_region
      %s38 = ssub.s32 384, 384
      %39 = vsyncadd [#allocation12], %s38
      %s40 = sshll.u32 [#allocation11], 4
      %s41 = int_to_ptr.vmem [resolvable:$true] %s40
      %46 = dma.hbm_to_vmem [thread:$0]  %s2, 384, %s41, [#allocation12], 128, 128, 8
    $region13: #{forward.1} parent=1 // pred_fallthru
      _
    // Predicated region
    $region14: #{forward.1} parent=1 // pred_check
      _
    $region15: #{forward.1} parent=1 // pred_check_branch
      %48 = sbr.rel (0) target = $region17
    $region16: #{forward.1} parent=1 // pred_region
      %s50 = ssub.s32 16, 16
      %51 = vsyncadd [#allocation12], %s50
      %s53 = sshll.u32 [#allocation13], 4
      %s54 = int_to_ptr.vmem [resolvable:$true] %s53
      %56 = dma.hbm_to_vmem [thread:$0]  %s3, 16, %s54, [#allocation12]
    $region17: #{forward.1} parent=1 // pred_fallthru
      _
    // Predicated region
    $region18: #{forward.1} parent=1 // pred_check
      _
    $region19: #{forward.1} parent=1 // pred_check_branch
      %58 = sbr.rel (0) target = $region21
    $region20: #{forward.1} parent=1 // pred_region
      _
    $region21: #{forward.1} parent=1 // pred_fallthru
      _
    // Predicated region
    $region22: #{forward.1} parent=1 // pred_check
      _
    $region23: #{forward.1} parent=1 // pred_check_branch
      %60 = sbr.rel (0) target = $region25
    $region24: #{forward.1} parent=1 // pred_region
      %s62 = ssub.s32 16, 16
      %63 = vsyncadd [#allocation15], %s62
      %s65 = sshll.u32 [#allocation14], 4
      %s66 = int_to_ptr.vmem [resolvable:$true] %s65
      %68 = dma.hbm_to_vmem [thread:$0]  %s5, 16, %s66, [#allocation15]
    $region25: #{forward.1} parent=1 // pred_fallthru
      _
    // Predicated region
    $region26: #{forward.1} parent=1 // pred_check
      _
    $region27: #{forward.1} parent=1 // pred_check_branch
      %70 = sbr.rel (0) target = $region29
    $region28: #{forward.1} parent=1 // pred_region
      %s72 = ssub.s32 512, 512
      %73 = vsyncadd [#allocation15], %s72
      %s74 = sshll.u32 [#allocation16], 4
      %s75 = int_to_ptr.vmem [resolvable:$true] %s74
      %80 = dma.hbm_to_vmem [thread:$0]  %s6, 512, %s75, [#allocation15], 256, 256, 16
    $region29: #{forward.1} parent=1 // pred_fallthru
      _
    // Predicated region
    $region30: #{forward.1} parent=1 // pred_check
      _
    $region31: #{forward.1} parent=1 // pred_check_branch
      %82 = sbr.rel (0) target = $region33
    $region32: #{forward.1} parent=1 // pred_region
      %s84 = ssub.s32 32, 32
      %85 = vsyncadd [#allocation18], %s84
      %s87 = sshll.u32 [#allocation17], 4
      %s88 = int_to_ptr.vmem [resolvable:$true] %s87
      %90 = dma.hbm_to_vmem [thread:$0]  %s7, 32, %s88, [#allocation18]
    $region33: #{forward.1} parent=1 // pred_fallthru
      _
    // Predicated region
    $region34: #{forward.1} parent=1 // pred_check
      _
    $region35: #{forward.1} parent=1 // pred_check_branch
      %92 = sbr.rel (0) target = $region37
    $region36: #{forward.1} parent=1 // pred_region
      %s94 = ssub.s32 128, 128
      %95 = vsyncadd [#allocation18], %s94
      %s97 = sshll.u32 [#allocation19], 4
      %s98 = int_to_ptr.vmem [resolvable:$true] %s97
      %100 = dma.hbm_to_vmem [thread:$0]  %s9, 128, %s98, [#allocation18]
    $region37: #{forward.1} parent=1 // pred_fallthru
      _
    // Predicated region
    $region38: #{forward.1} parent=1 // pred_check
      _
    $region39: #{forward.1} parent=1 // pred_check_branch
      %102 = sbr.rel (0) target = $region41
    $region40: #{forward.1} parent=1 // pred_region
      _
    $region41: #{forward.1} parent=1 // pred_fallthru
      _
    // Predicated region
    $region42: #{forward.1} parent=1 // pred_check
      _
    $region43: #{forward.1} parent=1 // pred_check_branch
      %104 = sbr.rel (0) target = $region45
    $region44: #{forward.1} parent=1 // pred_region
      %s106 = ssub.s32 16, 16
      %107 = vsyncadd [#allocation21], %s106
      %s109 = sshll.u32 [#allocation20], 4
      %s110 = int_to_ptr.vmem [resolvable:$true] %s109
      %112 = dma.hbm_to_vmem [thread:$0]  %s11, 16, %s110, [#allocation21]
    $region45: #{forward.1} parent=1 // pred_fallthru
      _
    // Predicated region
    $region46: #{forward.1} parent=1 // pred_check
      _
    $region47: #{forward.1} parent=1 // pred_check_branch
      %114 = sbr.rel (0) target = $region49
    $region48: #{forward.1} parent=1 // pred_region
      %115 = dma.done [#allocation9], 64
    $region49: #{forward.1} parent=1 // pred_fallthru
      _
    // Predicated region
    $region50: #{forward.1} parent=1 // pred_check
      _
    $region51: #{forward.1} parent=1 // pred_check_branch
      %117 = sbr.rel (0) target = $region53
    $region52: #{forward.1} parent=1 // pred_region
      %118 = dma.done [#allocation12], 384
    $region53: #{forward.1} parent=1 // pred_fallthru
      _
    // Predicated region
    $region54: #{forward.1} parent=1 // pred_check
      _
    $region55: #{forward.1} parent=1 // pred_check_branch
      %120 = sbr.rel (0) target = $region57
    $region56: #{forward.1} parent=1 // pred_region
      %121 = dma.done [#allocation12], 16
    $region57: #{forward.1} parent=1 // pred_fallthru
      _
    // Predicated region
    $region58: #{forward.1} parent=1 // pred_check
      _
    $region59: #{forward.1} parent=1 // pred_check_branch
      %123 = sbr.rel (0) target = $region61
    $region60: #{forward.1} parent=1 // pred_region
      %124 = dma.done [#allocation15], 16
    $region61: #{forward.1} parent=1 // pred_fallthru
      _
    // Predicated region
    $region62: #{forward.1} parent=1 // pred_check
      _
    $region63: #{forward.1} parent=1 // pred_check_branch
      %126 = sbr.rel (0) target = $region65
    $region64: #{forward.1} parent=1 // pred_region
      %127 = dma.done [#allocation15], 512
    $region65: #{forward.1} parent=1 // pred_fallthru
      _
    // Predicated region
    $region66: #{forward.1} parent=1 // pred_check
      _
    $region67: #{forward.1} parent=1 // pred_check_branch
      %129 = sbr.rel (0) target = $region69
    $region68: #{forward.1} parent=1 // pred_region
      %130 = dma.done [#allocation18], 32
    $region69: #{forward.1} parent=1 // pred_fallthru
      _
    // Predicated region
    $region70: #{forward.1} parent=1 // pred_check
      _
    $region71: #{forward.1} parent=1 // pred_check_branch
      %132 = sbr.rel (0) target = $region73
    $region72: #{forward.1} parent=1 // pred_region
      %133 = dma.done [#allocation18], 128
    $region73: #{forward.1} parent=1 // pred_fallthru
      _
    // Predicated region
    $region74: #{forward.1} parent=1 // pred_check
      _
    $region75: #{forward.1} parent=1 // pred_check_branch
      %135 = sbr.rel (0) target = $region77
    $region76: #{forward.1} parent=1 // pred_region
      %136 = dma.done [#allocation21], 16
    $region77: #{forward.1} parent=1 // pred_fallthru
      _
    %s139 = sshll.u32 1, 14
    %s140 = sxor.u32 4294967295, %s139
    %s142 = sld [smem:[#allocation0]]
    %s143 = sadd.s32 2, %s142
    %s145 = sshll.u32 7, 26
    %s146 = sxor.u32 4294967295, %s145
    %s147 = sand.u32 0, %s146
    %s148 = sshll.u32 %s143, 26
    %s149 = sor.u32 %s147, %s148
    %s150 = sshll.u32 [#allocation6], 4
    %s151 = int_to_ptr.vmem [resolvable:$true] %s150
    %154 = sst [smem:[#allocation24]] 1024
    %s155 = scalar_lea.smem [#allocation24], 1
    %156 = sst [smem:[%s155]] 1024
    %s157 = scalar_lea.smem [#allocation24], 2
    %158 = sst [smem:[%s157]] 8
    %s159 = scalar_lea.smem [#allocation24], 3
    %160 = sst [smem:[%s159]] 64
    %s161 = scalar_lea.smem [#allocation24], 4
    %162 = sst [smem:[%s161]] 128
    %s163 = scalar_lea.smem [#allocation24], 5
    %164 = sst [smem:[%s163]] 2
    %s165 = scalar_lea.smem [#allocation24], 6
    %166 = sst [smem:[%s165]] 512
    %s167 = scalar_lea.smem [#allocation24], 7
    %168 = sst [smem:[%s167]] 64
    %s169 = scalar_lea.smem [#allocation24], 8
    %170 = sst [smem:[%s169]] 4
    %172 = dma.general %s8, 81920, %s151, [#allocation7], [#allocation23], [#allocation24], %s149, 0
    %v173 = vld [vmem:[#allocation8] sm:$0xf]
    %v174 = vld [vmem:[#allocation16] sm:$0xff]
    %v175 = vld [vmem:[#allocation16 + $0x8] sm:$0xff]
    %v176 = vld [vmem:[#allocation16 + $0x10] sm:$0xf]
    %v177 = vld [vmem:[#allocation16 + $0x18] sm:$0xf]
    %v178 = vld [vmem:[#allocation17] sm:$0x3]
    %v180 = vlaneseq
    %v181 = vshrl.u32 %v180, 7
    %v182 = vsub.s32 0, %v181
    %v183 = vrot.slane %v178, %v182
    %v184 = vlaneseq
    %v185 = vshrl.u32 %v184, 7
    %v186 = vsub.s32 1, %v185
    %v187 = vrot.slane %v178, %v186
    %vm190 = vcmask 97280
    %v192 = vsel %vm190, %v173, 0
    %vm194 = vcmask 1043456
    %v196 = vsel %vm194, %v176, 0
    %v199 = vsel %vm194, %v177, 0
    %201 = vmatprep.subr.mxu0 %v175
    %202 = vmatpush1.msra.mxu0 %v174
    %203 = vmatprep.subr.mxu0 %v199
    %204 = vmatpush1.msra.mxu0 %v196
    %205 = vmatprep.subr.mxu0 0.0
    %206 = vmatpush1.msra.mxu0 0.0
    %207 = vmatprep.subr.mxu0 0.0
    %208 = vmatpush1.msra.mxu0 0.0
    %209 = vmatprep.subr.mxu0 0.0
    %210 = vmatpush1.msra.mxu0 0.0
    %211 = vmatprep.subr.mxu0 0.0
    %212 = vmatpush1.msra.mxu0 0.0
    %213 = vmatprep.subr.mxu0 0.0
    %214 = vmatpush1.msra.mxu0 0.0
    %215 = vmatprep.subr.mxu0 0.0
    %216 = vmatpush1.msra.mxu0 0.0
    %217 = vmatprep.subr.mxu0 0.0
    %218 = vmatpush1.msra.mxu0 0.0
    %219 = vmatprep.subr.mxu0 0.0
    %220 = vmatpush1.msra.mxu0 0.0
    %221 = vmatprep.subr.mxu0 0.0
    %222 = vmatpush1.msra.mxu0 0.0
    %223 = vmatprep.subr.mxu0 0.0
    %224 = vmatpush1.msra.mxu0 0.0
    %225 = vmatprep.subr.mxu0 0.0
    %226 = vmatpush1.msra.mxu0 0.0
    %227 = vmatprep.subr.mxu0 0.0
    %228 = vmatpush1.msra.mxu0 0.0
    %229 = vmatprep.subr.mxu0 0.0
    %230 = vmatpush1.msra.mxu0 0.0
    %231 = vmatprep.subr.mxu0 0.0
    %232 = vmatpush1.msra.mxu0 0.0
    %233 = vmatprep.subr.mxu0 0.0
    %234 = vmatpush1.msra.mxu0 0.0
    %235 = vmatprep.subr.mxu0 0.0
    %236 = vmatpush1.msra.mxu0 0.0
    %237 = vmatprep.subr.mxu0 0.0
    %238 = vmatpush1.msra.mxu0 0.0
    %239 = vmatprep.subr.mxu0 0.0
    %240 = vmatpush1.msra.mxu0 0.0
    %241 = vmatprep.subr.mxu0 0.0
    %242 = vmatpush1.msra.mxu0 0.0
    %243 = vmatprep.subr.mxu0 0.0
    %244 = vmatpush1.msra.mxu0 0.0
    %245 = vmatprep.subr.mxu0 0.0
    %246 = vmatpush1.msra.mxu0 0.0
    %247 = vmatprep.subr.mxu0 0.0
    %248 = vmatpush1.msra.mxu0 0.0
    %249 = vmatprep.subr.mxu0 0.0
    %250 = vmatpush1.msra.mxu0 0.0
    %251 = vmatprep.subr.mxu0 0.0
    %252 = vmatpush1.msra.mxu0 0.0
    %253 = vmatprep.subr.mxu0 0.0
    %254 = vmatpush1.msra.mxu0 0.0
    %255 = vmatprep.subr.mxu0 0.0
    %256 = vmatpush1.msra.mxu0 0.0
    %257 = vmatprep.subr.mxu0 0.0
    %258 = vmatpush1.msra.mxu0 0.0
    %259 = vmatprep.subr.mxu0 0.0
    %260 = vmatpush1.msra.mxu0 0.0
    %261 = vmatprep.subr.mxu0 0.0
    %262 = vmatpush1.msra.mxu0 0.0
    %263 = vmatprep.subr.mxu0 0.0
    %264 = vmatpush1.msra.mxu0 0.0
    %265 = vmatprep.mubr.f32.mxu0 0.0
    %266 = vmatmul.mubr.f32.gmra.mrb[0].mxu0 %v192
    %v267 = vpop.f32.mrb[0].mxu0
    %v268 = vadd.f32 %v183, %v267
    %v269 = vpop.f32.mrb[0].mxu0
    %v270 = vadd.f32 %v187, %v269
    %271 = vdwg.mxu0
    %vm272 = vcmp.ge.f32.partialorder %v268, 0.0
    %vm273 = vcmp.ge.f32.partialorder %v270, 0.0
    %v274 = vmul.f32 %v268, 0.01
    %v275 = vmul.f32 %v270, 0.01
    %v276 = vsel %vm272, %v268, %v274
    %v277 = vsel %vm273, %v270, %v275
    %v278 = vpack.c.bf16 %v276, %v276
    %v279 = vpack.c.bf16 %v277, %v277
    %v282 = vcombine.low %v278, %v279
    %v284 = vunpack.c.l.s4 1983009808
    %v285 = vunpack.c.0.s8 %v284
    %v286 = vlaneseq
    %v287 = vshrl.u32 %v286, 7
    %v288 = vsub.s32 %v285, %v287
    %v289 = vrot.slane %v282, %v288
    %291 = vst [vmem:[#allocation5 + $0x10] sm:$0xf] %v289
    %v292 = vld [vmem:[%s0] sm:$0xff]
    %v293 = vld [vmem:[%s0 + $0x8] sm:$0xff]
    %v294 = vld [vmem:[%s0 + $0x10] sm:$0xff]
    %v295 = vld [vmem:[%s0 + $0x18] sm:$0xff]
    %v296 = vld [vmem:[%s0 + $0x20] sm:$0xff]
    %v297 = vld [vmem:[%s0 + $0x28] sm:$0xff]
    %v298 = vld [vmem:[%s0 + $0x30] sm:$0xff]
    %v299 = vld [vmem:[%s0 + $0x38] sm:$0xff]
    %v300 = vld [vmem:[%s0 + $0x40] sm:$0xff]
    %v301 = vld [vmem:[%s0 + $0x48] sm:$0xff]
    %v302 = vld [vmem:[%s0 + $0x50] sm:$0xff]
    %v303 = vld [vmem:[%s0 + $0x58] sm:$0xff]
    %v304 = vld [vmem:[%s0 + $0x60] sm:$0xff]
    %v305 = vld [vmem:[%s0 + $0x68] sm:$0xff]
    %v306 = vld [vmem:[%s0 + $0x70] sm:$0xff]
    %v307 = vld [vmem:[%s0 + $0x78] sm:$0xff]
    %v308 = vld [vmem:[%s0 + $0x80] sm:$0xff]
    %v309 = vld [vmem:[%s0 + $0x88] sm:$0xff]
    %v310 = vld [vmem:[%s0 + $0x90] sm:$0xff]
    %v311 = vld [vmem:[%s0 + $0x98] sm:$0xff]
    %v312 = vld [vmem:[%s0 + $0xa0] sm:$0xff]
    %v313 = vld [vmem:[%s0 + $0xa8] sm:$0xff]
    %v314 = vld [vmem:[%s0 + $0xb0] sm:$0xff]
    %v315 = vld [vmem:[%s0 + $0xb8] sm:$0xff]
    %v316 = vld [vmem:[%s0 + $0xc0] sm:$0xff]
    %v317 = vld [vmem:[%s0 + $0xc8] sm:$0xff]
    %v318 = vld [vmem:[%s0 + $0xd0] sm:$0xff]
    %v319 = vld [vmem:[%s0 + $0xd8] sm:$0xff]
    %v320 = vld [vmem:[%s0 + $0xe0] sm:$0xff]
    %v321 = vld [vmem:[%s0 + $0xe8] sm:$0xff]
    %v322 = vld [vmem:[%s0 + $0xf0] sm:$0xff]
    %v323 = vld [vmem:[%s0 + $0xf8] sm:$0xff]
    %v324 = vld [vmem:[#allocation11] sm:$0xff]
    %v325 = vld [vmem:[#allocation11 + $0x8] sm:$0xff]
    %v326 = vld [vmem:[#allocation11 + $0x10] sm:$0x3]
    %v327 = vld [vmem:[#allocation13] sm:$0x1]
    %v329 = vlaneseq
    %v330 = vshrl.u32 %v329, 7
    %v331 = vsub.s32 0, %v330
    %v332 = vrot.slane %v327, %v331
    %vm334 = vcmask 146432
    %v336 = vsel %vm334, %v292, 0
    %v339 = vsel %vm334, %v293, 0
    %v342 = vsel %vm334, %v294, 0
    %v345 = vsel %vm334, %v295, 0
    %v348 = vsel %vm334, %v296, 0
    %v351 = vsel %vm334, %v297, 0
    %v354 = vsel %vm334, %v298, 0
    %v357 = vsel %vm334, %v299, 0
    %v360 = vsel %vm334, %v300, 0
    %v363 = vsel %vm334, %v301, 0
    %v366 = vsel %vm334, %v302, 0
    %v369 = vsel %vm334, %v303, 0
    %v372 = vsel %vm334, %v304, 0
    %v375 = vsel %vm334, %v305, 0
    %v378 = vsel %vm334, %v306, 0
    %v381 = vsel %vm334, %v307, 0
    %v384 = vsel %vm334, %v308, 0
    %v387 = vsel %vm334, %v309, 0
    %v390 = vsel %vm334, %v310, 0
    %v393 = vsel %vm334, %v311, 0
    %v396 = vsel %vm334, %v312, 0
    %v399 = vsel %vm334, %v313, 0
    %v402 = vsel %vm334, %v314, 0
    %v405 = vsel %vm334, %v315, 0
    %v408 = vsel %vm334, %v316, 0
    %v411 = vsel %vm334, %v317, 0
    %v414 = vsel %vm334, %v318, 0
    %v417 = vsel %vm334, %v319, 0
    %v420 = vsel %vm334, %v320, 0
    %v423 = vsel %vm334, %v321, 0
    %v426 = vsel %vm334, %v322, 0
    %v429 = vsel %vm334, %v323, 0
    %vm431 = vcmask 1041408
    %v433 = vsel %vm431, %v326, 0
    %435 = vmatprep.subr.mxu0 0.0
    %436 = vmatpush1.msra.mxu0 %v324
    %437 = vmatprep.subr.mxu0 0.0
    %438 = vmatpush1.msra.mxu0 %v325
    %439 = vmatprep.subr.mxu0 0.0
    %440 = vmatpush1.msra.mxu0 %v433
    %441 = vmatprep.subr.mxu0 0.0
    %442 = vmatpush1.msra.mxu0 0.0
    %443 = vmatprep.subr.mxu0 0.0
    %444 = vmatpush1.msra.mxu0 0.0
    %445 = vmatprep.subr.mxu0 0.0
    %446 = vmatpush1.msra.mxu0 0.0
    %447 = vmatprep.subr.mxu0 0.0
    %448 = vmatpush1.msra.mxu0 0.0
    %449 = vmatprep.subr.mxu0 0.0
    %450 = vmatpush1.msra.mxu0 0.0
    %451 = vmatprep.subr.mxu0 0.0
    %452 = vmatpush1.msra.mxu0 0.0
    %453 = vmatprep.subr.mxu0 0.0
    %454 = vmatpush1.msra.mxu0 0.0
    %455 = vmatprep.subr.mxu0 0.0
    %456 = vmatpush1.msra.mxu0 0.0
    %457 = vmatprep.subr.mxu0 0.0
    %458 = vmatpush1.msra.mxu0 0.0
    %459 = vmatprep.subr.mxu0 0.0
    %460 = vmatpush1.msra.mxu0 0.0
    %461 = vmatprep.subr.mxu0 0.0
    %462 = vmatpush1.msra.mxu0 0.0
    %463 = vmatprep.subr.mxu0 0.0
    %464 = vmatpush1.msra.mxu0 0.0
    %465 = vmatprep.subr.mxu0 0.0
    %466 = vmatpush1.msra.mxu0 0.0
    %467 = vmatprep.subr.mxu0 0.0
    %468 = vmatpush1.msra.mxu0 0.0
    %469 = vmatprep.subr.mxu0 0.0
    %470 = vmatpush1.msra.mxu0 0.0
    %471 = vmatprep.subr.mxu0 0.0
    %472 = vmatpush1.msra.mxu0 0.0
    %473 = vmatprep.subr.mxu0 0.0
    %474 = vmatpush1.msra.mxu0 0.0
    %475 = vmatprep.subr.mxu0 0.0
    %476 = vmatpush1.msra.mxu0 0.0
    %477 = vmatprep.subr.mxu0 0.0
    %478 = vmatpush1.msra.mxu0 0.0
    %479 = vmatprep.subr.mxu0 0.0
    %480 = vmatpush1.msra.mxu0 0.0
    %481 = vmatprep.subr.mxu0 0.0
    %482 = vmatpush1.msra.mxu0 0.0
    %483 = vmatprep.subr.mxu0 0.0
    %484 = vmatpush1.msra.mxu0 0.0
    %485 = vmatprep.subr.mxu0 0.0
    %486 = vmatpush1.msra.mxu0 0.0
    %487 = vmatprep.subr.mxu0 0.0
    %488 = vmatpush1.msra.mxu0 0.0
    %489 = vmatprep.subr.mxu0 0.0
    %490 = vmatpush1.msra.mxu0 0.0
    %491 = vmatprep.subr.mxu0 0.0
    %492 = vmatpush1.msra.mxu0 0.0
    %493 = vmatprep.subr.mxu0 0.0
    %494 = vmatpush1.msra.mxu0 0.0
    %495 = vmatprep.subr.mxu0 0.0
    %496 = vmatpush1.msra.mxu0 0.0
    %497 = vmatprep.subr.mxu0 0.0
    %498 = vmatpush1.msra.mxu0 0.0
    %499 = vmatprep.mubr.f32.mxu0 0.0
    %500 = vmatmul.mubr.f32.gmra.mrb[0].mxu0 %v336
    %v501 = vpop.f32.mrb[0].mxu0
    %v502 = vadd.f32 %v332, %v501
    %v503 = vpop.f32.mrb[0].mxu0
    %504 = vmatprep.mubr.f32.mxu0 0.0
    %505 = vmatmul.mubr.f32.gmra.mrb[0].mxu0 %v339
    %v506 = vpop.f32.mrb[0].mxu0
    %v507 = vadd.f32 %v332, %v506
    %v508 = vpop.f32.mrb[0].mxu0
    %509 = vmatprep.mubr.f32.mxu0 0.0
    %510 = vmatmul.mubr.f32.gmra.mrb[0].mxu0 %v342
    %v511 = vpop.f32.mrb[0].mxu0
    %v512 = vadd.f32 %v332, %v511
    %v513 = vpop.f32.mrb[0].mxu0
    %514 = vmatprep.mubr.f32.mxu0 0.0
    %515 = vmatmul.mubr.f32.gmra.mrb[0].mxu0 %v345
    %v516 = vpop.f32.mrb[0].mxu0
    %v517 = vadd.f32 %v332, %v516
    %v518 = vpop.f32.mrb[0].mxu0
    %519 = vmatprep.mubr.f32.mxu0 0.0
    %520 = vmatmul.mubr.f32.gmra.mrb[0].mxu0 %v348
    %v521 = vpop.f32.mrb[0].mxu0
    %v522 = vadd.f32 %v332, %v521
    %v523 = vpop.f32.mrb[0].mxu0
    %524 = vmatprep.mubr.f32.mxu0 0.0
    %525 = vmatmul.mubr.f32.gmra.mrb[0].mxu0 %v351
    %v526 = vpop.f32.mrb[0].mxu0
    %v527 = vadd.f32 %v332, %v526
    %v528 = vpop.f32.mrb[0].mxu0
    %529 = vmatprep.mubr.f32.mxu0 0.0
    %530 = vmatmul.mubr.f32.gmra.mrb[0].mxu0 %v354
    %v531 = vpop.f32.mrb[0].mxu0
    %v532 = vadd.f32 %v332, %v531
    %v533 = vpop.f32.mrb[0].mxu0
    %534 = vmatprep.mubr.f32.mxu0 0.0
    %535 = vmatmul.mubr.f32.gmra.mrb[0].mxu0 %v357
    %v536 = vpop.f32.mrb[0].mxu0
    %v537 = vadd.f32 %v332, %v536
    %v538 = vpop.f32.mrb[0].mxu0
    %539 = vmatprep.mubr.f32.mxu0 0.0
    %540 = vmatmul.mubr.f32.gmra.mrb[0].mxu0 %v360
    %v541 = vpop.f32.mrb[0].mxu0
    %v542 = vadd.f32 %v332, %v541
    %v543 = vpop.f32.mrb[0].mxu0
    %544 = vmatprep.mubr.f32.mxu0 0.0
    %545 = vmatmul.mubr.f32.gmra.mrb[0].mxu0 %v363
    %v546 = vpop.f32.mrb[0].mxu0
    %v547 = vadd.f32 %v332, %v546
    %v548 = vpop.f32.mrb[0].mxu0
    %549 = vmatprep.mubr.f32.mxu0 0.0
    %550 = vmatmul.mubr.f32.gmra.mrb[0].mxu0 %v366
    %v551 = vpop.f32.mrb[0].mxu0
    %v552 = vadd.f32 %v332, %v551
    %v553 = vpop.f32.mrb[0].mxu0
    %554 = vmatprep.mubr.f32.mxu0 0.0
    %555 = vmatmul.mubr.f32.gmra.mrb[0].mxu0 %v369
    %v556 = vpop.f32.mrb[0].mxu0
    %v557 = vadd.f32 %v332, %v556
    %v558 = vpop.f32.mrb[0].mxu0
    %559 = vmatprep.mubr.f32.mxu0 0.0
    %560 = vmatmul.mubr.f32.gmra.mrb[0].mxu0 %v372
    %v561 = vpop.f32.mrb[0].mxu0
    %v562 = vadd.f32 %v332, %v561
    %v563 = vpop.f32.mrb[0].mxu0
    %564 = vmatprep.mubr.f32.mxu0 0.0
    %565 = vmatmul.mubr.f32.gmra.mrb[0].mxu0 %v375
    %v566 = vpop.f32.mrb[0].mxu0
    %v567 = vadd.f32 %v332, %v566
    %v568 = vpop.f32.mrb[0].mxu0
    %569 = vmatprep.mubr.f32.mxu0 0.0
    %570 = vmatmul.mubr.f32.gmra.mrb[0].mxu0 %v378
    %v571 = vpop.f32.mrb[0].mxu0
    %v572 = vadd.f32 %v332, %v571
    %v573 = vpop.f32.mrb[0].mxu0
    %574 = vmatprep.mubr.f32.mxu0 0.0
    %575 = vmatmul.mubr.f32.gmra.mrb[0].mxu0 %v381
    %v576 = vpop.f32.mrb[0].mxu0
    %v577 = vadd.f32 %v332, %v576
    %v578 = vpop.f32.mrb[0].mxu0
    %579 = vmatprep.mubr.f32.mxu0 0.0
    %580 = vmatmul.mubr.f32.gmra.mrb[0].mxu0 %v384
    %v581 = vpop.f32.mrb[0].mxu0
    %v582 = vadd.f32 %v332, %v581
    %v583 = vpop.f32.mrb[0].mxu0
    %584 = vmatprep.mubr.f32.mxu0 0.0
    %585 = vmatmul.mubr.f32.gmra.mrb[0].mxu0 %v387
    %v586 = vpop.f32.mrb[0].mxu0
    %v587 = vadd.f32 %v332, %v586
    %v588 = vpop.f32.mrb[0].mxu0
    %589 = vmatprep.mubr.f32.mxu0 0.0
    %590 = vmatmul.mubr.f32.gmra.mrb[0].mxu0 %v390
    %v591 = vpop.f32.mrb[0].mxu0
    %v592 = vadd.f32 %v332, %v591
    %v593 = vpop.f32.mrb[0].mxu0
    %594 = vmatprep.mubr.f32.mxu0 0.0
    %595 = vmatmul.mubr.f32.gmra.mrb[0].mxu0 %v393
    %v596 = vpop.f32.mrb[0].mxu0
    %v597 = vadd.f32 %v332, %v596
    %v598 = vpop.f32.mrb[0].mxu0
    %599 = vmatprep.mubr.f32.mxu0 0.0
    %600 = vmatmul.mubr.f32.gmra.mrb[0].mxu0 %v396
    %v601 = vpop.f32.mrb[0].mxu0
    %v602 = vadd.f32 %v332, %v601
    %v603 = vpop.f32.mrb[0].mxu0
    %604 = vmatprep.mubr.f32.mxu0 0.0
    %605 = vmatmul.mubr.f32.gmra.mrb[0].mxu0 %v399
    %v606 = vpop.f32.mrb[0].mxu0
    %v607 = vadd.f32 %v332, %v606
    %v608 = vpop.f32.mrb[0].mxu0
    %609 = vmatprep.mubr.f32.mxu0 0.0
    %610 = vmatmul.mubr.f32.gmra.mrb[0].mxu0 %v402
    %v611 = vpop.f32.mrb[0].mxu0
    %v612 = vadd.f32 %v332, %v611
    %v613 = vpop.f32.mrb[0].mxu0
    %614 = vmatprep.mubr.f32.mxu0 0.0
    %615 = vmatmul.mubr.f32.gmra.mrb[0].mxu0 %v405
    %v616 = vpop.f32.mrb[0].mxu0
    %v617 = vadd.f32 %v332, %v616
    %v618 = vpop.f32.mrb[0].mxu0
    %619 = vmatprep.mubr.f32.mxu0 0.0
    %620 = vmatmul.mubr.f32.gmra.mrb[0].mxu0 %v408
    %v621 = vpop.f32.mrb[0].mxu0
    %v622 = vadd.f32 %v332, %v621
    %v623 = vpop.f32.mrb[0].mxu0
    %624 = vmatprep.mubr.f32.mxu0 0.0
    %625 = vmatmul.mubr.f32.gmra.mrb[0].mxu0 %v411
    %v626 = vpop.f32.mrb[0].mxu0
    %v627 = vadd.f32 %v332, %v626
    %v628 = vpop.f32.mrb[0].mxu0
    %629 = vmatprep.mubr.f32.mxu0 0.0
    %630 = vmatmul.mubr.f32.gmra.mrb[0].mxu0 %v414
    %v631 = vpop.f32.mrb[0].mxu0
    %v632 = vadd.f32 %v332, %v631
    %v633 = vpop.f32.mrb[0].mxu0
    %634 = vmatprep.mubr.f32.mxu0 0.0
    %635 = vmatmul.mubr.f32.gmra.mrb[0].mxu0 %v417
    %v636 = vpop.f32.mrb[0].mxu0
    %v637 = vadd.f32 %v332, %v636
    %v638 = vpop.f32.mrb[0].mxu0
    %639 = vmatprep.mubr.f32.mxu0 0.0
    %640 = vmatmul.mubr.f32.gmra.mrb[0].mxu0 %v420
    %v641 = vpop.f32.mrb[0].mxu0
    %v642 = vadd.f32 %v332, %v641
    %v643 = vpop.f32.mrb[0].mxu0
    %644 = vmatprep.mubr.f32.mxu0 0.0
    %645 = vmatmul.mubr.f32.gmra.mrb[0].mxu0 %v423
    %v646 = vpop.f32.mrb[0].mxu0
    %v647 = vadd.f32 %v332, %v646
    %v648 = vpop.f32.mrb[0].mxu0
    %649 = vmatprep.mubr.f32.mxu0 0.0
    %650 = vmatmul.mubr.f32.gmra.mrb[0].mxu0 %v426
    %v651 = vpop.f32.mrb[0].mxu0
    %v652 = vadd.f32 %v332, %v651
    %v653 = vpop.f32.mrb[0].mxu0
    %654 = vmatprep.mubr.f32.mxu0 0.0
    %655 = vmatmul.mubr.f32.gmra.mrb[0].mxu0 %v429
    %v656 = vpop.f32.mrb[0].mxu0
    %v657 = vadd.f32 %v332, %v656
    %v658 = vpop.f32.mrb[0].mxu0
    %659 = vdwg.mxu0
    %vm660 = vcmp.ge.f32.partialorder %v502, 0.0
    %vm661 = vcmp.ge.f32.partialorder %v507, 0.0
    %vm662 = vcmp.ge.f32.partialorder %v512, 0.0
    %vm663 = vcmp.ge.f32.partialorder %v517, 0.0
    %vm664 = vcmp.ge.f32.partialorder %v522, 0.0
    %vm665 = vcmp.ge.f32.partialorder %v527, 0.0
    %vm666 = vcmp.ge.f32.partialorder %v532, 0.0
    %vm667 = vcmp.ge.f32.partialorder %v537, 0.0
    %vm668 = vcmp.ge.f32.partialorder %v542, 0.0
    %vm669 = vcmp.ge.f32.partialorder %v547, 0.0
    %vm670 = vcmp.ge.f32.partialorder %v552, 0.0
    %vm671 = vcmp.ge.f32.partialorder %v557, 0.0
    %vm672 = vcmp.ge.f32.partialorder %v562, 0.0
    %vm673 = vcmp.ge.f32.partialorder %v567, 0.0
    %vm674 = vcmp.ge.f32.partialorder %v572, 0.0
    %vm675 = vcmp.ge.f32.partialorder %v577, 0.0
    %vm676 = vcmp.ge.f32.partialorder %v582, 0.0
    %vm677 = vcmp.ge.f32.partialorder %v587, 0.0
    %vm678 = vcmp.ge.f32.partialorder %v592, 0.0
    %vm679 = vcmp.ge.f32.partialorder %v597, 0.0
    %vm680 = vcmp.ge.f32.partialorder %v602, 0.0
    %vm681 = vcmp.ge.f32.partialorder %v607, 0.0
    %vm682 = vcmp.ge.f32.partialorder %v612, 0.0
    %vm683 = vcmp.ge.f32.partialorder %v617, 0.0
    %vm684 = vcmp.ge.f32.partialorder %v622, 0.0
    %vm685 = vcmp.ge.f32.partialorder %v627, 0.0
    %vm686 = vcmp.ge.f32.partialorder %v632, 0.0
    %vm687 = vcmp.ge.f32.partialorder %v637, 0.0
    %vm688 = vcmp.ge.f32.partialorder %v642, 0.0
    %vm689 = vcmp.ge.f32.partialorder %v647, 0.0
    %vm690 = vcmp.ge.f32.partialorder %v652, 0.0
    %vm691 = vcmp.ge.f32.partialorder %v657, 0.0
    %v692 = vmul.f32 %v502, 0.01
    %v693 = vmul.f32 %v507, 0.01
    %v694 = vmul.f32 %v512, 0.01
    %v695 = vmul.f32 %v517, 0.01
    %v696 = vmul.f32 %v522, 0.01
    %v697 = vmul.f32 %v527, 0.01
    %v698 = vmul.f32 %v532, 0.01
    %v699 = vmul.f32 %v537, 0.01
    %v700 = vmul.f32 %v542, 0.01
    %v701 = vmul.f32 %v547, 0.01
    %v702 = vmul.f32 %v552, 0.01
    %v703 = vmul.f32 %v557, 0.01
    %v704 = vmul.f32 %v562, 0.01
    %v705 = vmul.f32 %v567, 0.01
    %v706 = vmul.f32 %v572, 0.01
    %v707 = vmul.f32 %v577, 0.01
    %v708 = vmul.f32 %v582, 0.01
    %v709 = vmul.f32 %v587, 0.01
    %v710 = vmul.f32 %v592, 0.01
    %v711 = vmul.f32 %v597, 0.01
    %v712 = vmul.f32 %v602, 0.01
    %v713 = vmul.f32 %v607, 0.01
    %v714 = vmul.f32 %v612, 0.01
    %v715 = vmul.f32 %v617, 0.01
    %v716 = vmul.f32 %v622, 0.01
    %v717 = vmul.f32 %v627, 0.01
    %v718 = vmul.f32 %v632, 0.01
    %v719 = vmul.f32 %v637, 0.01
    %v720 = vmul.f32 %v642, 0.01
    %v721 = vmul.f32 %v647, 0.01
    %v722 = vmul.f32 %v652, 0.01
    %v723 = vmul.f32 %v657, 0.01
    %v724 = vsel %vm660, %v502, %v692
    %v725 = vsel %vm661, %v507, %v693
    %v726 = vsel %vm662, %v512, %v694
    %v727 = vsel %vm663, %v517, %v695
    %v728 = vsel %vm664, %v522, %v696
    %v729 = vsel %vm665, %v527, %v697
    %v730 = vsel %vm666, %v532, %v698
    %v731 = vsel %vm667, %v537, %v699
    %v732 = vsel %vm668, %v542, %v700
    %v733 = vsel %vm669, %v547, %v701
    %v734 = vsel %vm670, %v552, %v702
    %v735 = vsel %vm671, %v557, %v703
    %v736 = vsel %vm672, %v562, %v704
    %v737 = vsel %vm673, %v567, %v705
    %v738 = vsel %vm674, %v572, %v706
    %v739 = vsel %vm675, %v577, %v707
    %v740 = vsel %vm676, %v582, %v708
    %v741 = vsel %vm677, %v587, %v709
    %v742 = vsel %vm678, %v592, %v710
    %v743 = vsel %vm679, %v597, %v711
    %v744 = vsel %vm680, %v602, %v712
    %v745 = vsel %vm681, %v607, %v713
    %v746 = vsel %vm682, %v612, %v714
    %v747 = vsel %vm683, %v617, %v715
    %v748 = vsel %vm684, %v622, %v716
    %v749 = vsel %vm685, %v627, %v717
    %v750 = vsel %vm686, %v632, %v718
    %v751 = vsel %vm687, %v637, %v719
    %v752 = vsel %vm688, %v642, %v720
    %v753 = vsel %vm689, %v647, %v721
    %v754 = vsel %vm690, %v652, %v722
    %v755 = vsel %vm691, %v657, %v723
    %v756 = vpack.c.bf16 %v725, %v724
    %v757 = vpack.c.bf16 %v727, %v726
    %v758 = vpack.c.bf16 %v729, %v728
    %v759 = vpack.c.bf16 %v731, %v730
    %v760 = vpack.c.bf16 %v733, %v732
    %v761 = vpack.c.bf16 %v735, %v734
    %v762 = vpack.c.bf16 %v737, %v736
    %v763 = vpack.c.bf16 %v739, %v738
    %v764 = vpack.c.bf16 %v741, %v740
    %v765 = vpack.c.bf16 %v743, %v742
    %v766 = vpack.c.bf16 %v745, %v744
    %v767 = vpack.c.bf16 %v747, %v746
    %v768 = vpack.c.bf16 %v749, %v748
    %v769 = vpack.c.bf16 %v751, %v750
    %v770 = vpack.c.bf16 %v753, %v752
    %v771 = vpack.c.bf16 %v755, %v754
    %v788 = vunpack.c.l.b16 %v756
    %v789 = vunpack.c.h.b16 %v756
    %v790 = vunpack.c.l.b16 %v757
    %v791 = vunpack.c.h.b16 %v757
    %v792 = vunpack.c.l.b16 %v758
    %v793 = vunpack.c.h.b16 %v758
    %v794 = vunpack.c.l.b16 %v759
    %v795 = vunpack.c.h.b16 %v759
    %v796 = vunpack.c.l.b16 %v760
    %v797 = vunpack.c.h.b16 %v760
    %v798 = vunpack.c.l.b16 %v761
    %v799 = vunpack.c.h.b16 %v761
    %v800 = vunpack.c.l.b16 %v762
    %v801 = vunpack.c.h.b16 %v762
    %v802 = vunpack.c.l.b16 %v763
    %v803 = vunpack.c.h.b16 %v763
    %v804 = vunpack.c.l.b16 %v764
    %v805 = vunpack.c.h.b16 %v764
    %v806 = vunpack.c.l.b16 %v765
    %v807 = vunpack.c.h.b16 %v765
    %v808 = vunpack.c.l.b16 %v766
    %v809 = vunpack.c.h.b16 %v766
    %v810 = vunpack.c.l.b16 %v767
    %v811 = vunpack.c.h.b16 %v767
    %v812 = vunpack.c.l.b16 %v768
    %v813 = vunpack.c.h.b16 %v768
    %v814 = vunpack.c.l.b16 %v769
    %v815 = vunpack.c.h.b16 %v769
    %v816 = vunpack.c.l.b16 %v770
    %v817 = vunpack.c.h.b16 %v770
    %v818 = vunpack.c.l.b16 %v771
    %v819 = vunpack.c.h.b16 %v771
    %v820 = vpack.c.b16 %v788, %v788
    %v821 = vpack.c.b16 %v789, %v789
    %v822 = vpack.c.b16 %v790, %v790
    %v823 = vpack.c.b16 %v791, %v791
    %v824 = vpack.c.b16 %v792, %v792
    %v825 = vpack.c.b16 %v793, %v793
    %v826 = vpack.c.b16 %v794, %v794
    %v827 = vpack.c.b16 %v795, %v795
    %v828 = vpack.c.b16 %v796, %v796
    %v829 = vpack.c.b16 %v797, %v797
    %v830 = vpack.c.b16 %v798, %v798
    %v831 = vpack.c.b16 %v799, %v799
    %v832 = vpack.c.b16 %v800, %v800
    %v833 = vpack.c.b16 %v801, %v801
    %v834 = vpack.c.b16 %v802, %v802
    %v835 = vpack.c.b16 %v803, %v803
    %v836 = vpack.c.b16 %v804, %v804
    %v837 = vpack.c.b16 %v805, %v805
    %v838 = vpack.c.b16 %v806, %v806
    %v839 = vpack.c.b16 %v807, %v807
    %v840 = vpack.c.b16 %v808, %v808
    %v841 = vpack.c.b16 %v809, %v809
    %v842 = vpack.c.b16 %v810, %v810
    %v843 = vpack.c.b16 %v811, %v811
    %v844 = vpack.c.b16 %v812, %v812
    %v845 = vpack.c.b16 %v813, %v813
    %v846 = vpack.c.b16 %v814, %v814
    %v847 = vpack.c.b16 %v815, %v815
    %v848 = vpack.c.b16 %v816, %v816
    %v849 = vpack.c.b16 %v817, %v817
    %v850 = vpack.c.b16 %v818, %v818
    %v851 = vpack.c.b16 %v819, %v819
    %vm884 = vcmask 519168
    %885 = vst.msk [vmem:[#allocation2] sm:$0xf] %vm884, %v820
    %886 = vst.msk [vmem:[#allocation2 + $0x4] sm:$0xf] %vm884, %v821
    %887 = vst.msk [vmem:[#allocation2 + $0x8] sm:$0xf] %vm884, %v822
    %888 = vst.msk [vmem:[#allocation2 + $0xc] sm:$0xf] %vm884, %v823
    %889 = vst.msk [vmem:[#allocation2 + $0x10] sm:$0xf] %vm884, %v824
    %890 = vst.msk [vmem:[#allocation2 + $0x14] sm:$0xf] %vm884, %v825
    %891 = vst.msk [vmem:[#allocation2 + $0x18] sm:$0xf] %vm884, %v826
    %892 = vst.msk [vmem:[#allocation2 + $0x1c] sm:$0xf] %vm884, %v827
    %893 = vst.msk [vmem:[#allocation2 + $0x20] sm:$0xf] %vm884, %v828
    %894 = vst.msk [vmem:[#allocation2 + $0x24] sm:$0xf] %vm884, %v829
    %895 = vst.msk [vmem:[#allocation2 + $0x28] sm:$0xf] %vm884, %v830
    %896 = vst.msk [vmem:[#allocation2 + $0x2c] sm:$0xf] %vm884, %v831
    %897 = vst.msk [vmem:[#allocation2 + $0x30] sm:$0xf] %vm884, %v832
    %898 = vst.msk [vmem:[#allocation2 + $0x34] sm:$0xf] %vm884, %v833
    %899 = vst.msk [vmem:[#allocation2 + $0x38] sm:$0xf] %vm884, %v834
    %900 = vst.msk [vmem:[#allocation2 + $0x3c] sm:$0xf] %vm884, %v835
    %901 = vst.msk [vmem:[#allocation2 + $0x40] sm:$0xf] %vm884, %v836
    %902 = vst.msk [vmem:[#allocation2 + $0x44] sm:$0xf] %vm884, %v837
    %903 = vst.msk [vmem:[#allocation2 + $0x48] sm:$0xf] %vm884, %v838
    %904 = vst.msk [vmem:[#allocation2 + $0x4c] sm:$0xf] %vm884, %v839
    %905 = vst.msk [vmem:[#allocation2 + $0x50] sm:$0xf] %vm884, %v840
    %906 = vst.msk [vmem:[#allocation2 + $0x54] sm:$0xf] %vm884, %v841
    %907 = vst.msk [vmem:[#allocation2 + $0x58] sm:$0xf] %vm884, %v842
    %908 = vst.msk [vmem:[#allocation2 + $0x5c] sm:$0xf] %vm884, %v843
    %909 = vst.msk [vmem:[#allocation2 + $0x60] sm:$0xf] %vm884, %v844
    %910 = vst.msk [vmem:[#allocation2 + $0x64] sm:$0xf] %vm884, %v845
    %911 = vst.msk [vmem:[#allocation2 + $0x68] sm:$0xf] %vm884, %v846
    %912 = vst.msk [vmem:[#allocation2 + $0x6c] sm:$0xf] %vm884, %v847
    %913 = vst.msk [vmem:[#allocation2 + $0x70] sm:$0xf] %vm884, %v848
    %914 = vst.msk [vmem:[#allocation2 + $0x74] sm:$0xf] %vm884, %v849
    %915 = vst.msk [vmem:[#allocation2 + $0x78] sm:$0xf] %vm884, %v850
    %916 = vst.msk [vmem:[#allocation2 + $0x7c] sm:$0xf] %vm884, %v851
    %917 = vst.msk [vmem:[#allocation2 + $0x80] sm:$0xf] %vm884, 0
    %918 = vst.msk [vmem:[#allocation2 + $0x84] sm:$0xf] %vm884, 0
    %919 = vst.msk [vmem:[#allocation2 + $0x88] sm:$0xf] %vm884, 0
    %920 = vst.msk [vmem:[#allocation2 + $0x8c] sm:$0xf] %vm884, 0
    %921 = vst.msk [vmem:[#allocation2 + $0x90] sm:$0xf] %vm884, 0
    %922 = vst.msk [vmem:[#allocation2 + $0x94] sm:$0xf] %vm884, 0
    %923 = vst.msk [vmem:[#allocation2 + $0x98] sm:$0xf] %vm884, 0
    %924 = vst.msk [vmem:[#allocation2 + $0x9c] sm:$0xf] %vm884, 0
    %925 = vst.msk [vmem:[#allocation2 + $0xa0] sm:$0xf] %vm884, 0
    %v926 = vld [vmem:[#allocation2] sm:$0xf]
    %v927 = vld [vmem:[#allocation2 + $0x4] sm:$0xf]
    %v928 = vld [vmem:[#allocation2 + $0x8] sm:$0xf]
    %v929 = vld [vmem:[#allocation2 + $0xc] sm:$0xf]
    %v930 = vld [vmem:[#allocation2 + $0x10] sm:$0xf]
    %v931 = vld [vmem:[#allocation2 + $0x14] sm:$0xf]
    %v932 = vld [vmem:[#allocation2 + $0x18] sm:$0xf]
    %v933 = vld [vmem:[#allocation2 + $0x1c] sm:$0xf]
    %v934 = vld [vmem:[#allocation2 + $0x20] sm:$0xf]
    %v935 = vld [vmem:[#allocation2 + $0x24] sm:$0xf]
    %v936 = vld [vmem:[#allocation2 + $0x28] sm:$0xf]
    %v937 = vld [vmem:[#allocation2 + $0x2c] sm:$0xf]
    %v938 = vld [vmem:[#allocation2 + $0x30] sm:$0xf]
    %v939 = vld [vmem:[#allocation2 + $0x34] sm:$0xf]
    %v940 = vld [vmem:[#allocation2 + $0x38] sm:$0xf]
    %v941 = vld [vmem:[#allocation2 + $0x3c] sm:$0xf]
    %v942 = vld [vmem:[#allocation2 + $0x40] sm:$0xf]
    %v943 = vld [vmem:[#allocation2 + $0x44] sm:$0xf]
    %v944 = vld [vmem:[#allocation2 + $0x48] sm:$0xf]
    %v945 = vld [vmem:[#allocation2 + $0x4c] sm:$0xf]
    %v946 = vld [vmem:[#allocation2 + $0x50] sm:$0xf]
    %v947 = vld [vmem:[#allocation2 + $0x54] sm:$0xf]
    %v948 = vld [vmem:[#allocation2 + $0x58] sm:$0xf]
    %v949 = vld [vmem:[#allocation2 + $0x5c] sm:$0xf]
    %v950 = vld [vmem:[#allocation2 + $0x60] sm:$0xf]
    %v951 = vld [vmem:[#allocation2 + $0x64] sm:$0xf]
    %v952 = vld [vmem:[#allocation2 + $0x68] sm:$0xf]
    %v953 = vld [vmem:[#allocation2 + $0x6c] sm:$0xf]
    %v954 = vld [vmem:[#allocation2 + $0x70] sm:$0xf]
    %v955 = vld [vmem:[#allocation2 + $0x74] sm:$0xf]
    %v956 = vld [vmem:[#allocation2 + $0x78] sm:$0xf]
    %v957 = vld [vmem:[#allocation2 + $0x7c] sm:$0xf]
    %v990 = vunpack.c.l.b16 %v926
    %v991 = vunpack.c.l.b16 %v927
    %v992 = vunpack.c.l.b16 %v928
    %v993 = vunpack.c.l.b16 %v929
    %v994 = vunpack.c.l.b16 %v930
    %v995 = vunpack.c.l.b16 %v931
    %v996 = vunpack.c.l.b16 %v932
    %v997 = vunpack.c.l.b16 %v933
    %v998 = vunpack.c.l.b16 %v934
    %v999 = vunpack.c.l.b16 %v935
    %v1000 = vunpack.c.l.b16 %v936
    %v1001 = vunpack.c.l.b16 %v937
    %v1002 = vunpack.c.l.b16 %v938
    %v1003 = vunpack.c.l.b16 %v939
    %v1004 = vunpack.c.l.b16 %v940
    %v1005 = vunpack.c.l.b16 %v941
    %v1006 = vunpack.c.l.b16 %v942
    %v1007 = vunpack.c.l.b16 %v943
    %v1008 = vunpack.c.l.b16 %v944
    %v1009 = vunpack.c.l.b16 %v945
    %v1010 = vunpack.c.l.b16 %v946
    %v1011 = vunpack.c.l.b16 %v947
    %v1012 = vunpack.c.l.b16 %v948
    %v1013 = vunpack.c.l.b16 %v949
    %v1014 = vunpack.c.l.b16 %v950
    %v1015 = vunpack.c.l.b16 %v951
    %v1016 = vunpack.c.l.b16 %v952
    %v1017 = vunpack.c.l.b16 %v953
    %v1018 = vunpack.c.l.b16 %v954
    %v1019 = vunpack.c.l.b16 %v955
    %v1020 = vunpack.c.l.b16 %v956
    %v1021 = vunpack.c.l.b16 %v957
    %v1022 = vpack.c.b16 %v991, %v990
    %v1023 = vpack.c.b16 %v993, %v992
    %v1024 = vpack.c.b16 %v995, %v994
    %v1025 = vpack.c.b16 %v997, %v996
    %v1026 = vpack.c.b16 %v999, %v998
    %v1027 = vpack.c.b16 %v1001, %v1000
    %v1028 = vpack.c.b16 %v1003, %v1002
    %v1029 = vpack.c.b16 %v1005, %v1004
    %v1030 = vpack.c.b16 %v1007, %v1006
    %v1031 = vpack.c.b16 %v1009, %v1008
    %v1032 = vpack.c.b16 %v1011, %v1010
    %v1033 = vpack.c.b16 %v1013, %v1012
    %v1034 = vpack.c.b16 %v1015, %v1014
    %v1035 = vpack.c.b16 %v1017, %v1016
    %v1036 = vpack.c.b16 %v1019, %v1018
    %v1037 = vpack.c.b16 %v1021, %v1020
    %vm1054 = vcmask 523264
    %1055 = vst.msk [vmem:[#allocation3] sm:$0xff] %vm1054, %v1022
    %1056 = vst.msk [vmem:[#allocation3 + $0x28] sm:$0xff] %vm1054, %v1023
    %1057 = vst.msk [vmem:[#allocation3 + $0x50] sm:$0xff] %vm1054, %v1024
    %1058 = vst.msk [vmem:[#allocation3 + $0x78] sm:$0xff] %vm1054, %v1025
    %1059 = vst.msk [vmem:[#allocation3 + $0xa0] sm:$0xff] %vm1054, %v1026
    %1060 = vst.msk [vmem:[#allocation3 + $0xc8] sm:$0xff] %vm1054, %v1027
    %1061 = vst.msk [vmem:[#allocation3 + $0xf0] sm:$0xff] %vm1054, %v1028
    %1062 = vst.msk [vmem:[#allocation3 + $0x118] sm:$0xff] %vm1054, %v1029
    %1063 = vst.msk [vmem:[#allocation3 + $0x140] sm:$0xff] %vm1054, %v1030
    %1064 = vst.msk [vmem:[#allocation3 + $0x168] sm:$0xff] %vm1054, %v1031
    %1065 = vst.msk [vmem:[#allocation3 + $0x190] sm:$0xff] %vm1054, %v1032
    %1066 = vst.msk [vmem:[#allocation3 + $0x1b8] sm:$0xff] %vm1054, %v1033
    %1067 = vst.msk [vmem:[#allocation3 + $0x1e0] sm:$0xff] %vm1054, %v1034
    %1068 = vst.msk [vmem:[#allocation3 + $0x208] sm:$0xff] %vm1054, %v1035
    %1069 = vst.msk [vmem:[#allocation3 + $0x230] sm:$0xff] %vm1054, %v1036
    %1070 = vst.msk [vmem:[#allocation3 + $0x258] sm:$0xff] %vm1054, %v1037
    %v1071 = vld [vmem:[#allocation2] sm:$0xc]
    %v1072 = vld [vmem:[#allocation2 + $0x4] sm:$0xf]
    %v1073 = vld [vmem:[#allocation2 + $0x8] sm:$0xf]
    %v1074 = vld [vmem:[#allocation2 + $0xc] sm:$0xf]
    %v1075 = vld [vmem:[#allocation2 + $0x10] sm:$0xf]
    %v1076 = vld [vmem:[#allocation2 + $0x14] sm:$0xf]
    %v1077 = vld [vmem:[#allocation2 + $0x18] sm:$0xf]
    %v1078 = vld [vmem:[#allocation2 + $0x1c] sm:$0xf]
    %v1079 = vld [vmem:[#allocation2 + $0x20] sm:$0xf]
    %v1080 = vld [vmem:[#allocation2 + $0x24] sm:$0xf]
    %v1081 = vld [vmem:[#allocation2 + $0x28] sm:$0xf]
    %v1082 = vld [vmem:[#allocation2 + $0x2c] sm:$0xf]
    %v1083 = vld [vmem:[#allocation2 + $0x30] sm:$0xf]
    %v1084 = vld [vmem:[#allocation2 + $0x34] sm:$0xf]
    %v1085 = vld [vmem:[#allocation2 + $0x38] sm:$0xf]
    %v1086 = vld [vmem:[#allocation2 + $0x3c] sm:$0xf]
    %v1087 = vld [vmem:[#allocation2 + $0x40] sm:$0xf]
    %v1088 = vld [vmem:[#allocation2 + $0x44] sm:$0xf]
    %v1089 = vld [vmem:[#allocation2 + $0x48] sm:$0xf]
    %v1090 = vld [vmem:[#allocation2 + $0x4c] sm:$0xf]
    %v1091 = vld [vmem:[#allocation2 + $0x50] sm:$0xf]
    %v1092 = vld [vmem:[#allocation2 + $0x54] sm:$0xf]
    %v1093 = vld [vmem:[#allocation2 + $0x58] sm:$0xf]
    %v1094 = vld [vmem:[#allocation2 + $0x5c] sm:$0xf]
    %v1095 = vld [vmem:[#allocation2 + $0x60] sm:$0xf]
    %v1096 = vld [vmem:[#allocation2 + $0x64] sm:$0xf]
    %v1097 = vld [vmem:[#allocation2 + $0x68] sm:$0xf]
    %v1098 = vld [vmem:[#allocation2 + $0x6c] sm:$0xf]
    %v1099 = vld [vmem:[#allocation2 + $0x70] sm:$0xf]
    %v1100 = vld [vmem:[#allocation2 + $0x74] sm:$0xf]
    %v1101 = vld [vmem:[#allocation2 + $0x78] sm:$0xf]
    %v1102 = vld [vmem:[#allocation2 + $0x7c] sm:$0xf]
    %v1103 = vld [vmem:[#allocation2 + $0x80] sm:$0x3]
    %v1137 = vunpack.c.l.b16 %v1071
    %v1138 = vunpack.c.l.b16 %v1072
    %v1139 = vunpack.c.l.b16 %v1073
    %v1140 = vunpack.c.l.b16 %v1074
    %v1141 = vunpack.c.l.b16 %v1075
    %v1142 = vunpack.c.l.b16 %v1076
    %v1143 = vunpack.c.l.b16 %v1077
    %v1144 = vunpack.c.l.b16 %v1078
    %v1145 = vunpack.c.l.b16 %v1079
    %v1146 = vunpack.c.l.b16 %v1080
    %v1147 = vunpack.c.l.b16 %v1081
    %v1148 = vunpack.c.l.b16 %v1082
    %v1149 = vunpack.c.l.b16 %v1083
    %v1150 = vunpack.c.l.b16 %v1084
    %v1151 = vunpack.c.l.b16 %v1085
    %v1152 = vunpack.c.l.b16 %v1086
    %v1153 = vunpack.c.l.b16 %v1087
    %v1154 = vunpack.c.l.b16 %v1088
    %v1155 = vunpack.c.l.b16 %v1089
    %v1156 = vunpack.c.l.b16 %v1090
    %v1157 = vunpack.c.l.b16 %v1091
    %v1158 = vunpack.c.l.b16 %v1092
    %v1159 = vunpack.c.l.b16 %v1093
    %v1160 = vunpack.c.l.b16 %v1094
    %v1161 = vunpack.c.l.b16 %v1095
    %v1162 = vunpack.c.l.b16 %v1096
    %v1163 = vunpack.c.l.b16 %v1097
    %v1164 = vunpack.c.l.b16 %v1098
    %v1165 = vunpack.c.l.b16 %v1099
    %v1166 = vunpack.c.l.b16 %v1100
    %v1167 = vunpack.c.l.b16 %v1101
    %v1168 = vunpack.c.l.b16 %v1102
    %v1169 = vunpack.c.l.b16 %v1103
    %v1170 = vpack.c.b16 %v1138, %v1137
    %v1171 = vpack.c.b16 %v1140, %v1139
    %v1172 = vpack.c.b16 %v1142, %v1141
    %v1173 = vpack.c.b16 %v1144, %v1143
    %v1174 = vpack.c.b16 %v1146, %v1145
    %v1175 = vpack.c.b16 %v1148, %v1147
    %v1176 = vpack.c.b16 %v1150, %v1149
    %v1177 = vpack.c.b16 %v1152, %v1151
    %v1178 = vpack.c.b16 %v1154, %v1153
    %v1179 = vpack.c.b16 %v1156, %v1155
    %v1180 = vpack.c.b16 %v1158, %v1157
    %v1181 = vpack.c.b16 %v1160, %v1159
    %v1182 = vpack.c.b16 %v1162, %v1161
    %v1183 = vpack.c.b16 %v1164, %v1163
    %v1184 = vpack.c.b16 %v1166, %v1165
    %v1185 = vpack.c.b16 %v1168, %v1167
    %v1186 = vpack.c.b16 %v1169, %v1169
    %vm1187 = vcmask 1045504
    %v1188 = vrot.slane %v1170, 2
    %v1189 = vrot.slane %v1171, 2
    %v1190 = vsel %vm1187, %v1188, %v1189
    %v1191 = vrot.slane %v1172, 2
    %v1192 = vsel %vm1187, %v1189, %v1191
    %v1193 = vrot.slane %v1173, 2
    %v1194 = vsel %vm1187, %v1191, %v1193
    %v1195 = vrot.slane %v1174, 2
    %v1196 = vsel %vm1187, %v1193, %v1195
    %v1197 = vrot.slane %v1175, 2
    %v1198 = vsel %vm1187, %v1195, %v1197
    %v1199 = vrot.slane %v1176, 2
    %v1200 = vsel %vm1187, %v1197, %v1199
    %v1201 = vrot.slane %v1177, 2
    %v1202 = vsel %vm1187, %v1199, %v1201
    %v1203 = vrot.slane %v1178, 2
    %v1204 = vsel %vm1187, %v1201, %v1203
    %v1205 = vrot.slane %v1179, 2
    %v1206 = vsel %vm1187, %v1203, %v1205
    %v1207 = vrot.slane %v1180, 2
    %v1208 = vsel %vm1187, %v1205, %v1207
    %v1209 = vrot.slane %v1181, 2
    %v1210 = vsel %vm1187, %v1207, %v1209
    %v1211 = vrot.slane %v1182, 2
    %v1212 = vsel %vm1187, %v1209, %v1211
    %v1213 = vrot.slane %v1183, 2
    %v1214 = vsel %vm1187, %v1211, %v1213
    %v1215 = vrot.slane %v1184, 2
    %v1216 = vsel %vm1187, %v1213, %v1215
    %v1217 = vrot.slane %v1185, 2
    %v1218 = vsel %vm1187, %v1215, %v1217
    %v1219 = vrot.slane %v1186, 2
    %v1220 = vsel %vm1187, %v1217, %v1219
    %1221 = vrot.lane.b32.xlu0 %v1190, 64
    %v1222 = vpop.permute.xlu0 %1221
    %1223 = vrot.lane.b32.xlu0 %v1192, 64
    %v1224 = vpop.permute.xlu0 %1223
    %1225 = vrot.lane.b32.xlu0 %v1194, 64
    %v1226 = vpop.permute.xlu0 %1225
    %1227 = vrot.lane.b32.xlu0 %v1196, 64
    %v1228 = vpop.permute.xlu0 %1227
    %1229 = vrot.lane.b32.xlu0 %v1198, 64
    %v1230 = vpop.permute.xlu0 %1229
    %1231 = vrot.lane.b32.xlu0 %v1200, 64
    %v1232 = vpop.permute.xlu0 %1231
    %1233 = vrot.lane.b32.xlu0 %v1202, 64
    %v1234 = vpop.permute.xlu0 %1233
    %1235 = vrot.lane.b32.xlu0 %v1204, 64
    %v1236 = vpop.permute.xlu0 %1235
    %1237 = vrot.lane.b32.xlu0 %v1206, 64
    %v1238 = vpop.permute.xlu0 %1237
    %1239 = vrot.lane.b32.xlu0 %v1208, 64
    %v1240 = vpop.permute.xlu0 %1239
    %1241 = vrot.lane.b32.xlu0 %v1210, 64
    %v1242 = vpop.permute.xlu0 %1241
    %1243 = vrot.lane.b32.xlu0 %v1212, 64
    %v1244 = vpop.permute.xlu0 %1243
    %1245 = vrot.lane.b32.xlu0 %v1214, 64
    %v1246 = vpop.permute.xlu0 %1245
    %1247 = vrot.lane.b32.xlu0 %v1216, 64
    %v1248 = vpop.permute.xlu0 %1247
    %1249 = vrot.lane.b32.xlu0 %v1218, 64
    %v1250 = vpop.permute.xlu0 %1249
    %1251 = vrot.lane.b32.xlu0 %v1220, 64
    %v1252 = vpop.permute.xlu0 %1251
    %vm1269 = vcmask 1048064
    %1270 = vst.msk [vmem:[#allocation3] sm:$0xff] %vm1269, %v1222
    %1271 = vst.msk [vmem:[#allocation3 + $0x28] sm:$0xff] %vm1269, %v1224
    %1272 = vst.msk [vmem:[#allocation3 + $0x50] sm:$0xff] %vm1269, %v1226
    %1273 = vst.msk [vmem:[#allocation3 + $0x78] sm:$0xff] %vm1269, %v1228
    %1274 = vst.msk [vmem:[#allocation3 + $0xa0] sm:$0xff] %vm1269, %v1230
    %1275 = vst.msk [vmem:[#allocation3 + $0xc8] sm:$0xff] %vm1269, %v1232
    %1276 = vst.msk [vmem:[#allocation3 + $0xf0] sm:$0xff] %vm1269, %v1234
    %1277 = vst.msk [vmem:[#allocation3 + $0x118] sm:$0xff] %vm1269, %v1236
    %1278 = vst.msk [vmem:[#allocation3 + $0x140] sm:$0xff] %vm1269, %v1238
    %1279 = vst.msk [vmem:[#allocation3 + $0x168] sm:$0xff] %vm1269, %v1240
    %1280 = vst.msk [vmem:[#allocation3 + $0x190] sm:$0xff] %vm1269, %v1242
    %1281 = vst.msk [vmem:[#allocation3 + $0x1b8] sm:$0xff] %vm1269, %v1244
    %1282 = vst.msk [vmem:[#allocation3 + $0x1e0] sm:$0xff] %vm1269, %v1246
    %1283 = vst.msk [vmem:[#allocation3 + $0x208] sm:$0xff] %vm1269, %v1248
    %1284 = vst.msk [vmem:[#allocation3 + $0x230] sm:$0xff] %vm1269, %v1250
    %1285 = vst.msk [vmem:[#allocation3 + $0x258] sm:$0xff] %vm1269, %v1252
    %v1286 = vld [vmem:[#allocation2 + $0x4] sm:$0xf]
    %v1287 = vld [vmem:[#allocation2 + $0x8] sm:$0xf]
    %v1288 = vld [vmem:[#allocation2 + $0xc] sm:$0xf]
    %v1289 = vld [vmem:[#allocation2 + $0x10] sm:$0xf]
    %v1290 = vld [vmem:[#allocation2 + $0x14] sm:$0xf]
    %v1291 = vld [vmem:[#allocation2 + $0x18] sm:$0xf]
    %v1292 = vld [vmem:[#allocation2 + $0x1c] sm:$0xf]
    %v1293 = vld [vmem:[#allocation2 + $0x20] sm:$0xf]
    %v1294 = vld [vmem:[#allocation2 + $0x24] sm:$0xf]
    %v1295 = vld [vmem:[#allocation2 + $0x28] sm:$0xf]
    %v1296 = vld [vmem:[#allocation2 + $0x2c] sm:$0xf]
    %v1297 = vld [vmem:[#allocation2 + $0x30] sm:$0xf]
    %v1298 = vld [vmem:[#allocation2 + $0x34] sm:$0xf]
    %v1299 = vld [vmem:[#allocation2 + $0x38] sm:$0xf]
    %v1300 = vld [vmem:[#allocation2 + $0x3c] sm:$0xf]
    %v1301 = vld [vmem:[#allocation2 + $0x40] sm:$0xf]
    %v1302 = vld [vmem:[#allocation2 + $0x44] sm:$0xf]
    %v1303 = vld [vmem:[#allocation2 + $0x48] sm:$0xf]
    %v1304 = vld [vmem:[#allocation2 + $0x4c] sm:$0xf]
    %v1305 = vld [vmem:[#allocation2 + $0x50] sm:$0xf]
    %v1306 = vld [vmem:[#allocation2 + $0x54] sm:$0xf]
    %v1307 = vld [vmem:[#allocation2 + $0x58] sm:$0xf]
    %v1308 = vld [vmem:[#allocation2 + $0x5c] sm:$0xf]
    %v1309 = vld [vmem:[#allocation2 + $0x60] sm:$0xf]
    %v1310 = vld [vmem:[#allocation2 + $0x64] sm:$0xf]
    %v1311 = vld [vmem:[#allocation2 + $0x68] sm:$0xf]
    %v1312 = vld [vmem:[#allocation2 + $0x6c] sm:$0xf]
    %v1313 = vld [vmem:[#allocation2 + $0x70] sm:$0xf]
    %v1314 = vld [vmem:[#allocation2 + $0x74] sm:$0xf]
    %v1315 = vld [vmem:[#allocation2 + $0x78] sm:$0xf]
    %v1316 = vld [vmem:[#allocation2 + $0x7c] sm:$0xf]
    %v1317 = vld [vmem:[#allocation2 + $0x80] sm:$0xf]
    %v1350 = vunpack.c.l.b16 %v1286
    %v1351 = vunpack.c.l.b16 %v1287
    %v1352 = vunpack.c.l.b16 %v1288
    %v1353 = vunpack.c.l.b16 %v1289
    %v1354 = vunpack.c.l.b16 %v1290
    %v1355 = vunpack.c.l.b16 %v1291
    %v1356 = vunpack.c.l.b16 %v1292
    %v1357 = vunpack.c.l.b16 %v1293
    %v1358 = vunpack.c.l.b16 %v1294
    %v1359 = vunpack.c.l.b16 %v1295
    %v1360 = vunpack.c.l.b16 %v1296
    %v1361 = vunpack.c.l.b16 %v1297
    %v1362 = vunpack.c.l.b16 %v1298
    %v1363 = vunpack.c.l.b16 %v1299
    %v1364 = vunpack.c.l.b16 %v1300
    %v1365 = vunpack.c.l.b16 %v1301
    %v1366 = vunpack.c.l.b16 %v1302
    %v1367 = vunpack.c.l.b16 %v1303
    %v1368 = vunpack.c.l.b16 %v1304
    %v1369 = vunpack.c.l.b16 %v1305
    %v1370 = vunpack.c.l.b16 %v1306
    %v1371 = vunpack.c.l.b16 %v1307
    %v1372 = vunpack.c.l.b16 %v1308
    %v1373 = vunpack.c.l.b16 %v1309
    %v1374 = vunpack.c.l.b16 %v1310
    %v1375 = vunpack.c.l.b16 %v1311
    %v1376 = vunpack.c.l.b16 %v1312
    %v1377 = vunpack.c.l.b16 %v1313
    %v1378 = vunpack.c.l.b16 %v1314
    %v1379 = vunpack.c.l.b16 %v1315
    %v1380 = vunpack.c.l.b16 %v1316
    %v1381 = vunpack.c.l.b16 %v1317
    %v1382 = vpack.c.b16 %v1351, %v1350
    %v1383 = vpack.c.b16 %v1353, %v1352
    %v1384 = vpack.c.b16 %v1355, %v1354
    %v1385 = vpack.c.b16 %v1357, %v1356
    %v1386 = vpack.c.b16 %v1359, %v1358
    %v1387 = vpack.c.b16 %v1361, %v1360
    %v1388 = vpack.c.b16 %v1363, %v1362
    %v1389 = vpack.c.b16 %v1365, %v1364
    %v1390 = vpack.c.b16 %v1367, %v1366
    %v1391 = vpack.c.b16 %v1369, %v1368
    %v1392 = vpack.c.b16 %v1371, %v1370
    %v1393 = vpack.c.b16 %v1373, %v1372
    %v1394 = vpack.c.b16 %v1375, %v1374
    %v1395 = vpack.c.b16 %v1377, %v1376
    %v1396 = vpack.c.b16 %v1379, %v1378
    %v1397 = vpack.c.b16 %v1381, %v1380
    %1414 = vst.msk [vmem:[#allocation3 + $0x8] sm:$0xff] %vm1054, %v1382
    %1415 = vst.msk [vmem:[#allocation3 + $0x30] sm:$0xff] %vm1054, %v1383
    %1416 = vst.msk [vmem:[#allocation3 + $0x58] sm:$0xff] %vm1054, %v1384
    %1417 = vst.msk [vmem:[#allocation3 + $0x80] sm:$0xff] %vm1054, %v1385
    %1418 = vst.msk [vmem:[#allocation3 + $0xa8] sm:$0xff] %vm1054, %v1386
    %1419 = vst.msk [vmem:[#allocation3 + $0xd0] sm:$0xff] %vm1054, %v1387
    %1420 = vst.msk [vmem:[#allocation3 + $0xf8] sm:$0xff] %vm1054, %v1388
    %1421 = vst.msk [vmem:[#allocation3 + $0x120] sm:$0xff] %vm1054, %v1389
    %1422 = vst.msk [vmem:[#allocation3 + $0x148] sm:$0xff] %vm1054, %v1390
    %1423 = vst.msk [vmem:[#allocation3 + $0x170] sm:$0xff] %vm1054, %v1391
    %1424 = vst.msk [vmem:[#allocation3 + $0x198] sm:$0xff] %vm1054, %v1392
    %1425 = vst.msk [vmem:[#allocation3 + $0x1c0] sm:$0xff] %vm1054, %v1393
    %1426 = vst.msk [vmem:[#allocation3 + $0x1e8] sm:$0xff] %vm1054, %v1394
    %1427 = vst.msk [vmem:[#allocation3 + $0x210] sm:$0xff] %vm1054, %v1395
    %1428 = vst.msk [vmem:[#allocation3 + $0x238] sm:$0xff] %vm1054, %v1396
    %1429 = vst.msk [vmem:[#allocation3 + $0x260] sm:$0xff] %vm1054, %v1397
    %v1430 = vld [vmem:[#allocation2 + $0x10] sm:$0xf]
    %v1431 = vld [vmem:[#allocation2 + $0x14] sm:$0xf]
    %v1432 = vld [vmem:[#allocation2 + $0x18] sm:$0xf]
    %v1433 = vld [vmem:[#allocation2 + $0x1c] sm:$0xf]
    %v1434 = vld [vmem:[#allocation2 + $0x20] sm:$0xf]
    %v1435 = vld [vmem:[#allocation2 + $0x24] sm:$0xf]
    %v1436 = vld [vmem:[#allocation2 + $0x28] sm:$0xf]
    %v1437 = vld [vmem:[#allocation2 + $0x2c] sm:$0xf]
    %v1438 = vld [vmem:[#allocation2 + $0x30] sm:$0xf]
    %v1439 = vld [vmem:[#allocation2 + $0x34] sm:$0xf]
    %v1440 = vld [vmem:[#allocation2 + $0x38] sm:$0xf]
    %v1441 = vld [vmem:[#allocation2 + $0x3c] sm:$0xf]
    %v1442 = vld [vmem:[#allocation2 + $0x40] sm:$0xf]
    %v1443 = vld [vmem:[#allocation2 + $0x44] sm:$0xf]
    %v1444 = vld [vmem:[#allocation2 + $0x48] sm:$0xf]
    %v1445 = vld [vmem:[#allocation2 + $0x4c] sm:$0xf]
    %v1446 = vld [vmem:[#allocation2 + $0x50] sm:$0xf]
    %v1447 = vld [vmem:[#allocation2 + $0x54] sm:$0xf]
    %v1448 = vld [vmem:[#allocation2 + $0x58] sm:$0xf]
    %v1449 = vld [vmem:[#allocation2 + $0x5c] sm:$0xf]
    %v1450 = vld [vmem:[#allocation2 + $0x60] sm:$0xf]
    %v1451 = vld [vmem:[#allocation2 + $0x64] sm:$0xf]
    %v1452 = vld [vmem:[#allocation2 + $0x68] sm:$0xf]
    %v1453 = vld [vmem:[#allocation2 + $0x6c] sm:$0xf]
    %v1454 = vld [vmem:[#allocation2 + $0x70] sm:$0xf]
    %v1455 = vld [vmem:[#allocation2 + $0x74] sm:$0xf]
    %v1456 = vld [vmem:[#allocation2 + $0x78] sm:$0xf]
    %v1457 = vld [vmem:[#allocation2 + $0x7c] sm:$0xf]
    %v1458 = vld [vmem:[#allocation2 + $0x80] sm:$0xf]
    %v1459 = vld [vmem:[#allocation2 + $0x84] sm:$0xf]
    %v1460 = vld [vmem:[#allocation2 + $0x88] sm:$0xf]
    %v1461 = vld [vmem:[#allocation2 + $0x8c] sm:$0xf]
    %v1494 = vunpack.c.l.b16 %v1430
    %v1495 = vunpack.c.l.b16 %v1431
    %v1496 = vunpack.c.l.b16 %v1432
    %v1497 = vunpack.c.l.b16 %v1433
    %v1498 = vunpack.c.l.b16 %v1434
    %v1499 = vunpack.c.l.b16 %v1435
    %v1500 = vunpack.c.l.b16 %v1436
    %v1501 = vunpack.c.l.b16 %v1437
    %v1502 = vunpack.c.l.b16 %v1438
    %v1503 = vunpack.c.l.b16 %v1439
    %v1504 = vunpack.c.l.b16 %v1440
    %v1505 = vunpack.c.l.b16 %v1441
    %v1506 = vunpack.c.l.b16 %v1442
    %v1507 = vunpack.c.l.b16 %v1443
    %v1508 = vunpack.c.l.b16 %v1444
    %v1509 = vunpack.c.l.b16 %v1445
    %v1510 = vunpack.c.l.b16 %v1446
    %v1511 = vunpack.c.l.b16 %v1447
    %v1512 = vunpack.c.l.b16 %v1448
    %v1513 = vunpack.c.l.b16 %v1449
    %v1514 = vunpack.c.l.b16 %v1450
    %v1515 = vunpack.c.l.b16 %v1451
    %v1516 = vunpack.c.l.b16 %v1452
    %v1517 = vunpack.c.l.b16 %v1453
    %v1518 = vunpack.c.l.b16 %v1454
    %v1519 = vunpack.c.l.b16 %v1455
    %v1520 = vunpack.c.l.b16 %v1456
    %v1521 = vunpack.c.l.b16 %v1457
    %v1522 = vunpack.c.l.b16 %v1458
    %v1523 = vunpack.c.l.b16 %v1459
    %v1524 = vunpack.c.l.b16 %v1460
    %v1525 = vunpack.c.l.b16 %v1461
    %v1526 = vpack.c.b16 %v1495, %v1494
    %v1527 = vpack.c.b16 %v1497, %v1496
    %v1528 = vpack.c.b16 %v1499, %v1498
    %v1529 = vpack.c.b16 %v1501, %v1500
    %v1530 = vpack.c.b16 %v1503, %v1502
    %v1531 = vpack.c.b16 %v1505, %v1504
    %v1532 = vpack.c.b16 %v1507, %v1506
    %v1533 = vpack.c.b16 %v1509, %v1508
    %v1534 = vpack.c.b16 %v1511, %v1510
    %v1535 = vpack.c.b16 %v1513, %v1512
    %v1536 = vpack.c.b16 %v1515, %v1514
    %v1537 = vpack.c.b16 %v1517, %v1516
    %v1538 = vpack.c.b16 %v1519, %v1518
    %v1539 = vpack.c.b16 %v1521, %v1520
    %v1540 = vpack.c.b16 %v1523, %v1522
    %v1541 = vpack.c.b16 %v1525, %v1524
    %1542 = vrot.lane.b32.xlu0 %v1526, 64
    %v1543 = vpop.permute.xlu0 %1542
    %1544 = vrot.lane.b32.xlu0 %v1527, 64
    %v1545 = vpop.permute.xlu0 %1544
    %1546 = vrot.lane.b32.xlu0 %v1528, 64
    %v1547 = vpop.permute.xlu0 %1546
    %1548 = vrot.lane.b32.xlu0 %v1529, 64
    %v1549 = vpop.permute.xlu0 %1548
    %1550 = vrot.lane.b32.xlu0 %v1530, 64
    %v1551 = vpop.permute.xlu0 %1550
    %1552 = vrot.lane.b32.xlu0 %v1531, 64
    %v1553 = vpop.permute.xlu0 %1552
    %1554 = vrot.lane.b32.xlu0 %v1532, 64
    %v1555 = vpop.permute.xlu0 %1554
    %1556 = vrot.lane.b32.xlu0 %v1533, 64
    %v1557 = vpop.permute.xlu0 %1556
    %1558 = vrot.lane.b32.xlu0 %v1534, 64
    %v1559 = vpop.permute.xlu0 %1558
    %1560 = vrot.lane.b32.xlu0 %v1535, 64
    %v1561 = vpop.permute.xlu0 %1560
    %1562 = vrot.lane.b32.xlu0 %v1536, 64
    %v1563 = vpop.permute.xlu0 %1562
    %1564 = vrot.lane.b32.xlu0 %v1537, 64
    %v1565 = vpop.permute.xlu0 %1564
    %1566 = vrot.lane.b32.xlu0 %v1538, 64
    %v1567 = vpop.permute.xlu0 %1566
    %1568 = vrot.lane.b32.xlu0 %v1539, 64
    %v1569 = vpop.permute.xlu0 %1568
    %1570 = vrot.lane.b32.xlu0 %v1540, 64
    %v1571 = vpop.permute.xlu0 %1570
    %1572 = vrot.lane.b32.xlu0 %v1541, 64
    %v1573 = vpop.permute.xlu0 %1572
    %1590 = vst.msk [vmem:[#allocation3 + $0x8] sm:$0xff] %vm1269, %v1543
    %1591 = vst.msk [vmem:[#allocation3 + $0x30] sm:$0xff] %vm1269, %v1545
    %1592 = vst.msk [vmem:[#allocation3 + $0x58] sm:$0xff] %vm1269, %v1547
    %1593 = vst.msk [vmem:[#allocation3 + $0x80] sm:$0xff] %vm1269, %v1549
    %1594 = vst.msk [vmem:[#allocation3 + $0xa8] sm:$0xff] %vm1269, %v1551
    %1595 = vst.msk [vmem:[#allocation3 + $0xd0] sm:$0xff] %vm1269, %v1553
    %1596 = vst.msk [vmem:[#allocation3 + $0xf8] sm:$0xff] %vm1269, %v1555
    %1597 = vst.msk [vmem:[#allocation3 + $0x120] sm:$0xff] %vm1269, %v1557
    %1598 = vst.msk [vmem:[#allocation3 + $0x148] sm:$0xff] %vm1269, %v1559
    %1599 = vst.msk [vmem:[#allocation3 + $0x170] sm:$0xff] %vm1269, %v1561
    %1600 = vst.msk [vmem:[#allocation3 + $0x198] sm:$0xff] %vm1269, %v1563
    %1601 = vst.msk [vmem:[#allocation3 + $0x1c0] sm:$0xff] %vm1269, %v1565
    %1602 = vst.msk [vmem:[#allocation3 + $0x1e8] sm:$0xff] %vm1269, %v1567
    %1603 = vst.msk [vmem:[#allocation3 + $0x210] sm:$0xff] %vm1269, %v1569
    %1604 = vst.msk [vmem:[#allocation3 + $0x238] sm:$0xff] %vm1269, %v1571
    %1605 = vst.msk [vmem:[#allocation3 + $0x260] sm:$0xff] %vm1269, %v1573
    %v1606 = vld [vmem:[#allocation2 + $0x10] sm:$0xc]
    %v1607 = vld [vmem:[#allocation2 + $0x14] sm:$0xf]
    %v1608 = vld [vmem:[#allocation2 + $0x18] sm:$0xf]
    %v1609 = vld [vmem:[#allocation2 + $0x1c] sm:$0xf]
    %v1610 = vld [vmem:[#allocation2 + $0x20] sm:$0xf]
    %v1611 = vld [vmem:[#allocation2 + $0x24] sm:$0xf]
    %v1612 = vld [vmem:[#allocation2 + $0x28] sm:$0xf]
    %v1613 = vld [vmem:[#allocation2 + $0x2c] sm:$0xf]
    %v1614 = vld [vmem:[#allocation2 + $0x30] sm:$0xf]
    %v1615 = vld [vmem:[#allocation2 + $0x34] sm:$0xf]
    %v1616 = vld [vmem:[#allocation2 + $0x38] sm:$0xf]
    %v1617 = vld [vmem:[#allocation2 + $0x3c] sm:$0xf]
    %v1618 = vld [vmem:[#allocation2 + $0x40] sm:$0xf]
    %v1619 = vld [vmem:[#allocation2 + $0x44] sm:$0xf]
    %v1620 = vld [vmem:[#allocation2 + $0x48] sm:$0xf]
    %v1621 = vld [vmem:[#allocation2 + $0x4c] sm:$0xf]
    %v1622 = vld [vmem:[#allocation2 + $0x50] sm:$0xf]
    %v1623 = vld [vmem:[#allocation2 + $0x54] sm:$0xf]
    %v1624 = vld [vmem:[#allocation2 + $0x58] sm:$0xf]
    %v1625 = vld [vmem:[#allocation2 + $0x5c] sm:$0xf]
    %v1626 = vld [vmem:[#allocation2 + $0x60] sm:$0xf]
    %v1627 = vld [vmem:[#allocation2 + $0x64] sm:$0xf]
    %v1628 = vld [vmem:[#allocation2 + $0x68] sm:$0xf]
    %v1629 = vld [vmem:[#allocation2 + $0x6c] sm:$0xf]
    %v1630 = vld [vmem:[#allocation2 + $0x70] sm:$0xf]
    %v1631 = vld [vmem:[#allocation2 + $0x74] sm:$0xf]
    %v1632 = vld [vmem:[#allocation2 + $0x78] sm:$0xf]
    %v1633 = vld [vmem:[#allocation2 + $0x7c] sm:$0xf]
    %v1634 = vld [vmem:[#allocation2 + $0x80] sm:$0xf]
    %v1635 = vld [vmem:[#allocation2 + $0x84] sm:$0xf]
    %v1636 = vld [vmem:[#allocation2 + $0x88] sm:$0xf]
    %v1637 = vld [vmem:[#allocation2 + $0x8c] sm:$0xf]
    %v1638 = vld [vmem:[#allocation2 + $0x90] sm:$0x3]
    %v1672 = vunpack.c.l.b16 %v1606
    %v1673 = vunpack.c.l.b16 %v1607
    %v1674 = vunpack.c.l.b16 %v1608
    %v1675 = vunpack.c.l.b16 %v1609
    %v1676 = vunpack.c.l.b16 %v1610
    %v1677 = vunpack.c.l.b16 %v1611
    %v1678 = vunpack.c.l.b16 %v1612
    %v1679 = vunpack.c.l.b16 %v1613
    %v1680 = vunpack.c.l.b16 %v1614
    %v1681 = vunpack.c.l.b16 %v1615
    %v1682 = vunpack.c.l.b16 %v1616
    %v1683 = vunpack.c.l.b16 %v1617
    %v1684 = vunpack.c.l.b16 %v1618
    %v1685 = vunpack.c.l.b16 %v1619
    %v1686 = vunpack.c.l.b16 %v1620
    %v1687 = vunpack.c.l.b16 %v1621
    %v1688 = vunpack.c.l.b16 %v1622
    %v1689 = vunpack.c.l.b16 %v1623
    %v1690 = vunpack.c.l.b16 %v1624
    %v1691 = vunpack.c.l.b16 %v1625
    %v1692 = vunpack.c.l.b16 %v1626
    %v1693 = vunpack.c.l.b16 %v1627
    %v1694 = vunpack.c.l.b16 %v1628
    %v1695 = vunpack.c.l.b16 %v1629
    %v1696 = vunpack.c.l.b16 %v1630
    %v1697 = vunpack.c.l.b16 %v1631
    %v1698 = vunpack.c.l.b16 %v1632
    %v1699 = vunpack.c.l.b16 %v1633
    %v1700 = vunpack.c.l.b16 %v1634
    %v1701 = vunpack.c.l.b16 %v1635
    %v1702 = vunpack.c.l.b16 %v1636
    %v1703 = vunpack.c.l.b16 %v1637
    %v1704 = vunpack.c.l.b16 %v1638
    %v1705 = vpack.c.b16 %v1673, %v1672
    %v1706 = vpack.c.b16 %v1675, %v1674
    %v1707 = vpack.c.b16 %v1677, %v1676
    %v1708 = vpack.c.b16 %v1679, %v1678
    %v1709 = vpack.c.b16 %v1681, %v1680
    %v1710 = vpack.c.b16 %v1683, %v1682
    %v1711 = vpack.c.b16 %v1685, %v1684
    %v1712 = vpack.c.b16 %v1687, %v1686
    %v1713 = vpack.c.b16 %v1689, %v1688
    %v1714 = vpack.c.b16 %v1691, %v1690
    %v1715 = vpack.c.b16 %v1693, %v1692
    %v1716 = vpack.c.b16 %v1695, %v1694
    %v1717 = vpack.c.b16 %v1697, %v1696
    %v1718 = vpack.c.b16 %v1699, %v1698
    %v1719 = vpack.c.b16 %v1701, %v1700
    %v1720 = vpack.c.b16 %v1703, %v1702
    %v1721 = vpack.c.b16 %v1704, %v1704
    %v1722 = vrot.slane %v1705, 2
    %v1723 = vrot.slane %v1706, 2
    %v1724 = vsel %vm1187, %v1722, %v1723
    %v1725 = vrot.slane %v1707, 2
    %v1726 = vsel %vm1187, %v1723, %v1725
    %v1727 = vrot.slane %v1708, 2
    %v1728 = vsel %vm1187, %v1725, %v1727
    %v1729 = vrot.slane %v1709, 2
    %v1730 = vsel %vm1187, %v1727, %v1729
    %v1731 = vrot.slane %v1710, 2
    %v1732 = vsel %vm1187, %v1729, %v1731
    %v1733 = vrot.slane %v1711, 2
    %v1734 = vsel %vm1187, %v1731, %v1733
    %v1735 = vrot.slane %v1712, 2
    %v1736 = vsel %vm1187, %v1733, %v1735
    %v1737 = vrot.slane %v1713, 2
    %v1738 = vsel %vm1187, %v1735, %v1737
    %v1739 = vrot.slane %v1714, 2
    %v1740 = vsel %vm1187, %v1737, %v1739
    %v1741 = vrot.slane %v1715, 2
    %v1742 = vsel %vm1187, %v1739, %v1741
    %v1743 = vrot.slane %v1716, 2
    %v1744 = vsel %vm1187, %v1741, %v1743
    %v1745 = vrot.slane %v1717, 2
    %v1746 = vsel %vm1187, %v1743, %v1745
    %v1747 = vrot.slane %v1718, 2
    %v1748 = vsel %vm1187, %v1745, %v1747
    %v1749 = vrot.slane %v1719, 2
    %v1750 = vsel %vm1187, %v1747, %v1749
    %v1751 = vrot.slane %v1720, 2
    %v1752 = vsel %vm1187, %v1749, %v1751
    %v1753 = vrot.slane %v1721, 2
    %v1754 = vsel %vm1187, %v1751, %v1753
    %1771 = vst.msk [vmem:[#allocation3 + $0x10] sm:$0xff] %vm1054, %v1724
    %1772 = vst.msk [vmem:[#allocation3 + $0x38] sm:$0xff] %vm1054, %v1726
    %1773 = vst.msk [vmem:[#allocation3 + $0x60] sm:$0xff] %vm1054, %v1728
    %1774 = vst.msk [vmem:[#allocation3 + $0x88] sm:$0xff] %vm1054, %v1730
    %1775 = vst.msk [vmem:[#allocation3 + $0xb0] sm:$0xff] %vm1054, %v1732
    %1776 = vst.msk [vmem:[#allocation3 + $0xd8] sm:$0xff] %vm1054, %v1734
    %1777 = vst.msk [vmem:[#allocation3 + $0x100] sm:$0xff] %vm1054, %v1736
    %1778 = vst.msk [vmem:[#allocation3 + $0x128] sm:$0xff] %vm1054, %v1738
    %1779 = vst.msk [vmem:[#allocation3 + $0x150] sm:$0xff] %vm1054, %v1740
    %1780 = vst.msk [vmem:[#allocation3 + $0x178] sm:$0xff] %vm1054, %v1742
    %1781 = vst.msk [vmem:[#allocation3 + $0x1a0] sm:$0xff] %vm1054, %v1744
    %1782 = vst.msk [vmem:[#allocation3 + $0x1c8] sm:$0xff] %vm1054, %v1746
    %1783 = vst.msk [vmem:[#allocation3 + $0x1f0] sm:$0xff] %vm1054, %v1748
    %1784 = vst.msk [vmem:[#allocation3 + $0x218] sm:$0xff] %vm1054, %v1750
    %1785 = vst.msk [vmem:[#allocation3 + $0x240] sm:$0xff] %vm1054, %v1752
    %1786 = vst.msk [vmem:[#allocation3 + $0x268] sm:$0xff] %vm1054, %v1754
    %v1787 = vld [vmem:[#allocation2 + $0x14] sm:$0xf]
    %v1788 = vld [vmem:[#allocation2 + $0x18] sm:$0xf]
    %v1789 = vld [vmem:[#allocation2 + $0x1c] sm:$0xf]
    %v1790 = vld [vmem:[#allocation2 + $0x20] sm:$0xf]
    %v1791 = vld [vmem:[#allocation2 + $0x24] sm:$0xf]
    %v1792 = vld [vmem:[#allocation2 + $0x28] sm:$0xf]
    %v1793 = vld [vmem:[#allocation2 + $0x2c] sm:$0xf]
    %v1794 = vld [vmem:[#allocation2 + $0x30] sm:$0xf]
    %v1795 = vld [vmem:[#allocation2 + $0x34] sm:$0xf]
    %v1796 = vld [vmem:[#allocation2 + $0x38] sm:$0xf]
    %v1797 = vld [vmem:[#allocation2 + $0x3c] sm:$0xf]
    %v1798 = vld [vmem:[#allocation2 + $0x40] sm:$0xf]
    %v1799 = vld [vmem:[#allocation2 + $0x44] sm:$0xf]
    %v1800 = vld [vmem:[#allocation2 + $0x48] sm:$0xf]
    %v1801 = vld [vmem:[#allocation2 + $0x4c] sm:$0xf]
    %v1802 = vld [vmem:[#allocation2 + $0x50] sm:$0xf]
    %v1803 = vld [vmem:[#allocation2 + $0x54] sm:$0xf]
    %v1804 = vld [vmem:[#allocation2 + $0x58] sm:$0xf]
    %v1805 = vld [vmem:[#allocation2 + $0x5c] sm:$0xf]
    %v1806 = vld [vmem:[#allocation2 + $0x60] sm:$0xf]
    %v1807 = vld [vmem:[#allocation2 + $0x64] sm:$0xf]
    %v1808 = vld [vmem:[#allocation2 + $0x68] sm:$0xf]
    %v1809 = vld [vmem:[#allocation2 + $0x6c] sm:$0xf]
    %v1810 = vld [vmem:[#allocation2 + $0x70] sm:$0xf]
    %v1811 = vld [vmem:[#allocation2 + $0x74] sm:$0xf]
    %v1812 = vld [vmem:[#allocation2 + $0x78] sm:$0xf]
    %v1813 = vld [vmem:[#allocation2 + $0x7c] sm:$0xf]
    %v1814 = vld [vmem:[#allocation2 + $0x80] sm:$0xf]
    %v1815 = vld [vmem:[#allocation2 + $0x84] sm:$0xf]
    %v1816 = vld [vmem:[#allocation2 + $0x88] sm:$0xf]
    %v1817 = vld [vmem:[#allocation2 + $0x8c] sm:$0xf]
    %v1818 = vld [vmem:[#allocation2 + $0x90] sm:$0xf]
    %v1851 = vunpack.c.l.b16 %v1787
    %v1852 = vunpack.c.l.b16 %v1788
    %v1853 = vunpack.c.l.b16 %v1789
    %v1854 = vunpack.c.l.b16 %v1790
    %v1855 = vunpack.c.l.b16 %v1791
    %v1856 = vunpack.c.l.b16 %v1792
    %v1857 = vunpack.c.l.b16 %v1793
    %v1858 = vunpack.c.l.b16 %v1794
    %v1859 = vunpack.c.l.b16 %v1795
    %v1860 = vunpack.c.l.b16 %v1796
    %v1861 = vunpack.c.l.b16 %v1797
    %v1862 = vunpack.c.l.b16 %v1798
    %v1863 = vunpack.c.l.b16 %v1799
    %v1864 = vunpack.c.l.b16 %v1800
    %v1865 = vunpack.c.l.b16 %v1801
    %v1866 = vunpack.c.l.b16 %v1802
    %v1867 = vunpack.c.l.b16 %v1803
    %v1868 = vunpack.c.l.b16 %v1804
    %v1869 = vunpack.c.l.b16 %v1805
    %v1870 = vunpack.c.l.b16 %v1806
    %v1871 = vunpack.c.l.b16 %v1807
    %v1872 = vunpack.c.l.b16 %v1808
    %v1873 = vunpack.c.l.b16 %v1809
    %v1874 = vunpack.c.l.b16 %v1810
    %v1875 = vunpack.c.l.b16 %v1811
    %v1876 = vunpack.c.l.b16 %v1812
    %v1877 = vunpack.c.l.b16 %v1813
    %v1878 = vunpack.c.l.b16 %v1814
    %v1879 = vunpack.c.l.b16 %v1815
    %v1880 = vunpack.c.l.b16 %v1816
    %v1881 = vunpack.c.l.b16 %v1817
    %v1882 = vunpack.c.l.b16 %v1818
    %v1883 = vpack.c.b16 %v1852, %v1851
    %v1884 = vpack.c.b16 %v1854, %v1853
    %v1885 = vpack.c.b16 %v1856, %v1855
    %v1886 = vpack.c.b16 %v1858, %v1857
    %v1887 = vpack.c.b16 %v1860, %v1859
    %v1888 = vpack.c.b16 %v1862, %v1861
    %v1889 = vpack.c.b16 %v1864, %v1863
    %v1890 = vpack.c.b16 %v1866, %v1865
    %v1891 = vpack.c.b16 %v1868, %v1867
    %v1892 = vpack.c.b16 %v1870, %v1869
    %v1893 = vpack.c.b16 %v1872, %v1871
    %v1894 = vpack.c.b16 %v1874, %v1873
    %v1895 = vpack.c.b16 %v1876, %v1875
    %v1896 = vpack.c.b16 %v1878, %v1877
    %v1897 = vpack.c.b16 %v1880, %v1879
    %v1898 = vpack.c.b16 %v1882, %v1881
    %1899 = vrot.lane.b32.xlu0 %v1883, 64
    %v1900 = vpop.permute.xlu0 %1899
    %1901 = vrot.lane.b32.xlu0 %v1884, 64
    %v1902 = vpop.permute.xlu0 %1901
    %1903 = vrot.lane.b32.xlu0 %v1885, 64
    %v1904 = vpop.permute.xlu0 %1903
    %1905 = vrot.lane.b32.xlu0 %v1886, 64
    %v1906 = vpop.permute.xlu0 %1905
    %1907 = vrot.lane.b32.xlu0 %v1887, 64
    %v1908 = vpop.permute.xlu0 %1907
    %1909 = vrot.lane.b32.xlu0 %v1888, 64
    %v1910 = vpop.permute.xlu0 %1909
    %1911 = vrot.lane.b32.xlu0 %v1889, 64
    %v1912 = vpop.permute.xlu0 %1911
    %1913 = vrot.lane.b32.xlu0 %v1890, 64
    %v1914 = vpop.permute.xlu0 %1913
    %1915 = vrot.lane.b32.xlu0 %v1891, 64
    %v1916 = vpop.permute.xlu0 %1915
    %1917 = vrot.lane.b32.xlu0 %v1892, 64
    %v1918 = vpop.permute.xlu0 %1917
    %1919 = vrot.lane.b32.xlu0 %v1893, 64
    %v1920 = vpop.permute.xlu0 %1919
    %1921 = vrot.lane.b32.xlu0 %v1894, 64
    %v1922 = vpop.permute.xlu0 %1921
    %1923 = vrot.lane.b32.xlu0 %v1895, 64
    %v1924 = vpop.permute.xlu0 %1923
    %1925 = vrot.lane.b32.xlu0 %v1896, 64
    %v1926 = vpop.permute.xlu0 %1925
    %1927 = vrot.lane.b32.xlu0 %v1897, 64
    %v1928 = vpop.permute.xlu0 %1927
    %1929 = vrot.lane.b32.xlu0 %v1898, 64
    %v1930 = vpop.permute.xlu0 %1929
    %1947 = vst.msk [vmem:[#allocation3 + $0x10] sm:$0xff] %vm1269, %v1900
    %1948 = vst.msk [vmem:[#allocation3 + $0x38] sm:$0xff] %vm1269, %v1902
    %1949 = vst.msk [vmem:[#allocation3 + $0x60] sm:$0xff] %vm1269, %v1904
    %1950 = vst.msk [vmem:[#allocation3 + $0x88] sm:$0xff] %vm1269, %v1906
    %1951 = vst.msk [vmem:[#allocation3 + $0xb0] sm:$0xff] %vm1269, %v1908
    %1952 = vst.msk [vmem:[#allocation3 + $0xd8] sm:$0xff] %vm1269, %v1910
    %1953 = vst.msk [vmem:[#allocation3 + $0x100] sm:$0xff] %vm1269, %v1912
    %1954 = vst.msk [vmem:[#allocation3 + $0x128] sm:$0xff] %vm1269, %v1914
    %1955 = vst.msk [vmem:[#allocation3 + $0x150] sm:$0xff] %vm1269, %v1916
    %1956 = vst.msk [vmem:[#allocation3 + $0x178] sm:$0xff] %vm1269, %v1918
    %1957 = vst.msk [vmem:[#allocation3 + $0x1a0] sm:$0xff] %vm1269, %v1920
    %1958 = vst.msk [vmem:[#allocation3 + $0x1c8] sm:$0xff] %vm1269, %v1922
    %1959 = vst.msk [vmem:[#allocation3 + $0x1f0] sm:$0xff] %vm1269, %v1924
    %1960 = vst.msk [vmem:[#allocation3 + $0x218] sm:$0xff] %vm1269, %v1926
    %1961 = vst.msk [vmem:[#allocation3 + $0x240] sm:$0xff] %vm1269, %v1928
    %1962 = vst.msk [vmem:[#allocation3 + $0x268] sm:$0xff] %vm1269, %v1930
    %v1963 = vld [vmem:[#allocation2 + $0x20] sm:$0xf]
    %v1964 = vld [vmem:[#allocation2 + $0x24] sm:$0xf]
    %v1965 = vld [vmem:[#allocation2 + $0x28] sm:$0xf]
    %v1966 = vld [vmem:[#allocation2 + $0x2c] sm:$0xf]
    %v1967 = vld [vmem:[#allocation2 + $0x30] sm:$0xf]
    %v1968 = vld [vmem:[#allocation2 + $0x34] sm:$0xf]
    %v1969 = vld [vmem:[#allocation2 + $0x38] sm:$0xf]
    %v1970 = vld [vmem:[#allocation2 + $0x3c] sm:$0xf]
    %v1971 = vld [vmem:[#allocation2 + $0x40] sm:$0xf]
    %v1972 = vld [vmem:[#allocation2 + $0x44] sm:$0xf]
    %v1973 = vld [vmem:[#allocation2 + $0x48] sm:$0xf]
    %v1974 = vld [vmem:[#allocation2 + $0x4c] sm:$0xf]
    %v1975 = vld [vmem:[#allocation2 + $0x50] sm:$0xf]
    %v1976 = vld [vmem:[#allocation2 + $0x54] sm:$0xf]
    %v1977 = vld [vmem:[#allocation2 + $0x58] sm:$0xf]
    %v1978 = vld [vmem:[#allocation2 + $0x5c] sm:$0xf]
    %v1979 = vld [vmem:[#allocation2 + $0x60] sm:$0xf]
    %v1980 = vld [vmem:[#allocation2 + $0x64] sm:$0xf]
    %v1981 = vld [vmem:[#allocation2 + $0x68] sm:$0xf]
    %v1982 = vld [vmem:[#allocation2 + $0x6c] sm:$0xf]
    %v1983 = vld [vmem:[#allocation2 + $0x70] sm:$0xf]
    %v1984 = vld [vmem:[#allocation2 + $0x74] sm:$0xf]
    %v1985 = vld [vmem:[#allocation2 + $0x78] sm:$0xf]
    %v1986 = vld [vmem:[#allocation2 + $0x7c] sm:$0xf]
    %v1987 = vld [vmem:[#allocation2 + $0x80] sm:$0xf]
    %v1988 = vld [vmem:[#allocation2 + $0x84] sm:$0xf]
    %v1989 = vld [vmem:[#allocation2 + $0x88] sm:$0xf]
    %v1990 = vld [vmem:[#allocation2 + $0x8c] sm:$0xf]
    %v1991 = vld [vmem:[#allocation2 + $0x90] sm:$0xf]
    %v1992 = vld [vmem:[#allocation2 + $0x94] sm:$0xf]
    %v1993 = vld [vmem:[#allocation2 + $0x98] sm:$0xf]
    %v1994 = vld [vmem:[#allocation2 + $0x9c] sm:$0xf]
    %v2027 = vunpack.c.l.b16 %v1963
    %v2028 = vunpack.c.l.b16 %v1964
    %v2029 = vunpack.c.l.b16 %v1965
    %v2030 = vunpack.c.l.b16 %v1966
    %v2031 = vunpack.c.l.b16 %v1967
    %v2032 = vunpack.c.l.b16 %v1968
    %v2033 = vunpack.c.l.b16 %v1969
    %v2034 = vunpack.c.l.b16 %v1970
    %v2035 = vunpack.c.l.b16 %v1971
    %v2036 = vunpack.c.l.b16 %v1972
    %v2037 = vunpack.c.l.b16 %v1973
    %v2038 = vunpack.c.l.b16 %v1974
    %v2039 = vunpack.c.l.b16 %v1975
    %v2040 = vunpack.c.l.b16 %v1976
    %v2041 = vunpack.c.l.b16 %v1977
    %v2042 = vunpack.c.l.b16 %v1978
    %v2043 = vunpack.c.l.b16 %v1979
    %v2044 = vunpack.c.l.b16 %v1980
    %v2045 = vunpack.c.l.b16 %v1981
    %v2046 = vunpack.c.l.b16 %v1982
    %v2047 = vunpack.c.l.b16 %v1983
    %v2048 = vunpack.c.l.b16 %v1984
    %v2049 = vunpack.c.l.b16 %v1985
    %v2050 = vunpack.c.l.b16 %v1986
    %v2051 = vunpack.c.l.b16 %v1987
    %v2052 = vunpack.c.l.b16 %v1988
    %v2053 = vunpack.c.l.b16 %v1989
    %v2054 = vunpack.c.l.b16 %v1990
    %v2055 = vunpack.c.l.b16 %v1991
    %v2056 = vunpack.c.l.b16 %v1992
    %v2057 = vunpack.c.l.b16 %v1993
    %v2058 = vunpack.c.l.b16 %v1994
    %v2059 = vpack.c.b16 %v2028, %v2027
    %v2060 = vpack.c.b16 %v2030, %v2029
    %v2061 = vpack.c.b16 %v2032, %v2031
    %v2062 = vpack.c.b16 %v2034, %v2033
    %v2063 = vpack.c.b16 %v2036, %v2035
    %v2064 = vpack.c.b16 %v2038, %v2037
    %v2065 = vpack.c.b16 %v2040, %v2039
    %v2066 = vpack.c.b16 %v2042, %v2041
    %v2067 = vpack.c.b16 %v2044, %v2043
    %v2068 = vpack.c.b16 %v2046, %v2045
    %v2069 = vpack.c.b16 %v2048, %v2047
    %v2070 = vpack.c.b16 %v2050, %v2049
    %v2071 = vpack.c.b16 %v2052, %v2051
    %v2072 = vpack.c.b16 %v2054, %v2053
    %v2073 = vpack.c.b16 %v2056, %v2055
    %v2074 = vpack.c.b16 %v2058, %v2057
    %2091 = vst.msk [vmem:[#allocation3 + $0x18] sm:$0xff] %vm1054, %v2059
    %2092 = vst.msk [vmem:[#allocation3 + $0x40] sm:$0xff] %vm1054, %v2060
    %2093 = vst.msk [vmem:[#allocation3 + $0x68] sm:$0xff] %vm1054, %v2061
    %2094 = vst.msk [vmem:[#allocation3 + $0x90] sm:$0xff] %vm1054, %v2062
    %2095 = vst.msk [vmem:[#allocation3 + $0xb8] sm:$0xff] %vm1054, %v2063
    %2096 = vst.msk [vmem:[#allocation3 + $0xe0] sm:$0xff] %vm1054, %v2064
    %2097 = vst.msk [vmem:[#allocation3 + $0x108] sm:$0xff] %vm1054, %v2065
    %2098 = vst.msk [vmem:[#allocation3 + $0x130] sm:$0xff] %vm1054, %v2066
    %2099 = vst.msk [vmem:[#allocation3 + $0x158] sm:$0xff] %vm1054, %v2067
    %2100 = vst.msk [vmem:[#allocation3 + $0x180] sm:$0xff] %vm1054, %v2068
    %2101 = vst.msk [vmem:[#allocation3 + $0x1a8] sm:$0xff] %vm1054, %v2069
    %2102 = vst.msk [vmem:[#allocation3 + $0x1d0] sm:$0xff] %vm1054, %v2070
    %2103 = vst.msk [vmem:[#allocation3 + $0x1f8] sm:$0xff] %vm1054, %v2071
    %2104 = vst.msk [vmem:[#allocation3 + $0x220] sm:$0xff] %vm1054, %v2072
    %2105 = vst.msk [vmem:[#allocation3 + $0x248] sm:$0xff] %vm1054, %v2073
    %2106 = vst.msk [vmem:[#allocation3 + $0x270] sm:$0xff] %vm1054, %v2074
    %v2107 = vld [vmem:[#allocation2 + $0x20] sm:$0xc]
    %v2108 = vld [vmem:[#allocation2 + $0x24] sm:$0xf]
    %v2109 = vld [vmem:[#allocation2 + $0x28] sm:$0xf]
    %v2110 = vld [vmem:[#allocation2 + $0x2c] sm:$0xf]
    %v2111 = vld [vmem:[#allocation2 + $0x30] sm:$0xf]
    %v2112 = vld [vmem:[#allocation2 + $0x34] sm:$0xf]
    %v2113 = vld [vmem:[#allocation2 + $0x38] sm:$0xf]
    %v2114 = vld [vmem:[#allocation2 + $0x3c] sm:$0xf]
    %v2115 = vld [vmem:[#allocation2 + $0x40] sm:$0xf]
    %v2116 = vld [vmem:[#allocation2 + $0x44] sm:$0xf]
    %v2117 = vld [vmem:[#allocation2 + $0x48] sm:$0xf]
    %v2118 = vld [vmem:[#allocation2 + $0x4c] sm:$0xf]
    %v2119 = vld [vmem:[#allocation2 + $0x50] sm:$0xf]
    %v2120 = vld [vmem:[#allocation2 + $0x54] sm:$0xf]
    %v2121 = vld [vmem:[#allocation2 + $0x58] sm:$0xf]
    %v2122 = vld [vmem:[#allocation2 + $0x5c] sm:$0xf]
    %v2123 = vld [vmem:[#allocation2 + $0x60] sm:$0xf]
    %v2124 = vld [vmem:[#allocation2 + $0x64] sm:$0xf]
    %v2125 = vld [vmem:[#allocation2 + $0x68] sm:$0xf]
    %v2126 = vld [vmem:[#allocation2 + $0x6c] sm:$0xf]
    %v2127 = vld [vmem:[#allocation2 + $0x70] sm:$0xf]
    %v2128 = vld [vmem:[#allocation2 + $0x74] sm:$0xf]
    %v2129 = vld [vmem:[#allocation2 + $0x78] sm:$0xf]
    %v2130 = vld [vmem:[#allocation2 + $0x7c] sm:$0xf]
    %v2131 = vld [vmem:[#allocation2 + $0x80] sm:$0xf]
    %v2132 = vld [vmem:[#allocation2 + $0x84] sm:$0xf]
    %v2133 = vld [vmem:[#allocation2 + $0x88] sm:$0xf]
    %v2134 = vld [vmem:[#allocation2 + $0x8c] sm:$0xf]
    %v2135 = vld [vmem:[#allocation2 + $0x90] sm:$0xf]
    %v2136 = vld [vmem:[#allocation2 + $0x94] sm:$0xf]
    %v2137 = vld [vmem:[#allocation2 + $0x98] sm:$0xf]
    %v2138 = vld [vmem:[#allocation2 + $0x9c] sm:$0xf]
    %v2139 = vld [vmem:[#allocation2 + $0xa0] sm:$0x3]
    %v2173 = vunpack.c.l.b16 %v2107
    %v2174 = vunpack.c.l.b16 %v2108
    %v2175 = vunpack.c.l.b16 %v2109
    %v2176 = vunpack.c.l.b16 %v2110
    %v2177 = vunpack.c.l.b16 %v2111
    %v2178 = vunpack.c.l.b16 %v2112
    %v2179 = vunpack.c.l.b16 %v2113
    %v2180 = vunpack.c.l.b16 %v2114
    %v2181 = vunpack.c.l.b16 %v2115
    %v2182 = vunpack.c.l.b16 %v2116
    %v2183 = vunpack.c.l.b16 %v2117
    %v2184 = vunpack.c.l.b16 %v2118
    %v2185 = vunpack.c.l.b16 %v2119
    %v2186 = vunpack.c.l.b16 %v2120
    %v2187 = vunpack.c.l.b16 %v2121
    %v2188 = vunpack.c.l.b16 %v2122
    %v2189 = vunpack.c.l.b16 %v2123
    %v2190 = vunpack.c.l.b16 %v2124
    %v2191 = vunpack.c.l.b16 %v2125
    %v2192 = vunpack.c.l.b16 %v2126
    %v2193 = vunpack.c.l.b16 %v2127
    %v2194 = vunpack.c.l.b16 %v2128
    %v2195 = vunpack.c.l.b16 %v2129
    %v2196 = vunpack.c.l.b16 %v2130
    %v2197 = vunpack.c.l.b16 %v2131
    %v2198 = vunpack.c.l.b16 %v2132
    %v2199 = vunpack.c.l.b16 %v2133
    %v2200 = vunpack.c.l.b16 %v2134
    %v2201 = vunpack.c.l.b16 %v2135
    %v2202 = vunpack.c.l.b16 %v2136
    %v2203 = vunpack.c.l.b16 %v2137
    %v2204 = vunpack.c.l.b16 %v2138
    %v2205 = vunpack.c.l.b16 %v2139
    %v2206 = vpack.c.b16 %v2174, %v2173
    %v2207 = vpack.c.b16 %v2176, %v2175
    %v2208 = vpack.c.b16 %v2178, %v2177
    %v2209 = vpack.c.b16 %v2180, %v2179
    %v2210 = vpack.c.b16 %v2182, %v2181
    %v2211 = vpack.c.b16 %v2184, %v2183
    %v2212 = vpack.c.b16 %v2186, %v2185
    %v2213 = vpack.c.b16 %v2188, %v2187
    %v2214 = vpack.c.b16 %v2190, %v2189
    %v2215 = vpack.c.b16 %v2192, %v2191
    %v2216 = vpack.c.b16 %v2194, %v2193
    %v2217 = vpack.c.b16 %v2196, %v2195
    %v2218 = vpack.c.b16 %v2198, %v2197
    %v2219 = vpack.c.b16 %v2200, %v2199
    %v2220 = vpack.c.b16 %v2202, %v2201
    %v2221 = vpack.c.b16 %v2204, %v2203
    %v2222 = vpack.c.b16 %v2205, %v2205
    %v2223 = vrot.slane %v2206, 2
    %v2224 = vrot.slane %v2207, 2
    %v2225 = vsel %vm1187, %v2223, %v2224
    %v2226 = vrot.slane %v2208, 2
    %v2227 = vsel %vm1187, %v2224, %v2226
    %v2228 = vrot.slane %v2209, 2
    %v2229 = vsel %vm1187, %v2226, %v2228
    %v2230 = vrot.slane %v2210, 2
    %v2231 = vsel %vm1187, %v2228, %v2230
    %v2232 = vrot.slane %v2211, 2
    %v2233 = vsel %vm1187, %v2230, %v2232
    %v2234 = vrot.slane %v2212, 2
    %v2235 = vsel %vm1187, %v2232, %v2234
    %v2236 = vrot.slane %v2213, 2
    %v2237 = vsel %vm1187, %v2234, %v2236
    %v2238 = vrot.slane %v2214, 2
    %v2239 = vsel %vm1187, %v2236, %v2238
    %v2240 = vrot.slane %v2215, 2
    %v2241 = vsel %vm1187, %v2238, %v2240
    %v2242 = vrot.slane %v2216, 2
    %v2243 = vsel %vm1187, %v2240, %v2242
    %v2244 = vrot.slane %v2217, 2
    %v2245 = vsel %vm1187, %v2242, %v2244
    %v2246 = vrot.slane %v2218, 2
    %v2247 = vsel %vm1187, %v2244, %v2246
    %v2248 = vrot.slane %v2219, 2
    %v2249 = vsel %vm1187, %v2246, %v2248
    %v2250 = vrot.slane %v2220, 2
    %v2251 = vsel %vm1187, %v2248, %v2250
    %v2252 = vrot.slane %v2221, 2
    %v2253 = vsel %vm1187, %v2250, %v2252
    %v2254 = vrot.slane %v2222, 2
    %v2255 = vsel %vm1187, %v2252, %v2254
    %2256 = vrot.lane.b32.xlu0 %v2225, 64
    %v2257 = vpop.permute.xlu0 %2256
    %2258 = vrot.lane.b32.xlu0 %v2227, 64
    %v2259 = vpop.permute.xlu0 %2258
    %2260 = vrot.lane.b32.xlu0 %v2229, 64
    %v2261 = vpop.permute.xlu0 %2260
    %2262 = vrot.lane.b32.xlu0 %v2231, 64
    %v2263 = vpop.permute.xlu0 %2262
    %2264 = vrot.lane.b32.xlu0 %v2233, 64
    %v2265 = vpop.permute.xlu0 %2264
    %2266 = vrot.lane.b32.xlu0 %v2235, 64
    %v2267 = vpop.permute.xlu0 %2266
    %2268 = vrot.lane.b32.xlu0 %v2237, 64
    %v2269 = vpop.permute.xlu0 %2268
    %2270 = vrot.lane.b32.xlu0 %v2239, 64
    %v2271 = vpop.permute.xlu0 %2270
    %2272 = vrot.lane.b32.xlu0 %v2241, 64
    %v2273 = vpop.permute.xlu0 %2272
    %2274 = vrot.lane.b32.xlu0 %v2243, 64
    %v2275 = vpop.permute.xlu0 %2274
    %2276 = vrot.lane.b32.xlu0 %v2245, 64
    %v2277 = vpop.permute.xlu0 %2276
    %2278 = vrot.lane.b32.xlu0 %v2247, 64
    %v2279 = vpop.permute.xlu0 %2278
    %2280 = vrot.lane.b32.xlu0 %v2249, 64
    %v2281 = vpop.permute.xlu0 %2280
    %2282 = vrot.lane.b32.xlu0 %v2251, 64
    %v2283 = vpop.permute.xlu0 %2282
    %2284 = vrot.lane.b32.xlu0 %v2253, 64
    %v2285 = vpop.permute.xlu0 %2284
    %2286 = vrot.lane.b32.xlu0 %v2255, 64
    %v2287 = vpop.permute.xlu0 %2286
    %2304 = vst.msk [vmem:[#allocation3 + $0x18] sm:$0xff] %vm1269, %v2257
    %2305 = vst.msk [vmem:[#allocation3 + $0x40] sm:$0xff] %vm1269, %v2259
    %2306 = vst.msk [vmem:[#allocation3 + $0x68] sm:$0xff] %vm1269, %v2261
    %2307 = vst.msk [vmem:[#allocation3 + $0x90] sm:$0xff] %vm1269, %v2263
    %2308 = vst.msk [vmem:[#allocation3 + $0xb8] sm:$0xff] %vm1269, %v2265
    %2309 = vst.msk [vmem:[#allocation3 + $0xe0] sm:$0xff] %vm1269, %v2267
    %2310 = vst.msk [vmem:[#allocation3 + $0x108] sm:$0xff] %vm1269, %v2269
    %2311 = vst.msk [vmem:[#allocation3 + $0x130] sm:$0xff] %vm1269, %v2271
    %2312 = vst.msk [vmem:[#allocation3 + $0x158] sm:$0xff] %vm1269, %v2273
    %2313 = vst.msk [vmem:[#allocation3 + $0x180] sm:$0xff] %vm1269, %v2275
    %2314 = vst.msk [vmem:[#allocation3 + $0x1a8] sm:$0xff] %vm1269, %v2277
    %2315 = vst.msk [vmem:[#allocation3 + $0x1d0] sm:$0xff] %vm1269, %v2279
    %2316 = vst.msk [vmem:[#allocation3 + $0x1f8] sm:$0xff] %vm1269, %v2281
    %2317 = vst.msk [vmem:[#allocation3 + $0x220] sm:$0xff] %vm1269, %v2283
    %2318 = vst.msk [vmem:[#allocation3 + $0x248] sm:$0xff] %vm1269, %v2285
    %2319 = vst.msk [vmem:[#allocation3 + $0x270] sm:$0xff] %vm1269, %v2287
    %v2320 = vld [vmem:[#allocation2 + $0x24] sm:$0xf]
    %v2321 = vld [vmem:[#allocation2 + $0x28] sm:$0xf]
    %v2322 = vld [vmem:[#allocation2 + $0x2c] sm:$0xf]
    %v2323 = vld [vmem:[#allocation2 + $0x30] sm:$0xf]
    %v2324 = vld [vmem:[#allocation2 + $0x34] sm:$0xf]
    %v2325 = vld [vmem:[#allocation2 + $0x38] sm:$0xf]
    %v2326 = vld [vmem:[#allocation2 + $0x3c] sm:$0xf]
    %v2327 = vld [vmem:[#allocation2 + $0x40] sm:$0xf]
    %v2328 = vld [vmem:[#allocation2 + $0x44] sm:$0xf]
    %v2329 = vld [vmem:[#allocation2 + $0x48] sm:$0xf]
    %v2330 = vld [vmem:[#allocation2 + $0x4c] sm:$0xf]
    %v2331 = vld [vmem:[#allocation2 + $0x50] sm:$0xf]
    %v2332 = vld [vmem:[#allocation2 + $0x54] sm:$0xf]
    %v2333 = vld [vmem:[#allocation2 + $0x58] sm:$0xf]
    %v2334 = vld [vmem:[#allocation2 + $0x5c] sm:$0xf]
    %v2335 = vld [vmem:[#allocation2 + $0x60] sm:$0xf]
    %v2336 = vld [vmem:[#allocation2 + $0x64] sm:$0xf]
    %v2337 = vld [vmem:[#allocation2 + $0x68] sm:$0xf]
    %v2338 = vld [vmem:[#allocation2 + $0x6c] sm:$0xf]
    %v2339 = vld [vmem:[#allocation2 + $0x70] sm:$0xf]
    %v2340 = vld [vmem:[#allocation2 + $0x74] sm:$0xf]
    %v2341 = vld [vmem:[#allocation2 + $0x78] sm:$0xf]
    %v2342 = vld [vmem:[#allocation2 + $0x7c] sm:$0xf]
    %v2343 = vld [vmem:[#allocation2 + $0x80] sm:$0xf]
    %v2344 = vld [vmem:[#allocation2 + $0x84] sm:$0xf]
    %v2345 = vld [vmem:[#allocation2 + $0x88] sm:$0xf]
    %v2346 = vld [vmem:[#allocation2 + $0x8c] sm:$0xf]
    %v2347 = vld [vmem:[#allocation2 + $0x90] sm:$0xf]
    %v2348 = vld [vmem:[#allocation2 + $0x94] sm:$0xf]
    %v2349 = vld [vmem:[#allocation2 + $0x98] sm:$0xf]
    %v2350 = vld [vmem:[#allocation2 + $0x9c] sm:$0xf]
    %v2351 = vld [vmem:[#allocation2 + $0xa0] sm:$0xf]
    %v2384 = vunpack.c.l.b16 %v2320
    %v2385 = vunpack.c.l.b16 %v2321
    %v2386 = vunpack.c.l.b16 %v2322
    %v2387 = vunpack.c.l.b16 %v2323
    %v2388 = vunpack.c.l.b16 %v2324
    %v2389 = vunpack.c.l.b16 %v2325
    %v2390 = vunpack.c.l.b16 %v2326
    %v2391 = vunpack.c.l.b16 %v2327
    %v2392 = vunpack.c.l.b16 %v2328
    %v2393 = vunpack.c.l.b16 %v2329
    %v2394 = vunpack.c.l.b16 %v2330
    %v2395 = vunpack.c.l.b16 %v2331
    %v2396 = vunpack.c.l.b16 %v2332
    %v2397 = vunpack.c.l.b16 %v2333
    %v2398 = vunpack.c.l.b16 %v2334
    %v2399 = vunpack.c.l.b16 %v2335
    %v2400 = vunpack.c.l.b16 %v2336
    %v2401 = vunpack.c.l.b16 %v2337
    %v2402 = vunpack.c.l.b16 %v2338
    %v2403 = vunpack.c.l.b16 %v2339
    %v2404 = vunpack.c.l.b16 %v2340
    %v2405 = vunpack.c.l.b16 %v2341
    %v2406 = vunpack.c.l.b16 %v2342
    %v2407 = vunpack.c.l.b16 %v2343
    %v2408 = vunpack.c.l.b16 %v2344
    %v2409 = vunpack.c.l.b16 %v2345
    %v2410 = vunpack.c.l.b16 %v2346
    %v2411 = vunpack.c.l.b16 %v2347
    %v2412 = vunpack.c.l.b16 %v2348
    %v2413 = vunpack.c.l.b16 %v2349
    %v2414 = vunpack.c.l.b16 %v2350
    %v2415 = vunpack.c.l.b16 %v2351
    %v2416 = vpack.c.b16 %v2385, %v2384
    %v2417 = vpack.c.b16 %v2387, %v2386
    %v2418 = vpack.c.b16 %v2389, %v2388
    %v2419 = vpack.c.b16 %v2391, %v2390
    %v2420 = vpack.c.b16 %v2393, %v2392
    %v2421 = vpack.c.b16 %v2395, %v2394
    %v2422 = vpack.c.b16 %v2397, %v2396
    %v2423 = vpack.c.b16 %v2399, %v2398
    %v2424 = vpack.c.b16 %v2401, %v2400
    %v2425 = vpack.c.b16 %v2403, %v2402
    %v2426 = vpack.c.b16 %v2405, %v2404
    %v2427 = vpack.c.b16 %v2407, %v2406
    %v2428 = vpack.c.b16 %v2409, %v2408
    %v2429 = vpack.c.b16 %v2411, %v2410
    %v2430 = vpack.c.b16 %v2413, %v2412
    %v2431 = vpack.c.b16 %v2415, %v2414
    %2448 = vst.msk [vmem:[#allocation3 + $0x20] sm:$0xff] %vm1054, %v2416
    %2449 = vst.msk [vmem:[#allocation3 + $0x48] sm:$0xff] %vm1054, %v2417
    %2450 = vst.msk [vmem:[#allocation3 + $0x70] sm:$0xff] %vm1054, %v2418
    %2451 = vst.msk [vmem:[#allocation3 + $0x98] sm:$0xff] %vm1054, %v2419
    %2452 = vst.msk [vmem:[#allocation3 + $0xc0] sm:$0xff] %vm1054, %v2420
    %2453 = vst.msk [vmem:[#allocation3 + $0xe8] sm:$0xff] %vm1054, %v2421
    %2454 = vst.msk [vmem:[#allocation3 + $0x110] sm:$0xff] %vm1054, %v2422
    %2455 = vst.msk [vmem:[#allocation3 + $0x138] sm:$0xff] %vm1054, %v2423
    %2456 = vst.msk [vmem:[#allocation3 + $0x160] sm:$0xff] %vm1054, %v2424
    %2457 = vst.msk [vmem:[#allocation3 + $0x188] sm:$0xff] %vm1054, %v2425
    %2458 = vst.msk [vmem:[#allocation3 + $0x1b0] sm:$0xff] %vm1054, %v2426
    %2459 = vst.msk [vmem:[#allocation3 + $0x1d8] sm:$0xff] %vm1054, %v2427
    %2460 = vst.msk [vmem:[#allocation3 + $0x200] sm:$0xff] %vm1054, %v2428
    %2461 = vst.msk [vmem:[#allocation3 + $0x228] sm:$0xff] %vm1054, %v2429
    %2462 = vst.msk [vmem:[#allocation3 + $0x250] sm:$0xff] %vm1054, %v2430
    %2463 = vst.msk [vmem:[#allocation3 + $0x278] sm:$0xff] %vm1054, %v2431
    %v2464 = vld [vmem:[#allocation3] sm:$0xff]
    %v2465 = vld [vmem:[#allocation3 + $0x8] sm:$0xff]
    %v2466 = vld [vmem:[#allocation3 + $0x10] sm:$0xff]
    %v2467 = vld [vmem:[#allocation3 + $0x18] sm:$0xff]
    %v2468 = vld [vmem:[#allocation3 + $0x20] sm:$0xff]
    %v2469 = vld [vmem:[#allocation3 + $0x28] sm:$0xff]
    %v2470 = vld [vmem:[#allocation3 + $0x30] sm:$0xff]
    %v2471 = vld [vmem:[#allocation3 + $0x38] sm:$0xff]
    %v2472 = vld [vmem:[#allocation3 + $0x40] sm:$0xff]
    %v2473 = vld [vmem:[#allocation3 + $0x48] sm:$0xff]
    %v2474 = vld [vmem:[#allocation3 + $0x50] sm:$0xff]
    %v2475 = vld [vmem:[#allocation3 + $0x58] sm:$0xff]
    %v2476 = vld [vmem:[#allocation3 + $0x60] sm:$0xff]
    %v2477 = vld [vmem:[#allocation3 + $0x68] sm:$0xff]
    %v2478 = vld [vmem:[#allocation3 + $0x70] sm:$0xff]
    %v2479 = vld [vmem:[#allocation3 + $0x78] sm:$0xff]
    %v2480 = vld [vmem:[#allocation3 + $0x80] sm:$0xff]
    %v2481 = vld [vmem:[#allocation3 + $0x88] sm:$0xff]
    %v2482 = vld [vmem:[#allocation3 + $0x90] sm:$0xff]
    %v2483 = vld [vmem:[#allocation3 + $0x98] sm:$0xff]
    %v2484 = vld [vmem:[#allocation3 + $0xa0] sm:$0xff]
    %v2485 = vld [vmem:[#allocation3 + $0xa8] sm:$0xff]
    %v2486 = vld [vmem:[#allocation3 + $0xb0] sm:$0xff]
    %v2487 = vld [vmem:[#allocation3 + $0xb8] sm:$0xff]
    %v2488 = vld [vmem:[#allocation3 + $0xc0] sm:$0xff]
    %v2489 = vld [vmem:[#allocation3 + $0xc8] sm:$0xff]
    %v2490 = vld [vmem:[#allocation3 + $0xd0] sm:$0xff]
    %v2491 = vld [vmem:[#allocation3 + $0xd8] sm:$0xff]
    %v2492 = vld [vmem:[#allocation3 + $0xe0] sm:$0xff]
    %v2493 = vld [vmem:[#allocation3 + $0xe8] sm:$0xff]
    %v2494 = vld [vmem:[#allocation3 + $0xf0] sm:$0xff]
    %v2495 = vld [vmem:[#allocation3 + $0xf8] sm:$0xff]
    %v2496 = vld [vmem:[#allocation3 + $0x100] sm:$0xff]
    %v2497 = vld [vmem:[#allocation3 + $0x108] sm:$0xff]
    %v2498 = vld [vmem:[#allocation3 + $0x110] sm:$0xff]
    %v2499 = vld [vmem:[#allocation3 + $0x118] sm:$0xff]
    %v2500 = vld [vmem:[#allocation3 + $0x120] sm:$0xff]
    %v2501 = vld [vmem:[#allocation3 + $0x128] sm:$0xff]
    %v2502 = vld [vmem:[#allocation3 + $0x130] sm:$0xff]
    %v2503 = vld [vmem:[#allocation3 + $0x138] sm:$0xff]
    %v2504 = vld [vmem:[#allocation3 + $0x140] sm:$0xff]
    %v2505 = vld [vmem:[#allocation3 + $0x148] sm:$0xff]
    %v2506 = vld [vmem:[#allocation3 + $0x150] sm:$0xff]
    %v2507 = vld [vmem:[#allocation3 + $0x158] sm:$0xff]
    %v2508 = vld [vmem:[#allocation3 + $0x160] sm:$0xff]
    %v2509 = vld [vmem:[#allocation3 + $0x168] sm:$0xff]
    %v2510 = vld [vmem:[#allocation3 + $0x170] sm:$0xff]
    %v2511 = vld [vmem:[#allocation3 + $0x178] sm:$0xff]
    %v2512 = vld [vmem:[#allocation3 + $0x180] sm:$0xff]
    %v2513 = vld [vmem:[#allocation3 + $0x188] sm:$0xff]
    %v2514 = vld [vmem:[#allocation3 + $0x190] sm:$0xff]
    %v2515 = vld [vmem:[#allocation3 + $0x198] sm:$0xff]
    %v2516 = vld [vmem:[#allocation3 + $0x1a0] sm:$0xff]
    %v2517 = vld [vmem:[#allocation3 + $0x1a8] sm:$0xff]
    %v2518 = vld [vmem:[#allocation3 + $0x1b0] sm:$0xff]
    %v2519 = vld [vmem:[#allocation3 + $0x1b8] sm:$0xff]
    %v2520 = vld [vmem:[#allocation3 + $0x1c0] sm:$0xff]
    %v2521 = vld [vmem:[#allocation3 + $0x1c8] sm:$0xff]
    %v2522 = vld [vmem:[#allocation3 + $0x1d0] sm:$0xff]
    %v2523 = vld [vmem:[#allocation3 + $0x1d8] sm:$0xff]
    %v2524 = vld [vmem:[#allocation3 + $0x1e0] sm:$0xff]
    %v2525 = vld [vmem:[#allocation3 + $0x1e8] sm:$0xff]
    %v2526 = vld [vmem:[#allocation3 + $0x1f0] sm:$0xff]
    %v2527 = vld [vmem:[#allocation3 + $0x1f8] sm:$0xff]
    %v2528 = vld [vmem:[#allocation3 + $0x200] sm:$0xff]
    %v2529 = vld [vmem:[#allocation3 + $0x208] sm:$0xff]
    %v2530 = vld [vmem:[#allocation3 + $0x210] sm:$0xff]
    %v2531 = vld [vmem:[#allocation3 + $0x218] sm:$0xff]
    %v2532 = vld [vmem:[#allocation3 + $0x220] sm:$0xff]
    %v2533 = vld [vmem:[#allocation3 + $0x228] sm:$0xff]
    %v2534 = vld [vmem:[#allocation3 + $0x230] sm:$0xff]
    %v2535 = vld [vmem:[#allocation3 + $0x238] sm:$0xff]
    %v2536 = vld [vmem:[#allocation3 + $0x240] sm:$0xff]
    %v2537 = vld [vmem:[#allocation3 + $0x248] sm:$0xff]
    %v2538 = vld [vmem:[#allocation3 + $0x250] sm:$0xff]
    %v2539 = vld [vmem:[#allocation3 + $0x258] sm:$0xff]
    %v2540 = vld [vmem:[#allocation3 + $0x260] sm:$0xff]
    %v2541 = vld [vmem:[#allocation3 + $0x268] sm:$0xff]
    %v2542 = vld [vmem:[#allocation3 + $0x270] sm:$0xff]
    %v2543 = vld [vmem:[#allocation3 + $0x278] sm:$0xff]
    %v2544 = vld [vmem:[%s4] sm:$0xf]
    %v2545 = vld [vmem:[%s4 + $0x4] sm:$0xf]
    %v2546 = vld [vmem:[%s4 + $0x8] sm:$0xf]
    %v2547 = vld [vmem:[%s4 + $0xc] sm:$0xf]
    %v2548 = vld [vmem:[%s4 + $0x10] sm:$0xf]
    %v2549 = vld [vmem:[%s4 + $0x14] sm:$0xf]
    %v2550 = vld [vmem:[%s4 + $0x18] sm:$0xf]
    %v2551 = vld [vmem:[%s4 + $0x1c] sm:$0xf]
    %v2552 = vld [vmem:[%s4 + $0x20] sm:$0xf]
    %v2553 = vld [vmem:[%s4 + $0x24] sm:$0xf]
    %v2554 = vld [vmem:[%s4 + $0x28] sm:$0xf]
    %v2555 = vld [vmem:[%s4 + $0x2c] sm:$0xf]
    %v2556 = vld [vmem:[%s4 + $0x30] sm:$0xf]
    %v2557 = vld [vmem:[%s4 + $0x34] sm:$0xf]
    %v2558 = vld [vmem:[%s4 + $0x38] sm:$0xf]
    %v2559 = vld [vmem:[%s4 + $0x3c] sm:$0xf]
    %v2560 = vld [vmem:[%s4 + $0x40] sm:$0xf]
    %v2561 = vld [vmem:[%s4 + $0x44] sm:$0xf]
    %v2562 = vld [vmem:[%s4 + $0x48] sm:$0xf]
    %v2563 = vld [vmem:[%s4 + $0x4c] sm:$0xf]
    %v2564 = vld [vmem:[%s4 + $0x50] sm:$0xf]
    %v2565 = vld [vmem:[%s4 + $0x54] sm:$0xf]
    %v2566 = vld [vmem:[%s4 + $0x58] sm:$0xf]
    %v2567 = vld [vmem:[%s4 + $0x5c] sm:$0xf]
    %v2568 = vld [vmem:[%s4 + $0x60] sm:$0xf]
    %v2569 = vld [vmem:[%s4 + $0x64] sm:$0xf]
    %v2570 = vld [vmem:[%s4 + $0x68] sm:$0xf]
    %v2571 = vld [vmem:[%s4 + $0x6c] sm:$0xf]
    %v2572 = vld [vmem:[%s4 + $0x70] sm:$0xf]
    %v2573 = vld [vmem:[%s4 + $0x74] sm:$0xf]
    %v2574 = vld [vmem:[%s4 + $0x78] sm:$0xf]
    %v2575 = vld [vmem:[%s4 + $0x7c] sm:$0xf]
    %v2576 = vld [vmem:[%s4 + $0x80] sm:$0xf]
    %v2577 = vld [vmem:[%s4 + $0x84] sm:$0xf]
    %v2578 = vld [vmem:[%s4 + $0x88] sm:$0xf]
    %v2579 = vld [vmem:[%s4 + $0x8c] sm:$0xf]
    %v2580 = vld [vmem:[%s4 + $0x90] sm:$0xf]
    %v2581 = vld [vmem:[%s4 + $0x94] sm:$0xf]
    %v2582 = vld [vmem:[%s4 + $0x98] sm:$0xf]
    %v2583 = vld [vmem:[%s4 + $0x9c] sm:$0xf]
    %v2584 = vld [vmem:[%s4 + $0xa0] sm:$0xf]
    %v2585 = vld [vmem:[%s4 + $0xa4] sm:$0xf]
    %v2586 = vld [vmem:[%s4 + $0xa8] sm:$0xf]
    %v2587 = vld [vmem:[%s4 + $0xac] sm:$0xf]
    %v2588 = vld [vmem:[%s4 + $0xb0] sm:$0xf]
    %v2589 = vld [vmem:[%s4 + $0xb4] sm:$0xf]
    %v2590 = vld [vmem:[%s4 + $0xb8] sm:$0xf]
    %v2591 = vld [vmem:[%s4 + $0xbc] sm:$0xf]
    %v2592 = vld [vmem:[%s4 + $0xc0] sm:$0xf]
    %v2593 = vld [vmem:[%s4 + $0xc4] sm:$0xf]
    %v2594 = vld [vmem:[%s4 + $0xc8] sm:$0xf]
    %v2595 = vld [vmem:[%s4 + $0xcc] sm:$0xf]
    %v2596 = vld [vmem:[%s4 + $0xd0] sm:$0xf]
    %v2597 = vld [vmem:[%s4 + $0xd4] sm:$0xf]
    %v2598 = vld [vmem:[%s4 + $0xd8] sm:$0xf]
    %v2599 = vld [vmem:[%s4 + $0xdc] sm:$0xf]
    %v2600 = vld [vmem:[%s4 + $0xe0] sm:$0xf]
    %v2601 = vld [vmem:[%s4 + $0xe4] sm:$0xf]
    %v2602 = vld [vmem:[%s4 + $0xe8] sm:$0xf]
    %v2603 = vld [vmem:[%s4 + $0xec] sm:$0xf]
    %v2604 = vld [vmem:[%s4 + $0xf0] sm:$0xf]
    %v2605 = vld [vmem:[%s4 + $0xf4] sm:$0xf]
    %v2606 = vld [vmem:[%s4 + $0xf8] sm:$0xf]
    %v2607 = vld [vmem:[%s4 + $0xfc] sm:$0xf]
    %v2608 = vld [vmem:[%s4 + $0x100] sm:$0xf]
    %v2609 = vld [vmem:[%s4 + $0x104] sm:$0xf]
    %v2610 = vld [vmem:[%s4 + $0x108] sm:$0xf]
    %v2611 = vld [vmem:[%s4 + $0x10c] sm:$0xf]
    %v2612 = vld [vmem:[%s4 + $0x110] sm:$0xf]
    %v2613 = vld [vmem:[%s4 + $0x114] sm:$0xf]
    %v2614 = vld [vmem:[%s4 + $0x118] sm:$0xf]
    %v2615 = vld [vmem:[%s4 + $0x11c] sm:$0xf]
    %v2616 = vld [vmem:[#allocation14] sm:$0x1]
    %v2618 = vlaneseq
    %v2619 = vshrl.u32 %v2618, 7
    %v2620 = vsub.s32 0, %v2619
    %v2621 = vrot.slane %v2616, %v2620
    %v2695 = vunpack.c.l.b16 %v2544
    %v2696 = vunpack.c.l.b16 %v2545
    %v2697 = vunpack.c.l.b16 %v2546
    %v2698 = vunpack.c.l.b16 %v2547
    %v2699 = vunpack.c.l.b16 %v2548
    %v2700 = vunpack.c.l.b16 %v2549
    %v2701 = vunpack.c.l.b16 %v2550
    %v2702 = vunpack.c.l.b16 %v2551
    %v2703 = vunpack.c.l.b16 %v2552
    %v2704 = vunpack.c.l.b16 %v2553
    %v2705 = vunpack.c.l.b16 %v2554
    %v2706 = vunpack.c.l.b16 %v2555
    %v2707 = vunpack.c.l.b16 %v2556
    %v2708 = vunpack.c.l.b16 %v2557
    %v2709 = vunpack.c.l.b16 %v2558
    %v2710 = vunpack.c.l.b16 %v2559
    %v2711 = vunpack.c.l.b16 %v2560
    %v2712 = vunpack.c.l.b16 %v2561
    %v2713 = vunpack.c.l.b16 %v2562
    %v2714 = vunpack.c.l.b16 %v2563
    %v2715 = vunpack.c.l.b16 %v2564
    %v2716 = vunpack.c.l.b16 %v2565
    %v2717 = vunpack.c.l.b16 %v2566
    %v2718 = vunpack.c.l.b16 %v2567
    %v2719 = vunpack.c.l.b16 %v2568
    %v2720 = vunpack.c.l.b16 %v2569
    %v2721 = vunpack.c.l.b16 %v2570
    %v2722 = vunpack.c.l.b16 %v2571
    %v2723 = vunpack.c.l.b16 %v2572
    %v2724 = vunpack.c.l.b16 %v2573
    %v2725 = vunpack.c.l.b16 %v2574
    %v2726 = vunpack.c.l.b16 %v2575
    %v2727 = vunpack.c.l.b16 %v2576
    %v2728 = vunpack.c.l.b16 %v2577
    %v2729 = vunpack.c.l.b16 %v2578
    %v2730 = vunpack.c.l.b16 %v2579
    %v2731 = vunpack.c.l.b16 %v2580
    %v2732 = vunpack.c.l.b16 %v2581
    %v2733 = vunpack.c.l.b16 %v2582
    %v2734 = vunpack.c.l.b16 %v2583
    %v2735 = vunpack.c.l.b16 %v2584
    %v2736 = vunpack.c.l.b16 %v2585
    %v2737 = vunpack.c.l.b16 %v2586
    %v2738 = vunpack.c.l.b16 %v2587
    %v2739 = vunpack.c.l.b16 %v2588
    %v2740 = vunpack.c.l.b16 %v2589
    %v2741 = vunpack.c.l.b16 %v2590
    %v2742 = vunpack.c.l.b16 %v2591
    %v2743 = vunpack.c.l.b16 %v2592
    %v2744 = vunpack.c.l.b16 %v2593
    %v2745 = vunpack.c.l.b16 %v2594
    %v2746 = vunpack.c.l.b16 %v2595
    %v2747 = vunpack.c.l.b16 %v2596
    %v2748 = vunpack.c.l.b16 %v2597
    %v2749 = vunpack.c.l.b16 %v2598
    %v2750 = vunpack.c.l.b16 %v2599
    %v2751 = vunpack.c.l.b16 %v2600
    %v2752 = vunpack.c.l.b16 %v2601
    %v2753 = vunpack.c.l.b16 %v2602
    %v2754 = vunpack.c.l.b16 %v2603
    %v2755 = vunpack.c.l.b16 %v2604
    %v2756 = vunpack.c.l.b16 %v2605
    %v2757 = vunpack.c.l.b16 %v2606
    %v2758 = vunpack.c.l.b16 %v2607
    %v2759 = vunpack.c.l.b16 %v2608
    %v2760 = vunpack.c.l.b16 %v2609
    %v2761 = vunpack.c.l.b16 %v2610
    %v2762 = vunpack.c.l.b16 %v2611
    %v2763 = vunpack.c.l.b16 %v2612
    %v2764 = vunpack.c.l.b16 %v2613
    %v2765 = vunpack.c.l.b16 %v2614
    %v2766 = vunpack.c.l.b16 %v2615
    %v2767 = vpack.c.b16 %v2696, %v2695
    %v2768 = vpack.c.b16 %v2698, %v2697
    %v2769 = vpack.c.b16 %v2700, %v2699
    %v2770 = vpack.c.b16 %v2702, %v2701
    %v2771 = vpack.c.b16 %v2704, %v2703
    %v2772 = vpack.c.b16 %v2706, %v2705
    %v2773 = vpack.c.b16 %v2708, %v2707
    %v2774 = vpack.c.b16 %v2710, %v2709
    %v2775 = vpack.c.b16 %v2712, %v2711
    %v2776 = vpack.c.b16 %v2714, %v2713
    %v2777 = vpack.c.b16 %v2716, %v2715
    %v2778 = vpack.c.b16 %v2718, %v2717
    %v2779 = vpack.c.b16 %v2720, %v2719
    %v2780 = vpack.c.b16 %v2722, %v2721
    %v2781 = vpack.c.b16 %v2724, %v2723
    %v2782 = vpack.c.b16 %v2726, %v2725
    %v2783 = vpack.c.b16 %v2728, %v2727
    %v2784 = vpack.c.b16 %v2730, %v2729
    %v2785 = vpack.c.b16 %v2732, %v2731
    %v2786 = vpack.c.b16 %v2734, %v2733
    %v2787 = vpack.c.b16 %v2736, %v2735
    %v2788 = vpack.c.b16 %v2738, %v2737
    %v2789 = vpack.c.b16 %v2740, %v2739
    %v2790 = vpack.c.b16 %v2742, %v2741
    %v2791 = vpack.c.b16 %v2744, %v2743
    %v2792 = vpack.c.b16 %v2746, %v2745
    %v2793 = vpack.c.b16 %v2748, %v2747
    %v2794 = vpack.c.b16 %v2750, %v2749
    %v2795 = vpack.c.b16 %v2752, %v2751
    %v2796 = vpack.c.b16 %v2754, %v2753
    %v2797 = vpack.c.b16 %v2756, %v2755
    %v2798 = vpack.c.b16 %v2758, %v2757
    %v2799 = vpack.c.b16 %v2760, %v2759
    %v2800 = vpack.c.b16 %v2762, %v2761
    %v2801 = vpack.c.b16 %v2764, %v2763
    %v2802 = vpack.c.b16 %v2766, %v2765
    %v2840 = vsel %vm1054, %v2468, 0
    %v2843 = vsel %vm1054, %v2473, 0
    %v2846 = vsel %vm1054, %v2478, 0
    %v2849 = vsel %vm1054, %v2483, 0
    %v2852 = vsel %vm1054, %v2488, 0
    %v2855 = vsel %vm1054, %v2493, 0
    %v2858 = vsel %vm1054, %v2498, 0
    %v2861 = vsel %vm1054, %v2503, 0
    %v2864 = vsel %vm1054, %v2508, 0
    %v2867 = vsel %vm1054, %v2513, 0
    %v2870 = vsel %vm1054, %v2518, 0
    %v2873 = vsel %vm1054, %v2523, 0
    %v2876 = vsel %vm1054, %v2528, 0
    %v2879 = vsel %vm1054, %v2533, 0
    %v2882 = vsel %vm1054, %v2538, 0
    %v2885 = vsel %vm1054, %v2543, 0
    %2887 = vmatprep.subr.bf16.mxu0 0
    %2888 = vmatpush1.bf16.msra.mxu0 %v2767
    %2889 = vmatprep.subr.bf16.mxu0 0
    %2890 = vmatpush1.bf16.msra.mxu0 %v2768
    %2891 = vmatprep.subr.bf16.mxu0 0
    %2892 = vmatpush1.bf16.msra.mxu0 %v2769
    %2893 = vmatprep.subr.bf16.mxu0 0
    %2894 = vmatpush1.bf16.msra.mxu0 %v2770
    %2895 = vmatprep.subr.bf16.mxu0 0
    %2896 = vmatpush1.bf16.msra.mxu0 %v2771
    %2897 = vmatprep.subr.bf16.mxu0 0
    %2898 = vmatpush1.bf16.msra.mxu0 %v2772
    %2899 = vmatprep.subr.bf16.mxu0 0
    %2900 = vmatpush1.bf16.msra.mxu0 %v2773
    %2901 = vmatprep.subr.bf16.mxu0 0
    %2902 = vmatpush1.bf16.msra.mxu0 %v2774
    %2903 = vmatprep.subr.bf16.mxu0 0
    %2904 = vmatpush1.bf16.msra.mxu0 %v2775
    %2905 = vmatprep.subr.bf16.mxu0 0
    %2906 = vmatpush1.bf16.msra.mxu0 %v2776
    %2907 = vmatprep.subr.bf16.mxu0 0
    %2908 = vmatpush1.bf16.msra.mxu0 %v2777
    %2909 = vmatprep.subr.bf16.mxu0 0
    %2910 = vmatpush1.bf16.msra.mxu0 %v2778
    %2911 = vmatprep.subr.bf16.mxu0 0
    %2912 = vmatpush1.bf16.msra.mxu0 %v2779
    %2913 = vmatprep.subr.bf16.mxu0 0
    %2914 = vmatpush1.bf16.msra.mxu0 %v2780
    %2915 = vmatprep.subr.bf16.mxu0 0
    %2916 = vmatpush1.bf16.msra.mxu0 %v2781
    %2917 = vmatprep.subr.bf16.mxu0 0
    %2918 = vmatpush1.bf16.msra.mxu0 %v2782
    %2919 = vmatprep.mubr.bf16.mxu0 %v2465
    %2920 = vmatmul.mubr.bf16.gmra.mrb[0].mxu0 %v2464
    %v2921 = vpop.f32.mrb[0].mxu0
    %v2922 = vadd.f32 %v2621, %v2921
    %v2923 = vpop.f32.mrb[0].mxu0
    %v2924 = vpop.f32.mrb[0].mxu0
    %v2925 = vadd.f32 %v2621, %v2924
    %v2926 = vpop.f32.mrb[0].mxu0
    %2927 = vmatprep.mubr.bf16.mxu0 %v2470
    %2928 = vmatmul.mubr.bf16.gmra.mrb[0].mxu0 %v2469
    %v2929 = vpop.f32.mrb[0].mxu0
    %v2930 = vadd.f32 %v2621, %v2929
    %v2931 = vpop.f32.mrb[0].mxu0
    %v2932 = vpop.f32.mrb[0].mxu0
    %v2933 = vadd.f32 %v2621, %v2932
    %v2934 = vpop.f32.mrb[0].mxu0
    %2935 = vmatprep.mubr.bf16.mxu0 %v2475
    %2936 = vmatmul.mubr.bf16.gmra.mrb[0].mxu0 %v2474
    %v2937 = vpop.f32.mrb[0].mxu0
    %v2938 = vadd.f32 %v2621, %v2937
    %v2939 = vpop.f32.mrb[0].mxu0
    %v2940 = vpop.f32.mrb[0].mxu0
    %v2941 = vadd.f32 %v2621, %v2940
    %v2942 = vpop.f32.mrb[0].mxu0
    %2943 = vmatprep.mubr.bf16.mxu0 %v2480
    %2944 = vmatmul.mubr.bf16.gmra.mrb[0].mxu0 %v2479
    %v2945 = vpop.f32.mrb[0].mxu0
    %v2946 = vadd.f32 %v2621, %v2945
    %v2947 = vpop.f32.mrb[0].mxu0
    %v2948 = vpop.f32.mrb[0].mxu0
    %v2949 = vadd.f32 %v2621, %v2948
    %v2950 = vpop.f32.mrb[0].mxu0
    %2951 = vmatprep.mubr.bf16.mxu0 %v2485
    %2952 = vmatmul.mubr.bf16.gmra.mrb[0].mxu0 %v2484
    %v2953 = vpop.f32.mrb[0].mxu0
    %v2954 = vadd.f32 %v2621, %v2953
    %v2955 = vpop.f32.mrb[0].mxu0
    %v2956 = vpop.f32.mrb[0].mxu0
    %v2957 = vadd.f32 %v2621, %v2956
    %v2958 = vpop.f32.mrb[0].mxu0
    %2959 = vmatprep.mubr.bf16.mxu0 %v2490
    %2960 = vmatmul.mubr.bf16.gmra.mrb[0].mxu0 %v2489
    %v2961 = vpop.f32.mrb[0].mxu0
    %v2962 = vadd.f32 %v2621, %v2961
    %v2963 = vpop.f32.mrb[0].mxu0
    %v2964 = vpop.f32.mrb[0].mxu0
    %v2965 = vadd.f32 %v2621, %v2964
    %v2966 = vpop.f32.mrb[0].mxu0
    %2967 = vmatprep.mubr.bf16.mxu0 %v2495
    %2968 = vmatmul.mubr.bf16.gmra.mrb[0].mxu0 %v2494
    %v2969 = vpop.f32.mrb[0].mxu0
    %v2970 = vadd.f32 %v2621, %v2969
    %v2971 = vpop.f32.mrb[0].mxu0
    %v2972 = vpop.f32.mrb[0].mxu0
    %v2973 = vadd.f32 %v2621, %v2972
    %v2974 = vpop.f32.mrb[0].mxu0
    %2975 = vmatprep.mubr.bf16.mxu0 %v2500
    %2976 = vmatmul.mubr.bf16.gmra.mrb[0].mxu0 %v2499
    %v2977 = vpop.f32.mrb[0].mxu0
    %v2978 = vadd.f32 %v2621, %v2977
    %v2979 = vpop.f32.mrb[0].mxu0
    %v2980 = vpop.f32.mrb[0].mxu0
    %v2981 = vadd.f32 %v2621, %v2980
    %v2982 = vpop.f32.mrb[0].mxu0
    %2983 = vmatprep.mubr.bf16.mxu0 %v2505
    %2984 = vmatmul.mubr.bf16.gmra.mrb[0].mxu0 %v2504
    %v2985 = vpop.f32.mrb[0].mxu0
    %v2986 = vadd.f32 %v2621, %v2985
    %v2987 = vpop.f32.mrb[0].mxu0
    %v2988 = vpop.f32.mrb[0].mxu0
    %v2989 = vadd.f32 %v2621, %v2988
    %v2990 = vpop.f32.mrb[0].mxu0
    %2991 = vmatprep.mubr.bf16.mxu0 %v2510
    %2992 = vmatmul.mubr.bf16.gmra.mrb[0].mxu0 %v2509
    %v2993 = vpop.f32.mrb[0].mxu0
    %v2994 = vadd.f32 %v2621, %v2993
    %v2995 = vpop.f32.mrb[0].mxu0
    %v2996 = vpop.f32.mrb[0].mxu0
    %v2997 = vadd.f32 %v2621, %v2996
    %v2998 = vpop.f32.mrb[0].mxu0
    %2999 = vmatprep.mubr.bf16.mxu0 %v2515
    %3000 = vmatmul.mubr.bf16.gmra.mrb[0].mxu0 %v2514
    %v3001 = vpop.f32.mrb[0].mxu0
    %v3002 = vadd.f32 %v2621, %v3001
    %v3003 = vpop.f32.mrb[0].mxu0
    %v3004 = vpop.f32.mrb[0].mxu0
    %v3005 = vadd.f32 %v2621, %v3004
    %v3006 = vpop.f32.mrb[0].mxu0
    %3007 = vmatprep.mubr.bf16.mxu0 %v2520
    %3008 = vmatmul.mubr.bf16.gmra.mrb[0].mxu0 %v2519
    %v3009 = vpop.f32.mrb[0].mxu0
    %v3010 = vadd.f32 %v2621, %v3009
    %v3011 = vpop.f32.mrb[0].mxu0
    %v3012 = vpop.f32.mrb[0].mxu0
    %v3013 = vadd.f32 %v2621, %v3012
    %v3014 = vpop.f32.mrb[0].mxu0
    %3015 = vmatprep.mubr.bf16.mxu0 %v2525
    %3016 = vmatmul.mubr.bf16.gmra.mrb[0].mxu0 %v2524
    %v3017 = vpop.f32.mrb[0].mxu0
    %v3018 = vadd.f32 %v2621, %v3017
    %v3019 = vpop.f32.mrb[0].mxu0
    %v3020 = vpop.f32.mrb[0].mxu0
    %v3021 = vadd.f32 %v2621, %v3020
    %v3022 = vpop.f32.mrb[0].mxu0
    %3023 = vmatprep.mubr.bf16.mxu0 %v2530
    %3024 = vmatmul.mubr.bf16.gmra.mrb[0].mxu0 %v2529
    %v3025 = vpop.f32.mrb[0].mxu0
    %v3026 = vadd.f32 %v2621, %v3025
    %v3027 = vpop.f32.mrb[0].mxu0
    %v3028 = vpop.f32.mrb[0].mxu0
    %v3029 = vadd.f32 %v2621, %v3028
    %v3030 = vpop.f32.mrb[0].mxu0
    %3031 = vmatprep.mubr.bf16.mxu0 %v2535
    %3032 = vmatmul.mubr.bf16.gmra.mrb[0].mxu0 %v2534
    %v3033 = vpop.f32.mrb[0].mxu0
    %v3034 = vadd.f32 %v2621, %v3033
    %v3035 = vpop.f32.mrb[0].mxu0
    %v3036 = vpop.f32.mrb[0].mxu0
    %v3037 = vadd.f32 %v2621, %v3036
    %v3038 = vpop.f32.mrb[0].mxu0
    %3039 = vmatprep.mubr.bf16.mxu0 %v2540
    %3040 = vmatmul.mubr.bf16.gmra.mrb[0].mxu0 %v2539
    %v3041 = vpop.f32.mrb[0].mxu0
    %v3042 = vadd.f32 %v2621, %v3041
    %v3043 = vpop.f32.mrb[0].mxu0
    %v3044 = vpop.f32.mrb[0].mxu0
    %v3045 = vadd.f32 %v2621, %v3044
    %v3046 = vpop.f32.mrb[0].mxu0
    %3047 = vdwg.mxu0
    %3048 = vmatprep.subr.bf16.mxu0 0
    %3049 = vmatpush1.bf16.msra.mxu0 %v2783
    %3050 = vmatprep.subr.bf16.mxu0 0
    %3051 = vmatpush1.bf16.msra.mxu0 %v2784
    %3052 = vmatprep.subr.bf16.mxu0 0
    %3053 = vmatpush1.bf16.msra.mxu0 %v2785
    %3054 = vmatprep.subr.bf16.mxu0 0
    %3055 = vmatpush1.bf16.msra.mxu0 %v2786
    %3056 = vmatprep.subr.bf16.mxu0 0
    %3057 = vmatpush1.bf16.msra.mxu0 %v2787
    %3058 = vmatprep.subr.bf16.mxu0 0
    %3059 = vmatpush1.bf16.msra.mxu0 %v2788
    %3060 = vmatprep.subr.bf16.mxu0 0
    %3061 = vmatpush1.bf16.msra.mxu0 %v2789
    %3062 = vmatprep.subr.bf16.mxu0 0
    %3063 = vmatpush1.bf16.msra.mxu0 %v2790
    %3064 = vmatprep.subr.bf16.mxu0 0
    %3065 = vmatpush1.bf16.msra.mxu0 %v2791
    %3066 = vmatprep.subr.bf16.mxu0 0
    %3067 = vmatpush1.bf16.msra.mxu0 %v2792
    %3068 = vmatprep.subr.bf16.mxu0 0
    %3069 = vmatpush1.bf16.msra.mxu0 %v2793
    %3070 = vmatprep.subr.bf16.mxu0 0
    %3071 = vmatpush1.bf16.msra.mxu0 %v2794
    %3072 = vmatprep.subr.bf16.mxu0 0
    %3073 = vmatpush1.bf16.msra.mxu0 %v2795
    %3074 = vmatprep.subr.bf16.mxu0 0
    %3075 = vmatpush1.bf16.msra.mxu0 %v2796
    %3076 = vmatprep.subr.bf16.mxu0 0
    %3077 = vmatpush1.bf16.msra.mxu0 %v2797
    %3078 = vmatprep.subr.bf16.mxu0 0
    %3079 = vmatpush1.bf16.msra.mxu0 %v2798
    %3080 = vmatprep.mubr.bf16.mxu0 %v2467
    %3081 = vmatmul.mubr.bf16.gmra.mrb[0].mxu0 %v2466
    %v3082 = vpop.f32.mrb[0].mxu0
    %v3083 = vadd.f32 %v2922, %v3082
    %v3084 = vpop.f32.mrb[0].mxu0
    %v3085 = vpop.f32.mrb[0].mxu0
    %v3086 = vadd.f32 %v2925, %v3085
    %v3087 = vpop.f32.mrb[0].mxu0
    %3088 = vmatprep.mubr.bf16.mxu0 %v2472
    %3089 = vmatmul.mubr.bf16.gmra.mrb[0].mxu0 %v2471
    %v3090 = vpop.f32.mrb[0].mxu0
    %v3091 = vadd.f32 %v2930, %v3090
    %v3092 = vpop.f32.mrb[0].mxu0
    %v3093 = vpop.f32.mrb[0].mxu0
    %v3094 = vadd.f32 %v2933, %v3093
    %v3095 = vpop.f32.mrb[0].mxu0
    %3096 = vmatprep.mubr.bf16.mxu0 %v2477
    %3097 = vmatmul.mubr.bf16.gmra.mrb[0].mxu0 %v2476
    %v3098 = vpop.f32.mrb[0].mxu0
    %v3099 = vadd.f32 %v2938, %v3098
    %v3100 = vpop.f32.mrb[0].mxu0
    %v3101 = vpop.f32.mrb[0].mxu0
    %v3102 = vadd.f32 %v2941, %v3101
    %v3103 = vpop.f32.mrb[0].mxu0
    %3104 = vmatprep.mubr.bf16.mxu0 %v2482
    %3105 = vmatmul.mubr.bf16.gmra.mrb[0].mxu0 %v2481
    %v3106 = vpop.f32.mrb[0].mxu0
    %v3107 = vadd.f32 %v2946, %v3106
    %v3108 = vpop.f32.mrb[0].mxu0
    %v3109 = vpop.f32.mrb[0].mxu0
    %v3110 = vadd.f32 %v2949, %v3109
    %v3111 = vpop.f32.mrb[0].mxu0
    %3112 = vmatprep.mubr.bf16.mxu0 %v2487
    %3113 = vmatmul.mubr.bf16.gmra.mrb[0].mxu0 %v2486
    %v3114 = vpop.f32.mrb[0].mxu0
    %v3115 = vadd.f32 %v2954, %v3114
    %v3116 = vpop.f32.mrb[0].mxu0
    %v3117 = vpop.f32.mrb[0].mxu0
    %v3118 = vadd.f32 %v2957, %v3117
    %v3119 = vpop.f32.mrb[0].mxu0
    %3120 = vmatprep.mubr.bf16.mxu0 %v2492
    %3121 = vmatmul.mubr.bf16.gmra.mrb[0].mxu0 %v2491
    %v3122 = vpop.f32.mrb[0].mxu0
    %v3123 = vadd.f32 %v2962, %v3122
    %v3124 = vpop.f32.mrb[0].mxu0
    %v3125 = vpop.f32.mrb[0].mxu0
    %v3126 = vadd.f32 %v2965, %v3125
    %v3127 = vpop.f32.mrb[0].mxu0
    %3128 = vmatprep.mubr.bf16.mxu0 %v2497
    %3129 = vmatmul.mubr.bf16.gmra.mrb[0].mxu0 %v2496
    %v3130 = vpop.f32.mrb[0].mxu0
    %v3131 = vadd.f32 %v2970, %v3130
    %v3132 = vpop.f32.mrb[0].mxu0
    %v3133 = vpop.f32.mrb[0].mxu0
    %v3134 = vadd.f32 %v2973, %v3133
    %v3135 = vpop.f32.mrb[0].mxu0
    %3136 = vmatprep.mubr.bf16.mxu0 %v2502
    %3137 = vmatmul.mubr.bf16.gmra.mrb[0].mxu0 %v2501
    %v3138 = vpop.f32.mrb[0].mxu0
    %v3139 = vadd.f32 %v2978, %v3138
    %v3140 = vpop.f32.mrb[0].mxu0
    %v3141 = vpop.f32.mrb[0].mxu0
    %v3142 = vadd.f32 %v2981, %v3141
    %v3143 = vpop.f32.mrb[0].mxu0
    %3144 = vmatprep.mubr.bf16.mxu0 %v2507
    %3145 = vmatmul.mubr.bf16.gmra.mrb[0].mxu0 %v2506
    %v3146 = vpop.f32.mrb[0].mxu0
    %v3147 = vadd.f32 %v2986, %v3146
    %v3148 = vpop.f32.mrb[0].mxu0
    %v3149 = vpop.f32.mrb[0].mxu0
    %v3150 = vadd.f32 %v2989, %v3149
    %v3151 = vpop.f32.mrb[0].mxu0
    %3152 = vmatprep.mubr.bf16.mxu0 %v2512
    %3153 = vmatmul.mubr.bf16.gmra.mrb[0].mxu0 %v2511
    %v3154 = vpop.f32.mrb[0].mxu0
    %v3155 = vadd.f32 %v2994, %v3154
    %v3156 = vpop.f32.mrb[0].mxu0
    %v3157 = vpop.f32.mrb[0].mxu0
    %v3158 = vadd.f32 %v2997, %v3157
    %v3159 = vpop.f32.mrb[0].mxu0
    %3160 = vmatprep.mubr.bf16.mxu0 %v2517
    %3161 = vmatmul.mubr.bf16.gmra.mrb[0].mxu0 %v2516
    %v3162 = vpop.f32.mrb[0].mxu0
    %v3163 = vadd.f32 %v3002, %v3162
    %v3164 = vpop.f32.mrb[0].mxu0
    %v3165 = vpop.f32.mrb[0].mxu0
    %v3166 = vadd.f32 %v3005, %v3165
    %v3167 = vpop.f32.mrb[0].mxu0
    %3168 = vmatprep.mubr.bf16.mxu0 %v2522
    %3169 = vmatmul.mubr.bf16.gmra.mrb[0].mxu0 %v2521
    %v3170 = vpop.f32.mrb[0].mxu0
    %v3171 = vadd.f32 %v3010, %v3170
    %v3172 = vpop.f32.mrb[0].mxu0
    %v3173 = vpop.f32.mrb[0].mxu0
    %v3174 = vadd.f32 %v3013, %v3173
    %v3175 = vpop.f32.mrb[0].mxu0
    %3176 = vmatprep.mubr.bf16.mxu0 %v2527
    %3177 = vmatmul.mubr.bf16.gmra.mrb[0].mxu0 %v2526
    %v3178 = vpop.f32.mrb[0].mxu0
    %v3179 = vadd.f32 %v3018, %v3178
    %v3180 = vpop.f32.mrb[0].mxu0
    %v3181 = vpop.f32.mrb[0].mxu0
    %v3182 = vadd.f32 %v3021, %v3181
    %v3183 = vpop.f32.mrb[0].mxu0
    %3184 = vmatprep.mubr.bf16.mxu0 %v2532
    %3185 = vmatmul.mubr.bf16.gmra.mrb[0].mxu0 %v2531
    %v3186 = vpop.f32.mrb[0].mxu0
    %v3187 = vadd.f32 %v3026, %v3186
    %v3188 = vpop.f32.mrb[0].mxu0
    %v3189 = vpop.f32.mrb[0].mxu0
    %v3190 = vadd.f32 %v3029, %v3189
    %v3191 = vpop.f32.mrb[0].mxu0
    %3192 = vmatprep.mubr.bf16.mxu0 %v2537
    %3193 = vmatmul.mubr.bf16.gmra.mrb[0].mxu0 %v2536
    %v3194 = vpop.f32.mrb[0].mxu0
    %v3195 = vadd.f32 %v3034, %v3194
    %v3196 = vpop.f32.mrb[0].mxu0
    %v3197 = vpop.f32.mrb[0].mxu0
    %v3198 = vadd.f32 %v3037, %v3197
    %v3199 = vpop.f32.mrb[0].mxu0
    %3200 = vmatprep.mubr.bf16.mxu0 %v2542
    %3201 = vmatmul.mubr.bf16.gmra.mrb[0].mxu0 %v2541
    %v3202 = vpop.f32.mrb[0].mxu0
    %v3203 = vadd.f32 %v3042, %v3202
    %v3204 = vpop.f32.mrb[0].mxu0
    %v3205 = vpop.f32.mrb[0].mxu0
    %v3206 = vadd.f32 %v3045, %v3205
    %v3207 = vpop.f32.mrb[0].mxu0
    %3208 = vdwg.mxu0
    %3209 = vmatprep.subr.bf16.mxu0 0
    %3210 = vmatpush1.bf16.msra.mxu0 %v2799
    %3211 = vmatprep.subr.bf16.mxu0 0
    %3212 = vmatpush1.bf16.msra.mxu0 %v2800
    %3213 = vmatprep.subr.bf16.mxu0 0
    %3214 = vmatpush1.bf16.msra.mxu0 %v2801
    %3215 = vmatprep.subr.bf16.mxu0 0
    %3216 = vmatpush1.bf16.msra.mxu0 %v2802
    %3217 = vmatprep.subr.bf16.mxu0 0
    %3218 = vmatpush1.bf16.msra.mxu0 0
    %3219 = vmatprep.subr.bf16.mxu0 0
    %3220 = vmatpush1.bf16.msra.mxu0 0
    %3221 = vmatprep.subr.bf16.mxu0 0
    %3222 = vmatpush1.bf16.msra.mxu0 0
    %3223 = vmatprep.subr.bf16.mxu0 0
    %3224 = vmatpush1.bf16.msra.mxu0 0
    %3225 = vmatprep.subr.bf16.mxu0 0
    %3226 = vmatpush1.bf16.msra.mxu0 0
    %3227 = vmatprep.subr.bf16.mxu0 0
    %3228 = vmatpush1.bf16.msra.mxu0 0
    %3229 = vmatprep.subr.bf16.mxu0 0
    %3230 = vmatpush1.bf16.msra.mxu0 0
    %3231 = vmatprep.subr.bf16.mxu0 0
    %3232 = vmatpush1.bf16.msra.mxu0 0
    %3233 = vmatprep.subr.bf16.mxu0 0
    %3234 = vmatpush1.bf16.msra.mxu0 0
    %3235 = vmatprep.subr.bf16.mxu0 0
    %3236 = vmatpush1.bf16.msra.mxu0 0
    %3237 = vmatprep.subr.bf16.mxu0 0
    %3238 = vmatpush1.bf16.msra.mxu0 0
    %3239 = vmatprep.subr.bf16.mxu0 0
    %3240 = vmatpush1.bf16.msra.mxu0 0
    %3241 = vmatprep.mubr.bf16.mxu0 0
    %3242 = vmatmul.mubr.bf16.gmra.mrb[0].mxu0 %v2840
    %v3243 = vpop.f32.mrb[0].mxu0
    %v3244 = vadd.f32 %v3083, %v3243
    %v3245 = vpop.f32.mrb[0].mxu0
    %v3246 = vpop.f32.mrb[0].mxu0
    %v3247 = vadd.f32 %v3086, %v3246
    %v3248 = vpop.f32.mrb[0].mxu0
    %3249 = vmatprep.mubr.bf16.mxu0 0
    %3250 = vmatmul.mubr.bf16.gmra.mrb[0].mxu0 %v2843
    %v3251 = vpop.f32.mrb[0].mxu0
    %v3252 = vadd.f32 %v3091, %v3251
    %v3253 = vpop.f32.mrb[0].mxu0
    %v3254 = vpop.f32.mrb[0].mxu0
    %v3255 = vadd.f32 %v3094, %v3254
    %v3256 = vpop.f32.mrb[0].mxu0
    %3257 = vmatprep.mubr.bf16.mxu0 0
    %3258 = vmatmul.mubr.bf16.gmra.mrb[0].mxu0 %v2846
    %v3259 = vpop.f32.mrb[0].mxu0
    %v3260 = vadd.f32 %v3099, %v3259
    %v3261 = vpop.f32.mrb[0].mxu0
    %v3262 = vpop.f32.mrb[0].mxu0
    %v3263 = vadd.f32 %v3102, %v3262
    %v3264 = vpop.f32.mrb[0].mxu0
    %3265 = vmatprep.mubr.bf16.mxu0 0
    %3266 = vmatmul.mubr.bf16.gmra.mrb[0].mxu0 %v2849
    %v3267 = vpop.f32.mrb[0].mxu0
    %v3268 = vadd.f32 %v3107, %v3267
    %v3269 = vpop.f32.mrb[0].mxu0
    %v3270 = vpop.f32.mrb[0].mxu0
    %v3271 = vadd.f32 %v3110, %v3270
    %v3272 = vpop.f32.mrb[0].mxu0
    %3273 = vmatprep.mubr.bf16.mxu0 0
    %3274 = vmatmul.mubr.bf16.gmra.mrb[0].mxu0 %v2852
    %v3275 = vpop.f32.mrb[0].mxu0
    %v3276 = vadd.f32 %v3115, %v3275
    %v3277 = vpop.f32.mrb[0].mxu0
    %v3278 = vpop.f32.mrb[0].mxu0
    %v3279 = vadd.f32 %v3118, %v3278
    %v3280 = vpop.f32.mrb[0].mxu0
    %3281 = vmatprep.mubr.bf16.mxu0 0
    %3282 = vmatmul.mubr.bf16.gmra.mrb[0].mxu0 %v2855
    %v3283 = vpop.f32.mrb[0].mxu0
    %v3284 = vadd.f32 %v3123, %v3283
    %v3285 = vpop.f32.mrb[0].mxu0
    %v3286 = vpop.f32.mrb[0].mxu0
    %v3287 = vadd.f32 %v3126, %v3286
    %v3288 = vpop.f32.mrb[0].mxu0
    %3289 = vmatprep.mubr.bf16.mxu0 0
    %3290 = vmatmul.mubr.bf16.gmra.mrb[0].mxu0 %v2858
    %v3291 = vpop.f32.mrb[0].mxu0
    %v3292 = vadd.f32 %v3131, %v3291
    %v3293 = vpop.f32.mrb[0].mxu0
    %v3294 = vpop.f32.mrb[0].mxu0
    %v3295 = vadd.f32 %v3134, %v3294
    %v3296 = vpop.f32.mrb[0].mxu0
    %3297 = vmatprep.mubr.bf16.mxu0 0
    %3298 = vmatmul.mubr.bf16.gmra.mrb[0].mxu0 %v2861
    %v3299 = vpop.f32.mrb[0].mxu0
    %v3300 = vadd.f32 %v3139, %v3299
    %v3301 = vpop.f32.mrb[0].mxu0
    %v3302 = vpop.f32.mrb[0].mxu0
    %v3303 = vadd.f32 %v3142, %v3302
    %v3304 = vpop.f32.mrb[0].mxu0
    %3305 = vmatprep.mubr.bf16.mxu0 0
    %3306 = vmatmul.mubr.bf16.gmra.mrb[0].mxu0 %v2864
    %v3307 = vpop.f32.mrb[0].mxu0
    %v3308 = vadd.f32 %v3147, %v3307
    %v3309 = vpop.f32.mrb[0].mxu0
    %v3310 = vpop.f32.mrb[0].mxu0
    %v3311 = vadd.f32 %v3150, %v3310
    %v3312 = vpop.f32.mrb[0].mxu0
    %3313 = vmatprep.mubr.bf16.mxu0 0
    %3314 = vmatmul.mubr.bf16.gmra.mrb[0].mxu0 %v2867
    %v3315 = vpop.f32.mrb[0].mxu0
    %v3316 = vadd.f32 %v3155, %v3315
    %v3317 = vpop.f32.mrb[0].mxu0
    %v3318 = vpop.f32.mrb[0].mxu0
    %v3319 = vadd.f32 %v3158, %v3318
    %v3320 = vpop.f32.mrb[0].mxu0
    %3321 = vmatprep.mubr.bf16.mxu0 0
    %3322 = vmatmul.mubr.bf16.gmra.mrb[0].mxu0 %v2870
    %v3323 = vpop.f32.mrb[0].mxu0
    %v3324 = vadd.f32 %v3163, %v3323
    %v3325 = vpop.f32.mrb[0].mxu0
    %v3326 = vpop.f32.mrb[0].mxu0
    %v3327 = vadd.f32 %v3166, %v3326
    %v3328 = vpop.f32.mrb[0].mxu0
    %3329 = vmatprep.mubr.bf16.mxu0 0
    %3330 = vmatmul.mubr.bf16.gmra.mrb[0].mxu0 %v2873
    %v3331 = vpop.f32.mrb[0].mxu0
    %v3332 = vadd.f32 %v3171, %v3331
    %v3333 = vpop.f32.mrb[0].mxu0
    %v3334 = vpop.f32.mrb[0].mxu0
    %v3335 = vadd.f32 %v3174, %v3334
    %v3336 = vpop.f32.mrb[0].mxu0
    %3337 = vmatprep.mubr.bf16.mxu0 0
    %3338 = vmatmul.mubr.bf16.gmra.mrb[0].mxu0 %v2876
    %v3339 = vpop.f32.mrb[0].mxu0
    %v3340 = vadd.f32 %v3179, %v3339
    %v3341 = vpop.f32.mrb[0].mxu0
    %v3342 = vpop.f32.mrb[0].mxu0
    %v3343 = vadd.f32 %v3182, %v3342
    %v3344 = vpop.f32.mrb[0].mxu0
    %3345 = vmatprep.mubr.bf16.mxu0 0
    %3346 = vmatmul.mubr.bf16.gmra.mrb[0].mxu0 %v2879
    %v3347 = vpop.f32.mrb[0].mxu0
    %v3348 = vadd.f32 %v3187, %v3347
    %v3349 = vpop.f32.mrb[0].mxu0
    %v3350 = vpop.f32.mrb[0].mxu0
    %v3351 = vadd.f32 %v3190, %v3350
    %v3352 = vpop.f32.mrb[0].mxu0
    %3353 = vmatprep.mubr.bf16.mxu0 0
    %3354 = vmatmul.mubr.bf16.gmra.mrb[0].mxu0 %v2882
    %v3355 = vpop.f32.mrb[0].mxu0
    %v3356 = vadd.f32 %v3195, %v3355
    %v3357 = vpop.f32.mrb[0].mxu0
    %v3358 = vpop.f32.mrb[0].mxu0
    %v3359 = vadd.f32 %v3198, %v3358
    %v3360 = vpop.f32.mrb[0].mxu0
    %3361 = vmatprep.mubr.bf16.mxu0 0
    %3362 = vmatmul.mubr.bf16.gmra.mrb[0].mxu0 %v2885
    %v3363 = vpop.f32.mrb[0].mxu0
    %v3364 = vadd.f32 %v3203, %v3363
    %v3365 = vpop.f32.mrb[0].mxu0
    %v3366 = vpop.f32.mrb[0].mxu0
    %v3367 = vadd.f32 %v3206, %v3366
    %v3368 = vpop.f32.mrb[0].mxu0
    %3369 = vdwg.mxu0
    %vm3370 = vcmp.ge.f32.partialorder %v3244, 0.0
    %vm3371 = vcmp.ge.f32.partialorder %v3247, 0.0
    %vm3372 = vcmp.ge.f32.partialorder %v3252, 0.0
    %vm3373 = vcmp.ge.f32.partialorder %v3255, 0.0
    %vm3374 = vcmp.ge.f32.partialorder %v3260, 0.0
    %vm3375 = vcmp.ge.f32.partialorder %v3263, 0.0
    %vm3376 = vcmp.ge.f32.partialorder %v3268, 0.0
    %vm3377 = vcmp.ge.f32.partialorder %v3271, 0.0
    %vm3378 = vcmp.ge.f32.partialorder %v3276, 0.0
    %vm3379 = vcmp.ge.f32.partialorder %v3279, 0.0
    %vm3380 = vcmp.ge.f32.partialorder %v3284, 0.0
    %vm3381 = vcmp.ge.f32.partialorder %v3287, 0.0
    %vm3382 = vcmp.ge.f32.partialorder %v3292, 0.0
    %vm3383 = vcmp.ge.f32.partialorder %v3295, 0.0
    %vm3384 = vcmp.ge.f32.partialorder %v3300, 0.0
    %vm3385 = vcmp.ge.f32.partialorder %v3303, 0.0
    %vm3386 = vcmp.ge.f32.partialorder %v3308, 0.0
    %vm3387 = vcmp.ge.f32.partialorder %v3311, 0.0
    %vm3388 = vcmp.ge.f32.partialorder %v3316, 0.0
    %vm3389 = vcmp.ge.f32.partialorder %v3319, 0.0
    %vm3390 = vcmp.ge.f32.partialorder %v3324, 0.0
    %vm3391 = vcmp.ge.f32.partialorder %v3327, 0.0
    %vm3392 = vcmp.ge.f32.partialorder %v3332, 0.0
    %vm3393 = vcmp.ge.f32.partialorder %v3335, 0.0
    %vm3394 = vcmp.ge.f32.partialorder %v3340, 0.0
    %vm3395 = vcmp.ge.f32.partialorder %v3343, 0.0
    %vm3396 = vcmp.ge.f32.partialorder %v3348, 0.0
    %vm3397 = vcmp.ge.f32.partialorder %v3351, 0.0
    %vm3398 = vcmp.ge.f32.partialorder %v3356, 0.0
    %vm3399 = vcmp.ge.f32.partialorder %v3359, 0.0
    %vm3400 = vcmp.ge.f32.partialorder %v3364, 0.0
    %vm3401 = vcmp.ge.f32.partialorder %v3367, 0.0
    %v3402 = vmul.f32 %v3244, 0.01
    %v3403 = vmul.f32 %v3247, 0.01
    %v3404 = vmul.f32 %v3252, 0.01
    %v3405 = vmul.f32 %v3255, 0.01
    %v3406 = vmul.f32 %v3260, 0.01
    %v3407 = vmul.f32 %v3263, 0.01
    %v3408 = vmul.f32 %v3268, 0.01
    %v3409 = vmul.f32 %v3271, 0.01
    %v3410 = vmul.f32 %v3276, 0.01
    %v3411 = vmul.f32 %v3279, 0.01
    %v3412 = vmul.f32 %v3284, 0.01
    %v3413 = vmul.f32 %v3287, 0.01
    %v3414 = vmul.f32 %v3292, 0.01
    %v3415 = vmul.f32 %v3295, 0.01
    %v3416 = vmul.f32 %v3300, 0.01
    %v3417 = vmul.f32 %v3303, 0.01
    %v3418 = vmul.f32 %v3308, 0.01
    %v3419 = vmul.f32 %v3311, 0.01
    %v3420 = vmul.f32 %v3316, 0.01
    %v3421 = vmul.f32 %v3319, 0.01
    %v3422 = vmul.f32 %v3324, 0.01
    %v3423 = vmul.f32 %v3327, 0.01
    %v3424 = vmul.f32 %v3332, 0.01
    %v3425 = vmul.f32 %v3335, 0.01
    %v3426 = vmul.f32 %v3340, 0.01
    %v3427 = vmul.f32 %v3343, 0.01
    %v3428 = vmul.f32 %v3348, 0.01
    %v3429 = vmul.f32 %v3351, 0.01
    %v3430 = vmul.f32 %v3356, 0.01
    %v3431 = vmul.f32 %v3359, 0.01
    %v3432 = vmul.f32 %v3364, 0.01
    %v3433 = vmul.f32 %v3367, 0.01
    %v3434 = vsel %vm3370, %v3244, %v3402
    %v3435 = vsel %vm3371, %v3247, %v3403
    %v3436 = vsel %vm3372, %v3252, %v3404
    %v3437 = vsel %vm3373, %v3255, %v3405
    %v3438 = vsel %vm3374, %v3260, %v3406
    %v3439 = vsel %vm3375, %v3263, %v3407
    %v3440 = vsel %vm3376, %v3268, %v3408
    %v3441 = vsel %vm3377, %v3271, %v3409
    %v3442 = vsel %vm3378, %v3276, %v3410
    %v3443 = vsel %vm3379, %v3279, %v3411
    %v3444 = vsel %vm3380, %v3284, %v3412
    %v3445 = vsel %vm3381, %v3287, %v3413
    %v3446 = vsel %vm3382, %v3292, %v3414
    %v3447 = vsel %vm3383, %v3295, %v3415
    %v3448 = vsel %vm3384, %v3300, %v3416
    %v3449 = vsel %vm3385, %v3303, %v3417
    %v3450 = vsel %vm3386, %v3308, %v3418
    %v3451 = vsel %vm3387, %v3311, %v3419
    %v3452 = vsel %vm3388, %v3316, %v3420
    %v3453 = vsel %vm3389, %v3319, %v3421
    %v3454 = vsel %vm3390, %v3324, %v3422
    %v3455 = vsel %vm3391, %v3327, %v3423
    %v3456 = vsel %vm3392, %v3332, %v3424
    %v3457 = vsel %vm3393, %v3335, %v3425
    %v3458 = vsel %vm3394, %v3340, %v3426
    %v3459 = vsel %vm3395, %v3343, %v3427
    %v3460 = vsel %vm3396, %v3348, %v3428
    %v3461 = vsel %vm3397, %v3351, %v3429
    %v3462 = vsel %vm3398, %v3356, %v3430
    %v3463 = vsel %vm3399, %v3359, %v3431
    %v3464 = vsel %vm3400, %v3364, %v3432
    %v3465 = vsel %vm3401, %v3367, %v3433
    %v3466 = vpack.c.bf16 %v3435, %v3434
    %v3467 = vpack.c.bf16 %v3437, %v3436
    %v3468 = vpack.c.bf16 %v3439, %v3438
    %v3469 = vpack.c.bf16 %v3441, %v3440
    %v3470 = vpack.c.bf16 %v3443, %v3442
    %v3471 = vpack.c.bf16 %v3445, %v3444
    %v3472 = vpack.c.bf16 %v3447, %v3446
    %v3473 = vpack.c.bf16 %v3449, %v3448
    %v3474 = vpack.c.bf16 %v3451, %v3450
    %v3475 = vpack.c.bf16 %v3453, %v3452
    %v3476 = vpack.c.bf16 %v3455, %v3454
    %v3477 = vpack.c.bf16 %v3457, %v3456
    %v3478 = vpack.c.bf16 %v3459, %v3458
    %v3479 = vpack.c.bf16 %v3461, %v3460
    %v3480 = vpack.c.bf16 %v3463, %v3462
    %v3481 = vpack.c.bf16 %v3465, %v3464
    %3482 = vst.msk [vmem:[#allocation4] sm:$0xff] %vm1054, %v3466
    %3483 = vst.msk [vmem:[#allocation4 + $0x8] sm:$0xff] %vm1054, %v3467
    %3484 = vst.msk [vmem:[#allocation4 + $0x10] sm:$0xff] %vm1054, %v3468
    %3485 = vst.msk [vmem:[#allocation4 + $0x18] sm:$0xff] %vm1054, %v3469
    %3486 = vst.msk [vmem:[#allocation4 + $0x20] sm:$0xff] %vm1054, %v3470
    %3487 = vst.msk [vmem:[#allocation4 + $0x28] sm:$0xff] %vm1054, %v3471
    %3488 = vst.msk [vmem:[#allocation4 + $0x30] sm:$0xff] %vm1054, %v3472
    %3489 = vst.msk [vmem:[#allocation4 + $0x38] sm:$0xff] %vm1054, %v3473
    %3490 = vst.msk [vmem:[#allocation4 + $0x40] sm:$0xff] %vm1054, %v3474
    %3491 = vst.msk [vmem:[#allocation4 + $0x48] sm:$0xff] %vm1054, %v3475
    %3492 = vst.msk [vmem:[#allocation4 + $0x50] sm:$0xff] %vm1054, %v3476
    %3493 = vst.msk [vmem:[#allocation4 + $0x58] sm:$0xff] %vm1054, %v3477
    %3494 = vst.msk [vmem:[#allocation4 + $0x60] sm:$0xff] %vm1054, %v3478
    %3495 = vst.msk [vmem:[#allocation4 + $0x68] sm:$0xff] %vm1054, %v3479
    %3496 = vst.msk [vmem:[#allocation4 + $0x70] sm:$0xff] %vm1054, %v3480
    %3497 = vst.msk [vmem:[#allocation4 + $0x78] sm:$0xff] %vm1054, %v3481
    %v3498 = vld [vmem:[#allocation4] sm:$0x3]
    %vm3499 = vcmask 517120
    %3500 = vst.msk [vmem:[#allocation5] sm:$0x3] %vm3499, %v3498
    %v3501 = vld [vmem:[#allocation4] sm:$0xc]
    %v3504 = vunpack.c.l.s4 1983009808
    %v3505 = vunpack.c.0.s8 %v3504
    %v3506 = vlaneseq
    %v3507 = vshrl.u32 %v3506, 7
    %v3508 = vsub.s32 %v3505, %v3507
    %v3509 = vrot.slane %v3501, %v3508
    %v3510 = vcombine.high %v3509, %v3509
    %3511 = vrot.lane.b32.xlu0 %v3510, 64
    %v3512 = vpop.permute.xlu0 %3511
    %vm3514 = vcmask 1041920
    %3515 = vst.msk [vmem:[#allocation5] sm:$0x3] %vm3514, %v3512
    %v3516 = vld [vmem:[#allocation4] sm:$0x30]
    %v3518 = vcombine.high %v3516, %v3516
    %v3520 = vunpack.c.l.s4 1983009808
    %v3521 = vunpack.c.0.s8 %v3520
    %v3522 = vlaneseq
    %v3523 = vshrl.u32 %v3522, 7
    %v3524 = vsub.s32 %v3521, %v3523
    %v3525 = vrot.slane %v3518, %v3524
    %3527 = vst.msk [vmem:[#allocation5 + $0x2] sm:$0x3] %vm3499, %v3525
    %v3528 = vld [vmem:[#allocation4] sm:$0xc0]
    %v3530 = vcombine.high %v3528, %v3528
    %v3532 = vunpack.c.l.s4 1983009808
    %v3533 = vunpack.c.0.s8 %v3532
    %v3534 = vlaneseq
    %v3535 = vshrl.u32 %v3534, 7
    %v3536 = vsub.s32 %v3533, %v3535
    %v3537 = vrot.slane %v3530, %v3536
    %v3538 = vcombine.high %v3537, %v3537
    %3539 = vrot.lane.b32.xlu0 %v3538, 64
    %v3540 = vpop.permute.xlu0 %3539
    %3542 = vst.msk [vmem:[#allocation5 + $0x2] sm:$0x3] %vm3514, %v3540
    %v3543 = vld [vmem:[#allocation4 + $0x10] sm:$0x3]
    %3544 = vst.msk [vmem:[#allocation5 + $0x4] sm:$0x3] %vm3499, %v3543
    %v3545 = vld [vmem:[#allocation4 + $0x10] sm:$0xc]
    %v3548 = vunpack.c.l.s4 1983009808
    %v3549 = vunpack.c.0.s8 %v3548
    %v3550 = vlaneseq
    %v3551 = vshrl.u32 %v3550, 7
    %v3552 = vsub.s32 %v3549, %v3551
    %v3553 = vrot.slane %v3545, %v3552
    %v3554 = vcombine.high %v3553, %v3553
    %3555 = vrot.lane.b32.xlu0 %v3554, 64
    %v3556 = vpop.permute.xlu0 %3555
    %3558 = vst.msk [vmem:[#allocation5 + $0x4] sm:$0x3] %vm3514, %v3556
    %v3559 = vld [vmem:[#allocation4 + $0x10] sm:$0x30]
    %v3561 = vcombine.high %v3559, %v3559
    %v3563 = vunpack.c.l.s4 1983009808
    %v3564 = vunpack.c.0.s8 %v3563
    %v3565 = vlaneseq
    %v3566 = vshrl.u32 %v3565, 7
    %v3567 = vsub.s32 %v3564, %v3566
    %v3568 = vrot.slane %v3561, %v3567
    %3570 = vst.msk [vmem:[#allocation5 + $0x6] sm:$0x3] %vm3499, %v3568
    %v3571 = vld [vmem:[#allocation4 + $0x10] sm:$0xc0]
    %v3573 = vcombine.high %v3571, %v3571
    %v3575 = vunpack.c.l.s4 1983009808
    %v3576 = vunpack.c.0.s8 %v3575
    %v3577 = vlaneseq
    %v3578 = vshrl.u32 %v3577, 7
    %v3579 = vsub.s32 %v3576, %v3578
    %v3580 = vrot.slane %v3573, %v3579
    %v3581 = vcombine.high %v3580, %v3580
    %3582 = vrot.lane.b32.xlu0 %v3581, 64
    %v3583 = vpop.permute.xlu0 %3582
    %3585 = vst.msk [vmem:[#allocation5 + $0x6] sm:$0x3] %vm3514, %v3583
    %v3586 = vld [vmem:[#allocation4 + $0x20] sm:$0x3]
    %3587 = vst.msk [vmem:[#allocation5 + $0x8] sm:$0x3] %vm3499, %v3586
    %v3588 = vld [vmem:[#allocation4 + $0x20] sm:$0xc]
    %v3591 = vunpack.c.l.s4 1983009808
    %v3592 = vunpack.c.0.s8 %v3591
    %v3593 = vlaneseq
    %v3594 = vshrl.u32 %v3593, 7
    %v3595 = vsub.s32 %v3592, %v3594
    %v3596 = vrot.slane %v3588, %v3595
    %v3597 = vcombine.high %v3596, %v3596
    %3598 = vrot.lane.b32.xlu0 %v3597, 64
    %v3599 = vpop.permute.xlu0 %3598
    %3601 = vst.msk [vmem:[#allocation5 + $0x8] sm:$0x3] %vm3514, %v3599
    %v3602 = vld [vmem:[#allocation4 + $0x20] sm:$0x30]
    %v3604 = vcombine.high %v3602, %v3602
    %v3606 = vunpack.c.l.s4 1983009808
    %v3607 = vunpack.c.0.s8 %v3606
    %v3608 = vlaneseq
    %v3609 = vshrl.u32 %v3608, 7
    %v3610 = vsub.s32 %v3607, %v3609
    %v3611 = vrot.slane %v3604, %v3610
    %3613 = vst.msk [vmem:[#allocation5 + $0xa] sm:$0x3] %vm3499, %v3611
    %v3614 = vld [vmem:[#allocation4 + $0x20] sm:$0xc0]
    %v3616 = vcombine.high %v3614, %v3614
    %v3618 = vunpack.c.l.s4 1983009808
    %v3619 = vunpack.c.0.s8 %v3618
    %v3620 = vlaneseq
    %v3621 = vshrl.u32 %v3620, 7
    %v3622 = vsub.s32 %v3619, %v3621
    %v3623 = vrot.slane %v3616, %v3622
    %v3624 = vcombine.high %v3623, %v3623
    %3625 = vrot.lane.b32.xlu0 %v3624, 64
    %v3626 = vpop.permute.xlu0 %3625
    %3628 = vst.msk [vmem:[#allocation5 + $0xa] sm:$0x3] %vm3514, %v3626
    %v3629 = vld [vmem:[#allocation4 + $0x30] sm:$0x3]
    %3630 = vst.msk [vmem:[#allocation5 + $0xc] sm:$0x3] %vm3499, %v3629
    %v3631 = vld [vmem:[#allocation4 + $0x30] sm:$0xc]
    %v3634 = vunpack.c.l.s4 1983009808
    %v3635 = vunpack.c.0.s8 %v3634
    %v3636 = vlaneseq
    %v3637 = vshrl.u32 %v3636, 7
    %v3638 = vsub.s32 %v3635, %v3637
    %v3639 = vrot.slane %v3631, %v3638
    %v3640 = vcombine.high %v3639, %v3639
    %3641 = vrot.lane.b32.xlu0 %v3640, 64
    %v3642 = vpop.permute.xlu0 %3641
    %3644 = vst.msk [vmem:[#allocation5 + $0xc] sm:$0x3] %vm3514, %v3642
    %v3645 = vld [vmem:[#allocation4 + $0x30] sm:$0x30]
    %v3647 = vcombine.high %v3645, %v3645
    %v3649 = vunpack.c.l.s4 1983009808
    %v3650 = vunpack.c.0.s8 %v3649
    %v3651 = vlaneseq
    %v3652 = vshrl.u32 %v3651, 7
    %v3653 = vsub.s32 %v3650, %v3652
    %v3654 = vrot.slane %v3647, %v3653
    %3656 = vst.msk [vmem:[#allocation5 + $0xe] sm:$0x3] %vm3499, %v3654
    %v3657 = vld [vmem:[#allocation4 + $0x30] sm:$0xc0]
    %v3659 = vcombine.high %v3657, %v3657
    %v3661 = vunpack.c.l.s4 1983009808
    %v3662 = vunpack.c.0.s8 %v3661
    %v3663 = vlaneseq
    %v3664 = vshrl.u32 %v3663, 7
    %v3665 = vsub.s32 %v3662, %v3664
    %v3666 = vrot.slane %v3659, %v3665
    %v3667 = vcombine.high %v3666, %v3666
    %3668 = vrot.lane.b32.xlu0 %v3667, 64
    %v3669 = vpop.permute.xlu0 %3668
    %3671 = vst.msk [vmem:[#allocation5 + $0xe] sm:$0x3] %vm3514, %v3669
    %s3672 = smul.u32 4, 160
    %s3673 = smul.u32 %s3672, 8
    %s3674 = sshll.u32 %s3673, 4
    %3675 = dma.done [#allocation7], %s3674
    %v3676 = vld [vmem:[#allocation5] sm:$0xff]
    %v3677 = vld [vmem:[#allocation5 + $0x8] sm:$0xff]
    %v3678 = vld [vmem:[#allocation5 + $0x10] sm:$0xf]
    %v3679 = vld [vmem:[#allocation6] sm:$0xff]
    %v3680 = vld [vmem:[#allocation6 + $0x8] sm:$0xff]
    %v3681 = vld [vmem:[#allocation6 + $0x10] sm:$0xff]
    %v3682 = vld [vmem:[#allocation6 + $0x18] sm:$0xff]
    %v3683 = vld [vmem:[#allocation6 + $0x20] sm:$0xff]
    %v3684 = vld [vmem:[#allocation6 + $0x28] sm:$0xff]
    %v3685 = vld [vmem:[#allocation6 + $0x30] sm:$0xff]
    %v3686 = vld [vmem:[#allocation6 + $0x38] sm:$0xff]
    %v3687 = vld [vmem:[#allocation6 + $0x40] sm:$0xff]
    %v3688 = vld [vmem:[#allocation6 + $0x48] sm:$0xff]
    %v3689 = vld [vmem:[#allocation6 + $0x50] sm:$0xff]
    %v3690 = vld [vmem:[#allocation6 + $0x58] sm:$0xff]
    %v3691 = vld [vmem:[#allocation6 + $0x60] sm:$0xff]
    %v3692 = vld [vmem:[#allocation6 + $0x68] sm:$0xff]
    %v3693 = vld [vmem:[#allocation6 + $0x70] sm:$0xff]
    %v3694 = vld [vmem:[#allocation6 + $0x78] sm:$0xff]
    %v3695 = vld [vmem:[#allocation6 + $0x80] sm:$0xff]
    %v3696 = vld [vmem:[#allocation6 + $0x88] sm:$0xff]
    %v3697 = vld [vmem:[#allocation6 + $0x90] sm:$0xff]
    %v3698 = vld [vmem:[#allocation6 + $0x98] sm:$0xff]
    %v3699 = vld [vmem:[#allocation6 + $0xa0] sm:$0xff]
    %v3700 = vld [vmem:[#allocation6 + $0xa8] sm:$0xff]
    %v3701 = vld [vmem:[#allocation6 + $0xb0] sm:$0xff]
    %v3702 = vld [vmem:[#allocation6 + $0xb8] sm:$0xff]
    %v3703 = vld [vmem:[#allocation6 + $0xc0] sm:$0xff]
    %v3704 = vld [vmem:[#allocation6 + $0xc8] sm:$0xff]
    %v3705 = vld [vmem:[#allocation6 + $0xd0] sm:$0xff]
    %v3706 = vld [vmem:[#allocation6 + $0xd8] sm:$0xff]
    %v3707 = vld [vmem:[#allocation6 + $0xe0] sm:$0xff]
    %v3708 = vld [vmem:[#allocation6 + $0xe8] sm:$0xff]
    %v3709 = vld [vmem:[#allocation6 + $0xf0] sm:$0xff]
    %v3710 = vld [vmem:[#allocation6 + $0xf8] sm:$0xff]
    %v3711 = vld [vmem:[#allocation6 + $0x100] sm:$0xff]
    %v3712 = vld [vmem:[#allocation6 + $0x108] sm:$0xff]
    %v3713 = vld [vmem:[#allocation6 + $0x110] sm:$0xff]
    %v3714 = vld [vmem:[#allocation6 + $0x118] sm:$0xff]
    %v3715 = vld [vmem:[#allocation6 + $0x120] sm:$0xff]
    %v3716 = vld [vmem:[#allocation6 + $0x128] sm:$0xff]
    %v3717 = vld [vmem:[#allocation6 + $0x130] sm:$0xff]
    %v3718 = vld [vmem:[#allocation6 + $0x138] sm:$0xff]
    %v3719 = vld [vmem:[#allocation6 + $0x140] sm:$0xff]
    %v3720 = vld [vmem:[#allocation6 + $0x148] sm:$0xff]
    %v3721 = vld [vmem:[#allocation6 + $0x150] sm:$0xff]
    %v3722 = vld [vmem:[#allocation6 + $0x158] sm:$0xff]
    %v3723 = vld [vmem:[#allocation6 + $0x160] sm:$0xff]
    %v3724 = vld [vmem:[#allocation6 + $0x168] sm:$0xff]
    %v3725 = vld [vmem:[#allocation6 + $0x170] sm:$0xff]
    %v3726 = vld [vmem:[#allocation6 + $0x178] sm:$0xff]
    %v3727 = vld [vmem:[#allocation6 + $0x180] sm:$0xff]
    %v3728 = vld [vmem:[#allocation6 + $0x188] sm:$0xff]
    %v3729 = vld [vmem:[#allocation6 + $0x190] sm:$0xff]
    %v3730 = vld [vmem:[#allocation6 + $0x198] sm:$0xff]
    %v3731 = vld [vmem:[#allocation6 + $0x1a0] sm:$0xff]
    %v3732 = vld [vmem:[#allocation6 + $0x1a8] sm:$0xff]
    %v3733 = vld [vmem:[#allocation6 + $0x1b0] sm:$0xff]
    %v3734 = vld [vmem:[#allocation6 + $0x1b8] sm:$0xff]
    %v3735 = vld [vmem:[#allocation6 + $0x1c0] sm:$0xff]
    %v3736 = vld [vmem:[#allocation6 + $0x1c8] sm:$0xff]
    %v3737 = vld [vmem:[#allocation6 + $0x1d0] sm:$0xff]
    %v3738 = vld [vmem:[#allocation6 + $0x1d8] sm:$0xff]
    %v3739 = vld [vmem:[#allocation6 + $0x1e0] sm:$0xff]
    %v3740 = vld [vmem:[#allocation6 + $0x1e8] sm:$0xff]
    %v3741 = vld [vmem:[#allocation6 + $0x1f0] sm:$0xff]
    %v3742 = vld [vmem:[#allocation6 + $0x1f8] sm:$0xff]
    %v3743 = vld [vmem:[#allocation6 + $0x200] sm:$0xff]
    %v3744 = vld [vmem:[#allocation6 + $0x208] sm:$0xff]
    %v3745 = vld [vmem:[#allocation6 + $0x210] sm:$0xff]
    %v3746 = vld [vmem:[#allocation6 + $0x218] sm:$0xff]
    %v3747 = vld [vmem:[#allocation6 + $0x220] sm:$0xff]
    %v3748 = vld [vmem:[#allocation6 + $0x228] sm:$0xff]
    %v3749 = vld [vmem:[#allocation6 + $0x230] sm:$0xff]
    %v3750 = vld [vmem:[#allocation6 + $0x238] sm:$0xff]
    %v3751 = vld [vmem:[#allocation6 + $0x240] sm:$0xff]
    %v3752 = vld [vmem:[#allocation6 + $0x248] sm:$0xff]
    %v3753 = vld [vmem:[#allocation6 + $0x250] sm:$0xff]
    %v3754 = vld [vmem:[#allocation6 + $0x258] sm:$0xff]
    %v3755 = vld [vmem:[#allocation6 + $0x260] sm:$0xff]
    %v3756 = vld [vmem:[#allocation6 + $0x268] sm:$0xff]
    %v3757 = vld [vmem:[#allocation6 + $0x270] sm:$0xff]
    %v3758 = vld [vmem:[#allocation6 + $0x278] sm:$0xff]
    %v3759 = vld [vmem:[#allocation6 + $0x280] sm:$0xff]
    %v3760 = vld [vmem:[#allocation6 + $0x288] sm:$0xff]
    %v3761 = vld [vmem:[#allocation6 + $0x290] sm:$0xff]
    %v3762 = vld [vmem:[#allocation6 + $0x298] sm:$0xff]
    %v3763 = vld [vmem:[#allocation6 + $0x2a0] sm:$0xff]
    %v3764 = vld [vmem:[#allocation6 + $0x2a8] sm:$0xff]
    %v3765 = vld [vmem:[#allocation6 + $0x2b0] sm:$0xff]
    %v3766 = vld [vmem:[#allocation6 + $0x2b8] sm:$0xff]
    %v3767 = vld [vmem:[#allocation6 + $0x2c0] sm:$0xff]
    %v3768 = vld [vmem:[#allocation6 + $0x2c8] sm:$0xff]
    %v3769 = vld [vmem:[#allocation6 + $0x2d0] sm:$0xff]
    %v3770 = vld [vmem:[#allocation6 + $0x2d8] sm:$0xff]
    %v3771 = vld [vmem:[#allocation6 + $0x2e0] sm:$0xff]
    %v3772 = vld [vmem:[#allocation6 + $0x2e8] sm:$0xff]
    %v3773 = vld [vmem:[#allocation6 + $0x2f0] sm:$0xff]
    %v3774 = vld [vmem:[#allocation6 + $0x2f8] sm:$0xff]
    %v3775 = vld [vmem:[#allocation6 + $0x300] sm:$0xff]
    %v3776 = vld [vmem:[#allocation6 + $0x308] sm:$0xff]
    %v3777 = vld [vmem:[#allocation6 + $0x310] sm:$0xff]
    %v3778 = vld [vmem:[#allocation6 + $0x318] sm:$0xff]
    %v3779 = vld [vmem:[#allocation6 + $0x320] sm:$0xff]
    %v3780 = vld [vmem:[#allocation6 + $0x328] sm:$0xff]
    %v3781 = vld [vmem:[#allocation6 + $0x330] sm:$0xff]
    %v3782 = vld [vmem:[#allocation6 + $0x338] sm:$0xff]
    %v3783 = vld [vmem:[#allocation6 + $0x340] sm:$0xff]
    %v3784 = vld [vmem:[#allocation6 + $0x348] sm:$0xff]
    %v3785 = vld [vmem:[#allocation6 + $0x350] sm:$0xff]
    %v3786 = vld [vmem:[#allocation6 + $0x358] sm:$0xff]
    %v3787 = vld [vmem:[#allocation6 + $0x360] sm:$0xff]
    %v3788 = vld [vmem:[#allocation6 + $0x368] sm:$0xff]
    %v3789 = vld [vmem:[#allocation6 + $0x370] sm:$0xff]
    %v3790 = vld [vmem:[#allocation6 + $0x378] sm:$0xff]
    %v3791 = vld [vmem:[#allocation6 + $0x380] sm:$0xff]
    %v3792 = vld [vmem:[#allocation6 + $0x388] sm:$0xff]
    %v3793 = vld [vmem:[#allocation6 + $0x390] sm:$0xff]
    %v3794 = vld [vmem:[#allocation6 + $0x398] sm:$0xff]
    %v3795 = vld [vmem:[#allocation6 + $0x3a0] sm:$0xff]
    %v3796 = vld [vmem:[#allocation6 + $0x3a8] sm:$0xff]
    %v3797 = vld [vmem:[#allocation6 + $0x3b0] sm:$0xff]
    %v3798 = vld [vmem:[#allocation6 + $0x3b8] sm:$0xff]
    %v3799 = vld [vmem:[#allocation6 + $0x3c0] sm:$0xff]
    %v3800 = vld [vmem:[#allocation6 + $0x3c8] sm:$0xff]
    %v3801 = vld [vmem:[#allocation6 + $0x3d0] sm:$0xff]
    %v3802 = vld [vmem:[#allocation6 + $0x3d8] sm:$0xff]
    %v3803 = vld [vmem:[#allocation6 + $0x3e0] sm:$0xff]
    %v3804 = vld [vmem:[#allocation6 + $0x3e8] sm:$0xff]
    %v3805 = vld [vmem:[#allocation6 + $0x3f0] sm:$0xff]
    %v3806 = vld [vmem:[#allocation6 + $0x3f8] sm:$0xff]
    %v3807 = vld [vmem:[#allocation6 + $0x400] sm:$0xff]
    %v3808 = vld [vmem:[#allocation6 + $0x408] sm:$0xff]
    %v3809 = vld [vmem:[#allocation6 + $0x410] sm:$0xff]
    %v3810 = vld [vmem:[#allocation6 + $0x418] sm:$0xff]
    %v3811 = vld [vmem:[#allocation6 + $0x420] sm:$0xff]
    %v3812 = vld [vmem:[#allocation6 + $0x428] sm:$0xff]
    %v3813 = vld [vmem:[#allocation6 + $0x430] sm:$0xff]
    %v3814 = vld [vmem:[#allocation6 + $0x438] sm:$0xff]
    %v3815 = vld [vmem:[#allocation6 + $0x440] sm:$0xff]
    %v3816 = vld [vmem:[#allocation6 + $0x448] sm:$0xff]
    %v3817 = vld [vmem:[#allocation6 + $0x450] sm:$0xff]
    %v3818 = vld [vmem:[#allocation6 + $0x458] sm:$0xff]
    %v3819 = vld [vmem:[#allocation6 + $0x460] sm:$0xff]
    %v3820 = vld [vmem:[#allocation6 + $0x468] sm:$0xff]
    %v3821 = vld [vmem:[#allocation6 + $0x470] sm:$0xff]
    %v3822 = vld [vmem:[#allocation6 + $0x478] sm:$0xff]
    %v3823 = vld [vmem:[#allocation6 + $0x480] sm:$0xff]
    %v3824 = vld [vmem:[#allocation6 + $0x488] sm:$0xff]
    %v3825 = vld [vmem:[#allocation6 + $0x490] sm:$0xff]
    %v3826 = vld [vmem:[#allocation6 + $0x498] sm:$0xff]
    %v3827 = vld [vmem:[#allocation6 + $0x4a0] sm:$0xff]
    %v3828 = vld [vmem:[#allocation6 + $0x4a8] sm:$0xff]
    %v3829 = vld [vmem:[#allocation6 + $0x4b0] sm:$0xff]
    %v3830 = vld [vmem:[#allocation6 + $0x4b8] sm:$0xff]
    %v3831 = vld [vmem:[#allocation6 + $0x4c0] sm:$0xff]
    %v3832 = vld [vmem:[#allocation6 + $0x4c8] sm:$0xff]
    %v3833 = vld [vmem:[#allocation6 + $0x4d0] sm:$0xff]
    %v3834 = vld [vmem:[#allocation6 + $0x4d8] sm:$0xff]
    %v3835 = vld [vmem:[#allocation6 + $0x4e0] sm:$0xff]
    %v3836 = vld [vmem:[#allocation6 + $0x4e8] sm:$0xff]
    %v3837 = vld [vmem:[#allocation6 + $0x4f0] sm:$0xff]
    %v3838 = vld [vmem:[#allocation6 + $0x4f8] sm:$0xff]
    %v3839 = vld [vmem:[#allocation6 + $0x500] sm:$0xff]
    %v3840 = vld [vmem:[#allocation6 + $0x508] sm:$0xff]
    %v3841 = vld [vmem:[#allocation6 + $0x510] sm:$0xff]
    %v3842 = vld [vmem:[#allocation6 + $0x518] sm:$0xff]
    %v3843 = vld [vmem:[#allocation6 + $0x520] sm:$0xff]
    %v3844 = vld [vmem:[#allocation6 + $0x528] sm:$0xff]
    %v3845 = vld [vmem:[#allocation6 + $0x530] sm:$0xff]
    %v3846 = vld [vmem:[#allocation6 + $0x538] sm:$0xff]
    %v3847 = vld [vmem:[#allocation6 + $0x540] sm:$0xff]
    %v3848 = vld [vmem:[#allocation6 + $0x548] sm:$0xff]
    %v3849 = vld [vmem:[#allocation6 + $0x550] sm:$0xff]
    %v3850 = vld [vmem:[#allocation6 + $0x558] sm:$0xff]
    %v3851 = vld [vmem:[#allocation6 + $0x560] sm:$0xff]
    %v3852 = vld [vmem:[#allocation6 + $0x568] sm:$0xff]
    %v3853 = vld [vmem:[#allocation6 + $0x570] sm:$0xff]
    %v3854 = vld [vmem:[#allocation6 + $0x578] sm:$0xff]
    %v3855 = vld [vmem:[#allocation6 + $0x580] sm:$0xff]
    %v3856 = vld [vmem:[#allocation6 + $0x588] sm:$0xff]
    %v3857 = vld [vmem:[#allocation6 + $0x590] sm:$0xff]
    %v3858 = vld [vmem:[#allocation6 + $0x598] sm:$0xff]
    %v3859 = vld [vmem:[#allocation6 + $0x5a0] sm:$0xff]
    %v3860 = vld [vmem:[#allocation6 + $0x5a8] sm:$0xff]
    %v3861 = vld [vmem:[#allocation6 + $0x5b0] sm:$0xff]
    %v3862 = vld [vmem:[#allocation6 + $0x5b8] sm:$0xff]
    %v3863 = vld [vmem:[#allocation6 + $0x5c0] sm:$0xff]
    %v3864 = vld [vmem:[#allocation6 + $0x5c8] sm:$0xff]
    %v3865 = vld [vmem:[#allocation6 + $0x5d0] sm:$0xff]
    %v3866 = vld [vmem:[#allocation6 + $0x5d8] sm:$0xff]
    %v3867 = vld [vmem:[#allocation6 + $0x5e0] sm:$0xff]
    %v3868 = vld [vmem:[#allocation6 + $0x5e8] sm:$0xff]
    %v3869 = vld [vmem:[#allocation6 + $0x5f0] sm:$0xff]
    %v3870 = vld [vmem:[#allocation6 + $0x5f8] sm:$0xff]
    %v3871 = vld [vmem:[#allocation6 + $0x600] sm:$0xff]
    %v3872 = vld [vmem:[#allocation6 + $0x608] sm:$0xff]
    %v3873 = vld [vmem:[#allocation6 + $0x610] sm:$0xff]
    %v3874 = vld [vmem:[#allocation6 + $0x618] sm:$0xff]
    %v3875 = vld [vmem:[#allocation6 + $0x620] sm:$0xff]
    %v3876 = vld [vmem:[#allocation6 + $0x628] sm:$0xff]
    %v3877 = vld [vmem:[#allocation6 + $0x630] sm:$0xff]
    %v3878 = vld [vmem:[#allocation6 + $0x638] sm:$0xff]
    %v3879 = vld [vmem:[#allocation6 + $0x640] sm:$0xff]
    %v3880 = vld [vmem:[#allocation6 + $0x648] sm:$0xff]
    %v3881 = vld [vmem:[#allocation6 + $0x650] sm:$0xff]
    %v3882 = vld [vmem:[#allocation6 + $0x658] sm:$0xff]
    %v3883 = vld [vmem:[#allocation6 + $0x660] sm:$0xff]
    %v3884 = vld [vmem:[#allocation6 + $0x668] sm:$0xff]
    %v3885 = vld [vmem:[#allocation6 + $0x670] sm:$0xff]
    %v3886 = vld [vmem:[#allocation6 + $0x678] sm:$0xff]
    %v3887 = vld [vmem:[#allocation6 + $0x680] sm:$0xff]
    %v3888 = vld [vmem:[#allocation6 + $0x688] sm:$0xff]
    %v3889 = vld [vmem:[#allocation6 + $0x690] sm:$0xff]
    %v3890 = vld [vmem:[#allocation6 + $0x698] sm:$0xff]
    %v3891 = vld [vmem:[#allocation6 + $0x6a0] sm:$0xff]
    %v3892 = vld [vmem:[#allocation6 + $0x6a8] sm:$0xff]
    %v3893 = vld [vmem:[#allocation6 + $0x6b0] sm:$0xff]
    %v3894 = vld [vmem:[#allocation6 + $0x6b8] sm:$0xff]
    %v3895 = vld [vmem:[#allocation6 + $0x6c0] sm:$0xff]
    %v3896 = vld [vmem:[#allocation6 + $0x6c8] sm:$0xff]
    %v3897 = vld [vmem:[#allocation6 + $0x6d0] sm:$0xff]
    %v3898 = vld [vmem:[#allocation6 + $0x6d8] sm:$0xff]
    %v3899 = vld [vmem:[#allocation6 + $0x6e0] sm:$0xff]
    %v3900 = vld [vmem:[#allocation6 + $0x6e8] sm:$0xff]
    %v3901 = vld [vmem:[#allocation6 + $0x6f0] sm:$0xff]
    %v3902 = vld [vmem:[#allocation6 + $0x6f8] sm:$0xff]
    %v3903 = vld [vmem:[#allocation6 + $0x700] sm:$0xff]
    %v3904 = vld [vmem:[#allocation6 + $0x708] sm:$0xff]
    %v3905 = vld [vmem:[#allocation6 + $0x710] sm:$0xff]
    %v3906 = vld [vmem:[#allocation6 + $0x718] sm:$0xff]
    %v3907 = vld [vmem:[#allocation6 + $0x720] sm:$0xff]
    %v3908 = vld [vmem:[#allocation6 + $0x728] sm:$0xff]
    %v3909 = vld [vmem:[#allocation6 + $0x730] sm:$0xff]
    %v3910 = vld [vmem:[#allocation6 + $0x738] sm:$0xff]
    %v3911 = vld [vmem:[#allocation6 + $0x740] sm:$0xff]
    %v3912 = vld [vmem:[#allocation6 + $0x748] sm:$0xff]
    %v3913 = vld [vmem:[#allocation6 + $0x750] sm:$0xff]
    %v3914 = vld [vmem:[#allocation6 + $0x758] sm:$0xff]
    %v3915 = vld [vmem:[#allocation6 + $0x760] sm:$0xff]
    %v3916 = vld [vmem:[#allocation6 + $0x768] sm:$0xff]
    %v3917 = vld [vmem:[#allocation6 + $0x770] sm:$0xff]
    %v3918 = vld [vmem:[#allocation6 + $0x778] sm:$0xff]
    %v3919 = vld [vmem:[#allocation6 + $0x780] sm:$0xff]
    %v3920 = vld [vmem:[#allocation6 + $0x788] sm:$0xff]
    %v3921 = vld [vmem:[#allocation6 + $0x790] sm:$0xff]
    %v3922 = vld [vmem:[#allocation6 + $0x798] sm:$0xff]
    %v3923 = vld [vmem:[#allocation6 + $0x7a0] sm:$0xff]
    %v3924 = vld [vmem:[#allocation6 + $0x7a8] sm:$0xff]
    %v3925 = vld [vmem:[#allocation6 + $0x7b0] sm:$0xff]
    %v3926 = vld [vmem:[#allocation6 + $0x7b8] sm:$0xff]
    %v3927 = vld [vmem:[#allocation6 + $0x7c0] sm:$0xff]
    %v3928 = vld [vmem:[#allocation6 + $0x7c8] sm:$0xff]
    %v3929 = vld [vmem:[#allocation6 + $0x7d0] sm:$0xff]
    %v3930 = vld [vmem:[#allocation6 + $0x7d8] sm:$0xff]
    %v3931 = vld [vmem:[#allocation6 + $0x7e0] sm:$0xff]
    %v3932 = vld [vmem:[#allocation6 + $0x7e8] sm:$0xff]
    %v3933 = vld [vmem:[#allocation6 + $0x7f0] sm:$0xff]
    %v3934 = vld [vmem:[#allocation6 + $0x7f8] sm:$0xff]
    %v3935 = vld [vmem:[#allocation6 + $0x800] sm:$0xff]
    %v3936 = vld [vmem:[#allocation6 + $0x808] sm:$0xff]
    %v3937 = vld [vmem:[#allocation6 + $0x810] sm:$0xff]
    %v3938 = vld [vmem:[#allocation6 + $0x818] sm:$0xff]
    %v3939 = vld [vmem:[#allocation6 + $0x820] sm:$0xff]
    %v3940 = vld [vmem:[#allocation6 + $0x828] sm:$0xff]
    %v3941 = vld [vmem:[#allocation6 + $0x830] sm:$0xff]
    %v3942 = vld [vmem:[#allocation6 + $0x838] sm:$0xff]
    %v3943 = vld [vmem:[#allocation6 + $0x840] sm:$0xff]
    %v3944 = vld [vmem:[#allocation6 + $0x848] sm:$0xff]
    %v3945 = vld [vmem:[#allocation6 + $0x850] sm:$0xff]
    %v3946 = vld [vmem:[#allocation6 + $0x858] sm:$0xff]
    %v3947 = vld [vmem:[#allocation6 + $0x860] sm:$0xff]
    %v3948 = vld [vmem:[#allocation6 + $0x868] sm:$0xff]
    %v3949 = vld [vmem:[#allocation6 + $0x870] sm:$0xff]
    %v3950 = vld [vmem:[#allocation6 + $0x878] sm:$0xff]
    %v3951 = vld [vmem:[#allocation6 + $0x880] sm:$0xff]
    %v3952 = vld [vmem:[#allocation6 + $0x888] sm:$0xff]
    %v3953 = vld [vmem:[#allocation6 + $0x890] sm:$0xff]
    %v3954 = vld [vmem:[#allocation6 + $0x898] sm:$0xff]
    %v3955 = vld [vmem:[#allocation6 + $0x8a0] sm:$0xff]
    %v3956 = vld [vmem:[#allocation6 + $0x8a8] sm:$0xff]
    %v3957 = vld [vmem:[#allocation6 + $0x8b0] sm:$0xff]
    %v3958 = vld [vmem:[#allocation6 + $0x8b8] sm:$0xff]
    %v3959 = vld [vmem:[#allocation6 + $0x8c0] sm:$0xff]
    %v3960 = vld [vmem:[#allocation6 + $0x8c8] sm:$0xff]
    %v3961 = vld [vmem:[#allocation6 + $0x8d0] sm:$0xff]
    %v3962 = vld [vmem:[#allocation6 + $0x8d8] sm:$0xff]
    %v3963 = vld [vmem:[#allocation6 + $0x8e0] sm:$0xff]
    %v3964 = vld [vmem:[#allocation6 + $0x8e8] sm:$0xff]
    %v3965 = vld [vmem:[#allocation6 + $0x8f0] sm:$0xff]
    %v3966 = vld [vmem:[#allocation6 + $0x8f8] sm:$0xff]
    %v3967 = vld [vmem:[#allocation6 + $0x900] sm:$0xff]
    %v3968 = vld [vmem:[#allocation6 + $0x908] sm:$0xff]
    %v3969 = vld [vmem:[#allocation6 + $0x910] sm:$0xff]
    %v3970 = vld [vmem:[#allocation6 + $0x918] sm:$0xff]
    %v3971 = vld [vmem:[#allocation6 + $0x920] sm:$0xff]
    %v3972 = vld [vmem:[#allocation6 + $0x928] sm:$0xff]
    %v3973 = vld [vmem:[#allocation6 + $0x930] sm:$0xff]
    %v3974 = vld [vmem:[#allocation6 + $0x938] sm:$0xff]
    %v3975 = vld [vmem:[#allocation6 + $0x940] sm:$0xff]
    %v3976 = vld [vmem:[#allocation6 + $0x948] sm:$0xff]
    %v3977 = vld [vmem:[#allocation6 + $0x950] sm:$0xff]
    %v3978 = vld [vmem:[#allocation6 + $0x958] sm:$0xff]
    %v3979 = vld [vmem:[#allocation6 + $0x960] sm:$0xff]
    %v3980 = vld [vmem:[#allocation6 + $0x968] sm:$0xff]
    %v3981 = vld [vmem:[#allocation6 + $0x970] sm:$0xff]
    %v3982 = vld [vmem:[#allocation6 + $0x978] sm:$0xff]
    %v3983 = vld [vmem:[#allocation6 + $0x980] sm:$0xff]
    %v3984 = vld [vmem:[#allocation6 + $0x988] sm:$0xff]
    %v3985 = vld [vmem:[#allocation6 + $0x990] sm:$0xff]
    %v3986 = vld [vmem:[#allocation6 + $0x998] sm:$0xff]
    %v3987 = vld [vmem:[#allocation6 + $0x9a0] sm:$0xff]
    %v3988 = vld [vmem:[#allocation6 + $0x9a8] sm:$0xff]
    %v3989 = vld [vmem:[#allocation6 + $0x9b0] sm:$0xff]
    %v3990 = vld [vmem:[#allocation6 + $0x9b8] sm:$0xff]
    %v3991 = vld [vmem:[#allocation6 + $0x9c0] sm:$0xff]
    %v3992 = vld [vmem:[#allocation6 + $0x9c8] sm:$0xff]
    %v3993 = vld [vmem:[#allocation6 + $0x9d0] sm:$0xff]
    %v3994 = vld [vmem:[#allocation6 + $0x9d8] sm:$0xff]
    %v3995 = vld [vmem:[#allocation6 + $0x9e0] sm:$0xff]
    %v3996 = vld [vmem:[#allocation6 + $0x9e8] sm:$0xff]
    %v3997 = vld [vmem:[#allocation6 + $0x9f0] sm:$0xff]
    %v3998 = vld [vmem:[#allocation6 + $0x9f8] sm:$0xff]
    %v3999 = vld [vmem:[#allocation6 + $0xa00] sm:$0xff]
    %v4000 = vld [vmem:[#allocation6 + $0xa08] sm:$0xff]
    %v4001 = vld [vmem:[#allocation6 + $0xa10] sm:$0xff]
    %v4002 = vld [vmem:[#allocation6 + $0xa18] sm:$0xff]
    %v4003 = vld [vmem:[#allocation6 + $0xa20] sm:$0xff]
    %v4004 = vld [vmem:[#allocation6 + $0xa28] sm:$0xff]
    %v4005 = vld [vmem:[#allocation6 + $0xa30] sm:$0xff]
    %v4006 = vld [vmem:[#allocation6 + $0xa38] sm:$0xff]
    %v4007 = vld [vmem:[#allocation6 + $0xa40] sm:$0xff]
    %v4008 = vld [vmem:[#allocation6 + $0xa48] sm:$0xff]
    %v4009 = vld [vmem:[#allocation6 + $0xa50] sm:$0xff]
    %v4010 = vld [vmem:[#allocation6 + $0xa58] sm:$0xff]
    %v4011 = vld [vmem:[#allocation6 + $0xa60] sm:$0xff]
    %v4012 = vld [vmem:[#allocation6 + $0xa68] sm:$0xff]
    %v4013 = vld [vmem:[#allocation6 + $0xa70] sm:$0xff]
    %v4014 = vld [vmem:[#allocation6 + $0xa78] sm:$0xff]
    %v4015 = vld [vmem:[#allocation6 + $0xa80] sm:$0xff]
    %v4016 = vld [vmem:[#allocation6 + $0xa88] sm:$0xff]
    %v4017 = vld [vmem:[#allocation6 + $0xa90] sm:$0xff]
    %v4018 = vld [vmem:[#allocation6 + $0xa98] sm:$0xff]
    %v4019 = vld [vmem:[#allocation6 + $0xaa0] sm:$0xff]
    %v4020 = vld [vmem:[#allocation6 + $0xaa8] sm:$0xff]
    %v4021 = vld [vmem:[#allocation6 + $0xab0] sm:$0xff]
    %v4022 = vld [vmem:[#allocation6 + $0xab8] sm:$0xff]
    %v4023 = vld [vmem:[#allocation6 + $0xac0] sm:$0xff]
    %v4024 = vld [vmem:[#allocation6 + $0xac8] sm:$0xff]
    %v4025 = vld [vmem:[#allocation6 + $0xad0] sm:$0xff]
    %v4026 = vld [vmem:[#allocation6 + $0xad8] sm:$0xff]
    %v4027 = vld [vmem:[#allocation6 + $0xae0] sm:$0xff]
    %v4028 = vld [vmem:[#allocation6 + $0xae8] sm:$0xff]
    %v4029 = vld [vmem:[#allocation6 + $0xaf0] sm:$0xff]
    %v4030 = vld [vmem:[#allocation6 + $0xaf8] sm:$0xff]
    %v4031 = vld [vmem:[#allocation6 + $0xb00] sm:$0xff]
    %v4032 = vld [vmem:[#allocation6 + $0xb08] sm:$0xff]
    %v4033 = vld [vmem:[#allocation6 + $0xb10] sm:$0xff]
    %v4034 = vld [vmem:[#allocation6 + $0xb18] sm:$0xff]
    %v4035 = vld [vmem:[#allocation6 + $0xb20] sm:$0xff]
    %v4036 = vld [vmem:[#allocation6 + $0xb28] sm:$0xff]
    %v4037 = vld [vmem:[#allocation6 + $0xb30] sm:$0xff]
    %v4038 = vld [vmem:[#allocation6 + $0xb38] sm:$0xff]
    %v4039 = vld [vmem:[#allocation6 + $0xb40] sm:$0xff]
    %v4040 = vld [vmem:[#allocation6 + $0xb48] sm:$0xff]
    %v4041 = vld [vmem:[#allocation6 + $0xb50] sm:$0xff]
    %v4042 = vld [vmem:[#allocation6 + $0xb58] sm:$0xff]
    %v4043 = vld [vmem:[#allocation6 + $0xb60] sm:$0xff]
    %v4044 = vld [vmem:[#allocation6 + $0xb68] sm:$0xff]
    %v4045 = vld [vmem:[#allocation6 + $0xb70] sm:$0xff]
    %v4046 = vld [vmem:[#allocation6 + $0xb78] sm:$0xff]
    %v4047 = vld [vmem:[#allocation6 + $0xb80] sm:$0xff]
    %v4048 = vld [vmem:[#allocation6 + $0xb88] sm:$0xff]
    %v4049 = vld [vmem:[#allocation6 + $0xb90] sm:$0xff]
    %v4050 = vld [vmem:[#allocation6 + $0xb98] sm:$0xff]
    %v4051 = vld [vmem:[#allocation6 + $0xba0] sm:$0xff]
    %v4052 = vld [vmem:[#allocation6 + $0xba8] sm:$0xff]
    %v4053 = vld [vmem:[#allocation6 + $0xbb0] sm:$0xff]
    %v4054 = vld [vmem:[#allocation6 + $0xbb8] sm:$0xff]
    %v4055 = vld [vmem:[#allocation6 + $0xbc0] sm:$0xff]
    %v4056 = vld [vmem:[#allocation6 + $0xbc8] sm:$0xff]
    %v4057 = vld [vmem:[#allocation6 + $0xbd0] sm:$0xff]
    %v4058 = vld [vmem:[#allocation6 + $0xbd8] sm:$0xff]
    %v4059 = vld [vmem:[#allocation6 + $0xbe0] sm:$0xff]
    %v4060 = vld [vmem:[#allocation6 + $0xbe8] sm:$0xff]
    %v4061 = vld [vmem:[#allocation6 + $0xbf0] sm:$0xff]
    %v4062 = vld [vmem:[#allocation6 + $0xbf8] sm:$0xff]
    %v4063 = vld [vmem:[#allocation6 + $0xc00] sm:$0xff]
    %v4064 = vld [vmem:[#allocation6 + $0xc08] sm:$0xff]
    %v4065 = vld [vmem:[#allocation6 + $0xc10] sm:$0xff]
    %v4066 = vld [vmem:[#allocation6 + $0xc18] sm:$0xff]
    %v4067 = vld [vmem:[#allocation6 + $0xc20] sm:$0xff]
    %v4068 = vld [vmem:[#allocation6 + $0xc28] sm:$0xff]
    %v4069 = vld [vmem:[#allocation6 + $0xc30] sm:$0xff]
    %v4070 = vld [vmem:[#allocation6 + $0xc38] sm:$0xff]
    %v4071 = vld [vmem:[#allocation6 + $0xc40] sm:$0xff]
    %v4072 = vld [vmem:[#allocation6 + $0xc48] sm:$0xff]
    %v4073 = vld [vmem:[#allocation6 + $0xc50] sm:$0xff]
    %v4074 = vld [vmem:[#allocation6 + $0xc58] sm:$0xff]
    %v4075 = vld [vmem:[#allocation6 + $0xc60] sm:$0xff]
    %v4076 = vld [vmem:[#allocation6 + $0xc68] sm:$0xff]
    %v4077 = vld [vmem:[#allocation6 + $0xc70] sm:$0xff]
    %v4078 = vld [vmem:[#allocation6 + $0xc78] sm:$0xff]
    %v4079 = vld [vmem:[#allocation6 + $0xc80] sm:$0xff]
    %v4080 = vld [vmem:[#allocation6 + $0xc88] sm:$0xff]
    %v4081 = vld [vmem:[#allocation6 + $0xc90] sm:$0xff]
    %v4082 = vld [vmem:[#allocation6 + $0xc98] sm:$0xff]
    %v4083 = vld [vmem:[#allocation6 + $0xca0] sm:$0xff]
    %v4084 = vld [vmem:[#allocation6 + $0xca8] sm:$0xff]
    %v4085 = vld [vmem:[#allocation6 + $0xcb0] sm:$0xff]
    %v4086 = vld [vmem:[#allocation6 + $0xcb8] sm:$0xff]
    %v4087 = vld [vmem:[#allocation6 + $0xcc0] sm:$0xff]
    %v4088 = vld [vmem:[#allocation6 + $0xcc8] sm:$0xff]
    %v4089 = vld [vmem:[#allocation6 + $0xcd0] sm:$0xff]
    %v4090 = vld [vmem:[#allocation6 + $0xcd8] sm:$0xff]
    %v4091 = vld [vmem:[#allocation6 + $0xce0] sm:$0xff]
    %v4092 = vld [vmem:[#allocation6 + $0xce8] sm:$0xff]
    %v4093 = vld [vmem:[#allocation6 + $0xcf0] sm:$0xff]
    %v4094 = vld [vmem:[#allocation6 + $0xcf8] sm:$0xff]
    %v4095 = vld [vmem:[#allocation6 + $0xd00] sm:$0xff]
    %v4096 = vld [vmem:[#allocation6 + $0xd08] sm:$0xff]
    %v4097 = vld [vmem:[#allocation6 + $0xd10] sm:$0xff]
    %v4098 = vld [vmem:[#allocation6 + $0xd18] sm:$0xff]
    %v4099 = vld [vmem:[#allocation6 + $0xd20] sm:$0xff]
    %v4100 = vld [vmem:[#allocation6 + $0xd28] sm:$0xff]
    %v4101 = vld [vmem:[#allocation6 + $0xd30] sm:$0xff]
    %v4102 = vld [vmem:[#allocation6 + $0xd38] sm:$0xff]
    %v4103 = vld [vmem:[#allocation6 + $0xd40] sm:$0xff]
    %v4104 = vld [vmem:[#allocation6 + $0xd48] sm:$0xff]
    %v4105 = vld [vmem:[#allocation6 + $0xd50] sm:$0xff]
    %v4106 = vld [vmem:[#allocation6 + $0xd58] sm:$0xff]
    %v4107 = vld [vmem:[#allocation6 + $0xd60] sm:$0xff]
    %v4108 = vld [vmem:[#allocation6 + $0xd68] sm:$0xff]
    %v4109 = vld [vmem:[#allocation6 + $0xd70] sm:$0xff]
    %v4110 = vld [vmem:[#allocation6 + $0xd78] sm:$0xff]
    %v4111 = vld [vmem:[#allocation6 + $0xd80] sm:$0xff]
    %v4112 = vld [vmem:[#allocation6 + $0xd88] sm:$0xff]
    %v4113 = vld [vmem:[#allocation6 + $0xd90] sm:$0xff]
    %v4114 = vld [vmem:[#allocation6 + $0xd98] sm:$0xff]
    %v4115 = vld [vmem:[#allocation6 + $0xda0] sm:$0xff]
    %v4116 = vld [vmem:[#allocation6 + $0xda8] sm:$0xff]
    %v4117 = vld [vmem:[#allocation6 + $0xdb0] sm:$0xff]
    %v4118 = vld [vmem:[#allocation6 + $0xdb8] sm:$0xff]
    %v4119 = vld [vmem:[#allocation6 + $0xdc0] sm:$0xff]
    %v4120 = vld [vmem:[#allocation6 + $0xdc8] sm:$0xff]
    %v4121 = vld [vmem:[#allocation6 + $0xdd0] sm:$0xff]
    %v4122 = vld [vmem:[#allocation6 + $0xdd8] sm:$0xff]
    %v4123 = vld [vmem:[#allocation6 + $0xde0] sm:$0xff]
    %v4124 = vld [vmem:[#allocation6 + $0xde8] sm:$0xff]
    %v4125 = vld [vmem:[#allocation6 + $0xdf0] sm:$0xff]
    %v4126 = vld [vmem:[#allocation6 + $0xdf8] sm:$0xff]
    %v4127 = vld [vmem:[#allocation6 + $0xe00] sm:$0xff]
    %v4128 = vld [vmem:[#allocation6 + $0xe08] sm:$0xff]
    %v4129 = vld [vmem:[#allocation6 + $0xe10] sm:$0xff]
    %v4130 = vld [vmem:[#allocation6 + $0xe18] sm:$0xff]
    %v4131 = vld [vmem:[#allocation6 + $0xe20] sm:$0xff]
    %v4132 = vld [vmem:[#allocation6 + $0xe28] sm:$0xff]
    %v4133 = vld [vmem:[#allocation6 + $0xe30] sm:$0xff]
    %v4134 = vld [vmem:[#allocation6 + $0xe38] sm:$0xff]
    %v4135 = vld [vmem:[#allocation6 + $0xe40] sm:$0xff]
    %v4136 = vld [vmem:[#allocation6 + $0xe48] sm:$0xff]
    %v4137 = vld [vmem:[#allocation6 + $0xe50] sm:$0xff]
    %v4138 = vld [vmem:[#allocation6 + $0xe58] sm:$0xff]
    %v4139 = vld [vmem:[#allocation6 + $0xe60] sm:$0xff]
    %v4140 = vld [vmem:[#allocation6 + $0xe68] sm:$0xff]
    %v4141 = vld [vmem:[#allocation6 + $0xe70] sm:$0xff]
    %v4142 = vld [vmem:[#allocation6 + $0xe78] sm:$0xff]
    %v4143 = vld [vmem:[#allocation6 + $0xe80] sm:$0xff]
    %v4144 = vld [vmem:[#allocation6 + $0xe88] sm:$0xff]
    %v4145 = vld [vmem:[#allocation6 + $0xe90] sm:$0xff]
    %v4146 = vld [vmem:[#allocation6 + $0xe98] sm:$0xff]
    %v4147 = vld [vmem:[#allocation6 + $0xea0] sm:$0xff]
    %v4148 = vld [vmem:[#allocation6 + $0xea8] sm:$0xff]
    %v4149 = vld [vmem:[#allocation6 + $0xeb0] sm:$0xff]
    %v4150 = vld [vmem:[#allocation6 + $0xeb8] sm:$0xff]
    %v4151 = vld [vmem:[#allocation6 + $0xec0] sm:$0xff]
    %v4152 = vld [vmem:[#allocation6 + $0xec8] sm:$0xff]
    %v4153 = vld [vmem:[#allocation6 + $0xed0] sm:$0xff]
    %v4154 = vld [vmem:[#allocation6 + $0xed8] sm:$0xff]
    %v4155 = vld [vmem:[#allocation6 + $0xee0] sm:$0xff]
    %v4156 = vld [vmem:[#allocation6 + $0xee8] sm:$0xff]
    %v4157 = vld [vmem:[#allocation6 + $0xef0] sm:$0xff]
    %v4158 = vld [vmem:[#allocation6 + $0xef8] sm:$0xff]
    %v4159 = vld [vmem:[#allocation6 + $0xf00] sm:$0xff]
    %v4160 = vld [vmem:[#allocation6 + $0xf08] sm:$0xff]
    %v4161 = vld [vmem:[#allocation6 + $0xf10] sm:$0xff]
    %v4162 = vld [vmem:[#allocation6 + $0xf18] sm:$0xff]
    %v4163 = vld [vmem:[#allocation6 + $0xf20] sm:$0xff]
    %v4164 = vld [vmem:[#allocation6 + $0xf28] sm:$0xff]
    %v4165 = vld [vmem:[#allocation6 + $0xf30] sm:$0xff]
    %v4166 = vld [vmem:[#allocation6 + $0xf38] sm:$0xff]
    %v4167 = vld [vmem:[#allocation6 + $0xf40] sm:$0xff]
    %v4168 = vld [vmem:[#allocation6 + $0xf48] sm:$0xff]
    %v4169 = vld [vmem:[#allocation6 + $0xf50] sm:$0xff]
    %v4170 = vld [vmem:[#allocation6 + $0xf58] sm:$0xff]
    %v4171 = vld [vmem:[#allocation6 + $0xf60] sm:$0xff]
    %v4172 = vld [vmem:[#allocation6 + $0xf68] sm:$0xff]
    %v4173 = vld [vmem:[#allocation6 + $0xf70] sm:$0xff]
    %v4174 = vld [vmem:[#allocation6 + $0xf78] sm:$0xff]
    %v4175 = vld [vmem:[#allocation6 + $0xf80] sm:$0xff]
    %v4176 = vld [vmem:[#allocation6 + $0xf88] sm:$0xff]
    %v4177 = vld [vmem:[#allocation6 + $0xf90] sm:$0xff]
    %v4178 = vld [vmem:[#allocation6 + $0xf98] sm:$0xff]
    %v4179 = vld [vmem:[#allocation6 + $0xfa0] sm:$0xff]
    %v4180 = vld [vmem:[#allocation6 + $0xfa8] sm:$0xff]
    %v4181 = vld [vmem:[#allocation6 + $0xfb0] sm:$0xff]
    %v4182 = vld [vmem:[#allocation6 + $0xfb8] sm:$0xff]
    %v4183 = vld [vmem:[#allocation6 + $0xfc0] sm:$0xff]
    %v4184 = vld [vmem:[#allocation6 + $0xfc8] sm:$0xff]
    %v4185 = vld [vmem:[#allocation6 + $0xfd0] sm:$0xff]
    %v4186 = vld [vmem:[#allocation6 + $0xfd8] sm:$0xff]
    %v4187 = vld [vmem:[#allocation6 + $0xfe0] sm:$0xff]
    %v4188 = vld [vmem:[#allocation6 + $0xfe8] sm:$0xff]
    %v4189 = vld [vmem:[#allocation6 + $0xff0] sm:$0xff]
    %v4190 = vld [vmem:[#allocation6 + $0xff8] sm:$0xff]
    %v4191 = vld [vmem:[#allocation6 + $0x1000] sm:$0xff]
    %v4192 = vld [vmem:[#allocation6 + $0x1008] sm:$0xff]
    %v4193 = vld [vmem:[#allocation6 + $0x1010] sm:$0xff]
    %v4194 = vld [vmem:[#allocation6 + $0x1018] sm:$0xff]
    %v4195 = vld [vmem:[#allocation6 + $0x1020] sm:$0xff]
    %v4196 = vld [vmem:[#allocation6 + $0x1028] sm:$0xff]
    %v4197 = vld [vmem:[#allocation6 + $0x1030] sm:$0xff]
    %v4198 = vld [vmem:[#allocation6 + $0x1038] sm:$0xff]
    %v4199 = vld [vmem:[#allocation6 + $0x1040] sm:$0xff]
    %v4200 = vld [vmem:[#allocation6 + $0x1048] sm:$0xff]
    %v4201 = vld [vmem:[#allocation6 + $0x1050] sm:$0xff]
    %v4202 = vld [vmem:[#allocation6 + $0x1058] sm:$0xff]
    %v4203 = vld [vmem:[#allocation6 + $0x1060] sm:$0xff]
    %v4204 = vld [vmem:[#allocation6 + $0x1068] sm:$0xff]
    %v4205 = vld [vmem:[#allocation6 + $0x1070] sm:$0xff]
    %v4206 = vld [vmem:[#allocation6 + $0x1078] sm:$0xff]
    %v4207 = vld [vmem:[#allocation6 + $0x1080] sm:$0xff]
    %v4208 = vld [vmem:[#allocation6 + $0x1088] sm:$0xff]
    %v4209 = vld [vmem:[#allocation6 + $0x1090] sm:$0xff]
    %v4210 = vld [vmem:[#allocation6 + $0x1098] sm:$0xff]
    %v4211 = vld [vmem:[#allocation6 + $0x10a0] sm:$0xff]
    %v4212 = vld [vmem:[#allocation6 + $0x10a8] sm:$0xff]
    %v4213 = vld [vmem:[#allocation6 + $0x10b0] sm:$0xff]
    %v4214 = vld [vmem:[#allocation6 + $0x10b8] sm:$0xff]
    %v4215 = vld [vmem:[#allocation6 + $0x10c0] sm:$0xff]
    %v4216 = vld [vmem:[#allocation6 + $0x10c8] sm:$0xff]
    %v4217 = vld [vmem:[#allocation6 + $0x10d0] sm:$0xff]
    %v4218 = vld [vmem:[#allocation6 + $0x10d8] sm:$0xff]
    %v4219 = vld [vmem:[#allocation6 + $0x10e0] sm:$0xff]
    %v4220 = vld [vmem:[#allocation6 + $0x10e8] sm:$0xff]
    %v4221 = vld [vmem:[#allocation6 + $0x10f0] sm:$0xff]
    %v4222 = vld [vmem:[#allocation6 + $0x10f8] sm:$0xff]
    %v4223 = vld [vmem:[#allocation6 + $0x1100] sm:$0xff]
    %v4224 = vld [vmem:[#allocation6 + $0x1108] sm:$0xff]
    %v4225 = vld [vmem:[#allocation6 + $0x1110] sm:$0xff]
    %v4226 = vld [vmem:[#allocation6 + $0x1118] sm:$0xff]
    %v4227 = vld [vmem:[#allocation6 + $0x1120] sm:$0xff]
    %v4228 = vld [vmem:[#allocation6 + $0x1128] sm:$0xff]
    %v4229 = vld [vmem:[#allocation6 + $0x1130] sm:$0xff]
    %v4230 = vld [vmem:[#allocation6 + $0x1138] sm:$0xff]
    %v4231 = vld [vmem:[#allocation6 + $0x1140] sm:$0xff]
    %v4232 = vld [vmem:[#allocation6 + $0x1148] sm:$0xff]
    %v4233 = vld [vmem:[#allocation6 + $0x1150] sm:$0xff]
    %v4234 = vld [vmem:[#allocation6 + $0x1158] sm:$0xff]
    %v4235 = vld [vmem:[#allocation6 + $0x1160] sm:$0xff]
    %v4236 = vld [vmem:[#allocation6 + $0x1168] sm:$0xff]
    %v4237 = vld [vmem:[#allocation6 + $0x1170] sm:$0xff]
    %v4238 = vld [vmem:[#allocation6 + $0x1178] sm:$0xff]
    %v4239 = vld [vmem:[#allocation6 + $0x1180] sm:$0xff]
    %v4240 = vld [vmem:[#allocation6 + $0x1188] sm:$0xff]
    %v4241 = vld [vmem:[#allocation6 + $0x1190] sm:$0xff]
    %v4242 = vld [vmem:[#allocation6 + $0x1198] sm:$0xff]
    %v4243 = vld [vmem:[#allocation6 + $0x11a0] sm:$0xff]
    %v4244 = vld [vmem:[#allocation6 + $0x11a8] sm:$0xff]
    %v4245 = vld [vmem:[#allocation6 + $0x11b0] sm:$0xff]
    %v4246 = vld [vmem:[#allocation6 + $0x11b8] sm:$0xff]
    %v4247 = vld [vmem:[#allocation6 + $0x11c0] sm:$0xff]
    %v4248 = vld [vmem:[#allocation6 + $0x11c8] sm:$0xff]
    %v4249 = vld [vmem:[#allocation6 + $0x11d0] sm:$0xff]
    %v4250 = vld [vmem:[#allocation6 + $0x11d8] sm:$0xff]
    %v4251 = vld [vmem:[#allocation6 + $0x11e0] sm:$0xff]
    %v4252 = vld [vmem:[#allocation6 + $0x11e8] sm:$0xff]
    %v4253 = vld [vmem:[#allocation6 + $0x11f0] sm:$0xff]
    %v4254 = vld [vmem:[#allocation6 + $0x11f8] sm:$0xff]
    %v4255 = vld [vmem:[#allocation6 + $0x1200] sm:$0xff]
    %v4256 = vld [vmem:[#allocation6 + $0x1208] sm:$0xff]
    %v4257 = vld [vmem:[#allocation6 + $0x1210] sm:$0xff]
    %v4258 = vld [vmem:[#allocation6 + $0x1218] sm:$0xff]
    %v4259 = vld [vmem:[#allocation6 + $0x1220] sm:$0xff]
    %v4260 = vld [vmem:[#allocation6 + $0x1228] sm:$0xff]
    %v4261 = vld [vmem:[#allocation6 + $0x1230] sm:$0xff]
    %v4262 = vld [vmem:[#allocation6 + $0x1238] sm:$0xff]
    %v4263 = vld [vmem:[#allocation6 + $0x1240] sm:$0xff]
    %v4264 = vld [vmem:[#allocation6 + $0x1248] sm:$0xff]
    %v4265 = vld [vmem:[#allocation6 + $0x1250] sm:$0xff]
    %v4266 = vld [vmem:[#allocation6 + $0x1258] sm:$0xff]
    %v4267 = vld [vmem:[#allocation6 + $0x1260] sm:$0xff]
    %v4268 = vld [vmem:[#allocation6 + $0x1268] sm:$0xff]
    %v4269 = vld [vmem:[#allocation6 + $0x1270] sm:$0xff]
    %v4270 = vld [vmem:[#allocation6 + $0x1278] sm:$0xff]
    %v4271 = vld [vmem:[#allocation6 + $0x1280] sm:$0xff]
    %v4272 = vld [vmem:[#allocation6 + $0x1288] sm:$0xff]
    %v4273 = vld [vmem:[#allocation6 + $0x1290] sm:$0xff]
    %v4274 = vld [vmem:[#allocation6 + $0x1298] sm:$0xff]
    %v4275 = vld [vmem:[#allocation6 + $0x12a0] sm:$0xff]
    %v4276 = vld [vmem:[#allocation6 + $0x12a8] sm:$0xff]
    %v4277 = vld [vmem:[#allocation6 + $0x12b0] sm:$0xff]
    %v4278 = vld [vmem:[#allocation6 + $0x12b8] sm:$0xff]
    %v4279 = vld [vmem:[#allocation6 + $0x12c0] sm:$0xff]
    %v4280 = vld [vmem:[#allocation6 + $0x12c8] sm:$0xff]
    %v4281 = vld [vmem:[#allocation6 + $0x12d0] sm:$0xff]
    %v4282 = vld [vmem:[#allocation6 + $0x12d8] sm:$0xff]
    %v4283 = vld [vmem:[#allocation6 + $0x12e0] sm:$0xff]
    %v4284 = vld [vmem:[#allocation6 + $0x12e8] sm:$0xff]
    %v4285 = vld [vmem:[#allocation6 + $0x12f0] sm:$0xff]
    %v4286 = vld [vmem:[#allocation6 + $0x12f8] sm:$0xff]
    %v4287 = vld [vmem:[#allocation6 + $0x1300] sm:$0xff]
    %v4288 = vld [vmem:[#allocation6 + $0x1308] sm:$0xff]
    %v4289 = vld [vmem:[#allocation6 + $0x1310] sm:$0xff]
    %v4290 = vld [vmem:[#allocation6 + $0x1318] sm:$0xff]
    %v4291 = vld [vmem:[#allocation6 + $0x1320] sm:$0xff]
    %v4292 = vld [vmem:[#allocation6 + $0x1328] sm:$0xff]
    %v4293 = vld [vmem:[#allocation6 + $0x1330] sm:$0xff]
    %v4294 = vld [vmem:[#allocation6 + $0x1338] sm:$0xff]
    %v4295 = vld [vmem:[#allocation6 + $0x1340] sm:$0xff]
    %v4296 = vld [vmem:[#allocation6 + $0x1348] sm:$0xff]
    %v4297 = vld [vmem:[#allocation6 + $0x1350] sm:$0xff]
    %v4298 = vld [vmem:[#allocation6 + $0x1358] sm:$0xff]
    %v4299 = vld [vmem:[#allocation6 + $0x1360] sm:$0xff]
    %v4300 = vld [vmem:[#allocation6 + $0x1368] sm:$0xff]
    %v4301 = vld [vmem:[#allocation6 + $0x1370] sm:$0xff]
    %v4302 = vld [vmem:[#allocation6 + $0x1378] sm:$0xff]
    %v4303 = vld [vmem:[#allocation6 + $0x1380] sm:$0xff]
    %v4304 = vld [vmem:[#allocation6 + $0x1388] sm:$0xff]
    %v4305 = vld [vmem:[#allocation6 + $0x1390] sm:$0xff]
    %v4306 = vld [vmem:[#allocation6 + $0x1398] sm:$0xff]
    %v4307 = vld [vmem:[#allocation6 + $0x13a0] sm:$0xff]
    %v4308 = vld [vmem:[#allocation6 + $0x13a8] sm:$0xff]
    %v4309 = vld [vmem:[#allocation6 + $0x13b0] sm:$0xff]
    %v4310 = vld [vmem:[#allocation6 + $0x13b8] sm:$0xff]
    %v4311 = vld [vmem:[#allocation6 + $0x13c0] sm:$0xff]
    %v4312 = vld [vmem:[#allocation6 + $0x13c8] sm:$0xff]
    %v4313 = vld [vmem:[#allocation6 + $0x13d0] sm:$0xff]
    %v4314 = vld [vmem:[#allocation6 + $0x13d8] sm:$0xff]
    %v4315 = vld [vmem:[#allocation6 + $0x13e0] sm:$0xff]
    %v4316 = vld [vmem:[#allocation6 + $0x13e8] sm:$0xff]
    %v4317 = vld [vmem:[#allocation6 + $0x13f0] sm:$0xff]
    %v4318 = vld [vmem:[#allocation6 + $0x13f8] sm:$0xff]
    %v4319 = vld [vmem:[#allocation19] sm:$0xff]
    %v4321 = vlaneseq
    %v4322 = vshrl.u32 %v4321, 7
    %v4323 = vsub.s32 0, %v4322
    %v4324 = vrot.slane %v4319, %v4323
    %v4325 = vlaneseq
    %v4326 = vshrl.u32 %v4325, 7
    %v4327 = vsub.s32 1, %v4326
    %v4328 = vrot.slane %v4319, %v4327
    %v4329 = vlaneseq
    %v4330 = vshrl.u32 %v4329, 7
    %v4331 = vsub.s32 2, %v4330
    %v4332 = vrot.slane %v4319, %v4331
    %v4333 = vlaneseq
    %v4334 = vshrl.u32 %v4333, 7
    %v4335 = vsub.s32 3, %v4334
    %v4336 = vrot.slane %v4319, %v4335
    %v4337 = vlaneseq
    %v4338 = vshrl.u32 %v4337, 7
    %v4339 = vsub.s32 4, %v4338
    %v4340 = vrot.slane %v4319, %v4339
    %v4341 = vlaneseq
    %v4342 = vshrl.u32 %v4341, 7
    %v4343 = vsub.s32 5, %v4342
    %v4344 = vrot.slane %v4319, %v4343
    %v4345 = vlaneseq
    %v4346 = vshrl.u32 %v4345, 7
    %v4347 = vsub.s32 6, %v4346
    %v4348 = vrot.slane %v4319, %v4347
    %v4349 = vlaneseq
    %v4350 = vshrl.u32 %v4349, 7
    %v4351 = vsub.s32 7, %v4350
    %v4352 = vrot.slane %v4319, %v4351
    %v4364 = vcombine.high %v3676, %v3676
    %v4366 = vunpack.c.l.s4 1983009808
    %v4367 = vunpack.c.0.s8 %v4366
    %v4368 = vlaneseq
    %v4369 = vshrl.u32 %v4368, 7
    %v4370 = vsub.s32 %v4367, %v4369
    %v4371 = vrot.slane %v3676, %v4370
    %v4373 = vunpack.c.l.s4 1983009808
    %v4374 = vunpack.c.0.s8 %v4373
    %v4375 = vlaneseq
    %v4376 = vshrl.u32 %v4375, 7
    %v4377 = vsub.s32 %v4374, %v4376
    %v4378 = vrot.slane %v4364, %v4377
    %v4379 = vcombine.high %v4371, %v4371
    %v4380 = vcombine.high %v4378, %v4378
    %v4381 = vcombine.high %v3677, %v3677
    %v4383 = vunpack.c.l.s4 1983009808
    %v4384 = vunpack.c.0.s8 %v4383
    %v4385 = vlaneseq
    %v4386 = vshrl.u32 %v4385, 7
    %v4387 = vsub.s32 %v4384, %v4386
    %v4388 = vrot.slane %v3677, %v4387
    %v4390 = vunpack.c.l.s4 1983009808
    %v4391 = vunpack.c.0.s8 %v4390
    %v4392 = vlaneseq
    %v4393 = vshrl.u32 %v4392, 7
    %v4394 = vsub.s32 %v4391, %v4393
    %v4395 = vrot.slane %v4381, %v4394
    %v4396 = vcombine.high %v4388, %v4388
    %v4397 = vcombine.high %v4395, %v4395
    %v4399 = vunpack.c.l.s4 1983009808
    %v4400 = vunpack.c.0.s8 %v4399
    %v4401 = vlaneseq
    %v4402 = vshrl.u32 %v4401, 7
    %v4403 = vsub.s32 %v4400, %v4402
    %v4404 = vrot.slane %v3678, %v4403
    %v4405 = vcombine.high %v4404, %v4404
    %4416 = vmatprep.subr.bf16.mxu0 %v3680
    %4417 = vmatpush1.bf16.msra.mxu0 %v3679
    %4418 = vmatprep.subr.bf16.mxu0 %v3688
    %4419 = vmatpush1.bf16.msra.mxu0 %v3687
    %4420 = vmatprep.subr.bf16.mxu0 %v3696
    %4421 = vmatpush1.bf16.msra.mxu0 %v3695
    %4422 = vmatprep.subr.bf16.mxu0 %v3704
    %4423 = vmatpush1.bf16.msra.mxu0 %v3703
    %4424 = vmatprep.subr.bf16.mxu0 %v3712
    %4425 = vmatpush1.bf16.msra.mxu0 %v3711
    %4426 = vmatprep.subr.bf16.mxu0 %v3720
    %4427 = vmatpush1.bf16.msra.mxu0 %v3719
    %4428 = vmatprep.subr.bf16.mxu0 %v3728
    %4429 = vmatpush1.bf16.msra.mxu0 %v3727
    %4430 = vmatprep.subr.bf16.mxu0 %v3736
    %4431 = vmatpush1.bf16.msra.mxu0 %v3735
    %4432 = vmatprep.subr.bf16.mxu0 %v3744
    %4433 = vmatpush1.bf16.msra.mxu0 %v3743
    %4434 = vmatprep.subr.bf16.mxu0 %v3752
    %4435 = vmatpush1.bf16.msra.mxu0 %v3751
    %4436 = vmatprep.subr.bf16.mxu0 %v3760
    %4437 = vmatpush1.bf16.msra.mxu0 %v3759
    %4438 = vmatprep.subr.bf16.mxu0 %v3768
    %4439 = vmatpush1.bf16.msra.mxu0 %v3767
    %4440 = vmatprep.subr.bf16.mxu0 %v3776
    %4441 = vmatpush1.bf16.msra.mxu0 %v3775
    %4442 = vmatprep.subr.bf16.mxu0 %v3784
    %4443 = vmatpush1.bf16.msra.mxu0 %v3783
    %4444 = vmatprep.subr.bf16.mxu0 %v3792
    %4445 = vmatpush1.bf16.msra.mxu0 %v3791
    %4446 = vmatprep.subr.bf16.mxu0 %v3800
    %4447 = vmatpush1.bf16.msra.mxu0 %v3799
    %4448 = vmatprep.mubr.bf16.mxu0 %v4379
    %4449 = vmatmul.mubr.bf16.gmra.mrb[0].mxu0 %v4371
    %v4450 = vpop.f32.mrb[0].mxu0
    %v4451 = vadd.f32 %v4324, %v4450
    %v4452 = vpop.f32.mrb[0].mxu0
    %v4453 = vadd.f32 %v4328, %v4452
    %v4454 = vpop.f32.mrb[0].mxu0
    %v4455 = vpop.f32.mrb[0].mxu0
    %4456 = vdwg.mxu0
    %4457 = vmatprep.subr.bf16.mxu0 %v3808
    %4458 = vmatpush1.bf16.msra.mxu0 %v3807
    %4459 = vmatprep.subr.bf16.mxu0 %v3816
    %4460 = vmatpush1.bf16.msra.mxu0 %v3815
    %4461 = vmatprep.subr.bf16.mxu0 %v3824
    %4462 = vmatpush1.bf16.msra.mxu0 %v3823
    %4463 = vmatprep.subr.bf16.mxu0 %v3832
    %4464 = vmatpush1.bf16.msra.mxu0 %v3831
    %4465 = vmatprep.subr.bf16.mxu0 %v3840
    %4466 = vmatpush1.bf16.msra.mxu0 %v3839
    %4467 = vmatprep.subr.bf16.mxu0 %v3848
    %4468 = vmatpush1.bf16.msra.mxu0 %v3847
    %4469 = vmatprep.subr.bf16.mxu0 %v3856
    %4470 = vmatpush1.bf16.msra.mxu0 %v3855
    %4471 = vmatprep.subr.bf16.mxu0 %v3864
    %4472 = vmatpush1.bf16.msra.mxu0 %v3863
    %4473 = vmatprep.subr.bf16.mxu0 %v3872
    %4474 = vmatpush1.bf16.msra.mxu0 %v3871
    %4475 = vmatprep.subr.bf16.mxu0 %v3880
    %4476 = vmatpush1.bf16.msra.mxu0 %v3879
    %4477 = vmatprep.subr.bf16.mxu0 %v3888
    %4478 = vmatpush1.bf16.msra.mxu0 %v3887
    %4479 = vmatprep.subr.bf16.mxu0 %v3896
    %4480 = vmatpush1.bf16.msra.mxu0 %v3895
    %4481 = vmatprep.subr.bf16.mxu0 %v3904
    %4482 = vmatpush1.bf16.msra.mxu0 %v3903
    %4483 = vmatprep.subr.bf16.mxu0 %v3912
    %4484 = vmatpush1.bf16.msra.mxu0 %v3911
    %4485 = vmatprep.subr.bf16.mxu0 %v3920
    %4486 = vmatpush1.bf16.msra.mxu0 %v3919
    %4487 = vmatprep.subr.bf16.mxu0 %v3928
    %4488 = vmatpush1.bf16.msra.mxu0 %v3927
    %4489 = vmatprep.mubr.bf16.mxu0 %v4380
    %4490 = vmatmul.mubr.bf16.gmra.mrb[0].mxu0 %v4378
    %v4491 = vpop.f32.mrb[0].mxu0
    %v4492 = vadd.f32 %v4451, %v4491
    %v4493 = vpop.f32.mrb[0].mxu0
    %v4494 = vadd.f32 %v4453, %v4493
    %v4495 = vpop.f32.mrb[0].mxu0
    %v4496 = vpop.f32.mrb[0].mxu0
    %4497 = vdwg.mxu0
    %4498 = vmatprep.subr.bf16.mxu0 %v3936
    %4499 = vmatpush1.bf16.msra.mxu0 %v3935
    %4500 = vmatprep.subr.bf16.mxu0 %v3944
    %4501 = vmatpush1.bf16.msra.mxu0 %v3943
    %4502 = vmatprep.subr.bf16.mxu0 %v3952
    %4503 = vmatpush1.bf16.msra.mxu0 %v3951
    %4504 = vmatprep.subr.bf16.mxu0 %v3960
    %4505 = vmatpush1.bf16.msra.mxu0 %v3959
    %4506 = vmatprep.subr.bf16.mxu0 %v3968
    %4507 = vmatpush1.bf16.msra.mxu0 %v3967
    %4508 = vmatprep.subr.bf16.mxu0 %v3976
    %4509 = vmatpush1.bf16.msra.mxu0 %v3975
    %4510 = vmatprep.subr.bf16.mxu0 %v3984
    %4511 = vmatpush1.bf16.msra.mxu0 %v3983
    %4512 = vmatprep.subr.bf16.mxu0 %v3992
    %4513 = vmatpush1.bf16.msra.mxu0 %v3991
    %4514 = vmatprep.subr.bf16.mxu0 %v4000
    %4515 = vmatpush1.bf16.msra.mxu0 %v3999
    %4516 = vmatprep.subr.bf16.mxu0 %v4008
    %4517 = vmatpush1.bf16.msra.mxu0 %v4007
    %4518 = vmatprep.subr.bf16.mxu0 %v4016
    %4519 = vmatpush1.bf16.msra.mxu0 %v4015
    %4520 = vmatprep.subr.bf16.mxu0 %v4024
    %4521 = vmatpush1.bf16.msra.mxu0 %v4023
    %4522 = vmatprep.subr.bf16.mxu0 %v4032
    %4523 = vmatpush1.bf16.msra.mxu0 %v4031
    %4524 = vmatprep.subr.bf16.mxu0 %v4040
    %4525 = vmatpush1.bf16.msra.mxu0 %v4039
    %4526 = vmatprep.subr.bf16.mxu0 %v4048
    %4527 = vmatpush1.bf16.msra.mxu0 %v4047
    %4528 = vmatprep.subr.bf16.mxu0 %v4056
    %4529 = vmatpush1.bf16.msra.mxu0 %v4055
    %4530 = vmatprep.mubr.bf16.mxu0 %v4396
    %4531 = vmatmul.mubr.bf16.gmra.mrb[0].mxu0 %v4388
    %v4532 = vpop.f32.mrb[0].mxu0
    %v4533 = vadd.f32 %v4492, %v4532
    %v4534 = vpop.f32.mrb[0].mxu0
    %v4535 = vadd.f32 %v4494, %v4534
    %v4536 = vpop.f32.mrb[0].mxu0
    %v4537 = vpop.f32.mrb[0].mxu0
    %4538 = vdwg.mxu0
    %4539 = vmatprep.subr.bf16.mxu0 %v4064
    %4540 = vmatpush1.bf16.msra.mxu0 %v4063
    %4541 = vmatprep.subr.bf16.mxu0 %v4072
    %4542 = vmatpush1.bf16.msra.mxu0 %v4071
    %4543 = vmatprep.subr.bf16.mxu0 %v4080
    %4544 = vmatpush1.bf16.msra.mxu0 %v4079
    %4545 = vmatprep.subr.bf16.mxu0 %v4088
    %4546 = vmatpush1.bf16.msra.mxu0 %v4087
    %4547 = vmatprep.subr.bf16.mxu0 %v4096
    %4548 = vmatpush1.bf16.msra.mxu0 %v4095
    %4549 = vmatprep.subr.bf16.mxu0 %v4104
    %4550 = vmatpush1.bf16.msra.mxu0 %v4103
    %4551 = vmatprep.subr.bf16.mxu0 %v4112
    %4552 = vmatpush1.bf16.msra.mxu0 %v4111
    %4553 = vmatprep.subr.bf16.mxu0 %v4120
    %4554 = vmatpush1.bf16.msra.mxu0 %v4119
    %4555 = vmatprep.subr.bf16.mxu0 %v4128
    %4556 = vmatpush1.bf16.msra.mxu0 %v4127
    %4557 = vmatprep.subr.bf16.mxu0 %v4136
    %4558 = vmatpush1.bf16.msra.mxu0 %v4135
    %4559 = vmatprep.subr.bf16.mxu0 %v4144
    %4560 = vmatpush1.bf16.msra.mxu0 %v4143
    %4561 = vmatprep.subr.bf16.mxu0 %v4152
    %4562 = vmatpush1.bf16.msra.mxu0 %v4151
    %4563 = vmatprep.subr.bf16.mxu0 %v4160
    %4564 = vmatpush1.bf16.msra.mxu0 %v4159
    %4565 = vmatprep.subr.bf16.mxu0 %v4168
    %4566 = vmatpush1.bf16.msra.mxu0 %v4167
    %4567 = vmatprep.subr.bf16.mxu0 %v4176
    %4568 = vmatpush1.bf16.msra.mxu0 %v4175
    %4569 = vmatprep.subr.bf16.mxu0 %v4184
    %4570 = vmatpush1.bf16.msra.mxu0 %v4183
    %4571 = vmatprep.mubr.bf16.mxu0 %v4397
    %4572 = vmatmul.mubr.bf16.gmra.mrb[0].mxu0 %v4395
    %v4573 = vpop.f32.mrb[0].mxu0
    %v4574 = vadd.f32 %v4533, %v4573
    %v4575 = vpop.f32.mrb[0].mxu0
    %v4576 = vadd.f32 %v4535, %v4575
    %v4577 = vpop.f32.mrb[0].mxu0
    %v4578 = vpop.f32.mrb[0].mxu0
    %4579 = vdwg.mxu0
    %4580 = vmatprep.subr.bf16.mxu0 %v4192
    %4581 = vmatpush1.bf16.msra.mxu0 %v4191
    %4582 = vmatprep.subr.bf16.mxu0 %v4200
    %4583 = vmatpush1.bf16.msra.mxu0 %v4199
    %4584 = vmatprep.subr.bf16.mxu0 %v4208
    %4585 = vmatpush1.bf16.msra.mxu0 %v4207
    %4586 = vmatprep.subr.bf16.mxu0 %v4216
    %4587 = vmatpush1.bf16.msra.mxu0 %v4215
    %4588 = vmatprep.subr.bf16.mxu0 %v4224
    %4589 = vmatpush1.bf16.msra.mxu0 %v4223
    %4590 = vmatprep.subr.bf16.mxu0 %v4232
    %4591 = vmatpush1.bf16.msra.mxu0 %v4231
    %4592 = vmatprep.subr.bf16.mxu0 %v4240
    %4593 = vmatpush1.bf16.msra.mxu0 %v4239
    %4594 = vmatprep.subr.bf16.mxu0 %v4248
    %4595 = vmatpush1.bf16.msra.mxu0 %v4247
    %4596 = vmatprep.subr.bf16.mxu0 %v4256
    %4597 = vmatpush1.bf16.msra.mxu0 %v4255
    %4598 = vmatprep.subr.bf16.mxu0 %v4264
    %4599 = vmatpush1.bf16.msra.mxu0 %v4263
    %4600 = vmatprep.subr.bf16.mxu0 %v4272
    %4601 = vmatpush1.bf16.msra.mxu0 %v4271
    %4602 = vmatprep.subr.bf16.mxu0 %v4280
    %4603 = vmatpush1.bf16.msra.mxu0 %v4279
    %4604 = vmatprep.subr.bf16.mxu0 %v4288
    %4605 = vmatpush1.bf16.msra.mxu0 %v4287
    %4606 = vmatprep.subr.bf16.mxu0 %v4296
    %4607 = vmatpush1.bf16.msra.mxu0 %v4295
    %4608 = vmatprep.subr.bf16.mxu0 %v4304
    %4609 = vmatpush1.bf16.msra.mxu0 %v4303
    %4610 = vmatprep.subr.bf16.mxu0 %v4312
    %4611 = vmatpush1.bf16.msra.mxu0 %v4311
    %4612 = vmatprep.mubr.bf16.mxu0 %v4405
    %4613 = vmatmul.mubr.bf16.gmra.mrb[0].mxu0 %v4404
    %v4614 = vpop.f32.mrb[0].mxu0
    %v4615 = vadd.f32 %v4574, %v4614
    %v4616 = vpop.f32.mrb[0].mxu0
    %v4617 = vadd.f32 %v4576, %v4616
    %v4618 = vpop.f32.mrb[0].mxu0
    %v4619 = vpop.f32.mrb[0].mxu0
    %4620 = vdwg.mxu0
    %4621 = vmatprep.subr.bf16.mxu0 %v3682
    %4622 = vmatpush1.bf16.msra.mxu0 %v3681
    %4623 = vmatprep.subr.bf16.mxu0 %v3690
    %4624 = vmatpush1.bf16.msra.mxu0 %v3689
    %4625 = vmatprep.subr.bf16.mxu0 %v3698
    %4626 = vmatpush1.bf16.msra.mxu0 %v3697
    %4627 = vmatprep.subr.bf16.mxu0 %v3706
    %4628 = vmatpush1.bf16.msra.mxu0 %v3705
    %4629 = vmatprep.subr.bf16.mxu0 %v3714
    %4630 = vmatpush1.bf16.msra.mxu0 %v3713
    %4631 = vmatprep.subr.bf16.mxu0 %v3722
    %4632 = vmatpush1.bf16.msra.mxu0 %v3721
    %4633 = vmatprep.subr.bf16.mxu0 %v3730
    %4634 = vmatpush1.bf16.msra.mxu0 %v3729
    %4635 = vmatprep.subr.bf16.mxu0 %v3738
    %4636 = vmatpush1.bf16.msra.mxu0 %v3737
    %4637 = vmatprep.subr.bf16.mxu0 %v3746
    %4638 = vmatpush1.bf16.msra.mxu0 %v3745
    %4639 = vmatprep.subr.bf16.mxu0 %v3754
    %4640 = vmatpush1.bf16.msra.mxu0 %v3753
    %4641 = vmatprep.subr.bf16.mxu0 %v3762
    %4642 = vmatpush1.bf16.msra.mxu0 %v3761
    %4643 = vmatprep.subr.bf16.mxu0 %v3770
    %4644 = vmatpush1.bf16.msra.mxu0 %v3769
    %4645 = vmatprep.subr.bf16.mxu0 %v3778
    %4646 = vmatpush1.bf16.msra.mxu0 %v3777
    %4647 = vmatprep.subr.bf16.mxu0 %v3786
    %4648 = vmatpush1.bf16.msra.mxu0 %v3785
    %4649 = vmatprep.subr.bf16.mxu0 %v3794
    %4650 = vmatpush1.bf16.msra.mxu0 %v3793
    %4651 = vmatprep.subr.bf16.mxu0 %v3802
    %4652 = vmatpush1.bf16.msra.mxu0 %v3801
    %4653 = vmatprep.mubr.bf16.mxu0 %v4379
    %4654 = vmatmul.mubr.bf16.gmra.mrb[0].mxu0 %v4371
    %v4655 = vpop.f32.mrb[0].mxu0
    %v4656 = vadd.f32 %v4332, %v4655
    %v4657 = vpop.f32.mrb[0].mxu0
    %v4658 = vadd.f32 %v4336, %v4657
    %v4659 = vpop.f32.mrb[0].mxu0
    %v4660 = vpop.f32.mrb[0].mxu0
    %4661 = vdwg.mxu0
    %4662 = vmatprep.subr.bf16.mxu0 %v3810
    %4663 = vmatpush1.bf16.msra.mxu0 %v3809
    %4664 = vmatprep.subr.bf16.mxu0 %v3818
    %4665 = vmatpush1.bf16.msra.mxu0 %v3817
    %4666 = vmatprep.subr.bf16.mxu0 %v3826
    %4667 = vmatpush1.bf16.msra.mxu0 %v3825
    %4668 = vmatprep.subr.bf16.mxu0 %v3834
    %4669 = vmatpush1.bf16.msra.mxu0 %v3833
    %4670 = vmatprep.subr.bf16.mxu0 %v3842
    %4671 = vmatpush1.bf16.msra.mxu0 %v3841
    %4672 = vmatprep.subr.bf16.mxu0 %v3850
    %4673 = vmatpush1.bf16.msra.mxu0 %v3849
    %4674 = vmatprep.subr.bf16.mxu0 %v3858
    %4675 = vmatpush1.bf16.msra.mxu0 %v3857
    %4676 = vmatprep.subr.bf16.mxu0 %v3866
    %4677 = vmatpush1.bf16.msra.mxu0 %v3865
    %4678 = vmatprep.subr.bf16.mxu0 %v3874
    %4679 = vmatpush1.bf16.msra.mxu0 %v3873
    %4680 = vmatprep.subr.bf16.mxu0 %v3882
    %4681 = vmatpush1.bf16.msra.mxu0 %v3881
    %4682 = vmatprep.subr.bf16.mxu0 %v3890
    %4683 = vmatpush1.bf16.msra.mxu0 %v3889
    %4684 = vmatprep.subr.bf16.mxu0 %v3898
    %4685 = vmatpush1.bf16.msra.mxu0 %v3897
    %4686 = vmatprep.subr.bf16.mxu0 %v3906
    %4687 = vmatpush1.bf16.msra.mxu0 %v3905
    %4688 = vmatprep.subr.bf16.mxu0 %v3914
    %4689 = vmatpush1.bf16.msra.mxu0 %v3913
    %4690 = vmatprep.subr.bf16.mxu0 %v3922
    %4691 = vmatpush1.bf16.msra.mxu0 %v3921
    %4692 = vmatprep.subr.bf16.mxu0 %v3930
    %4693 = vmatpush1.bf16.msra.mxu0 %v3929
    %4694 = vmatprep.mubr.bf16.mxu0 %v4380
    %4695 = vmatmul.mubr.bf16.gmra.mrb[0].mxu0 %v4378
    %v4696 = vpop.f32.mrb[0].mxu0
    %v4697 = vadd.f32 %v4656, %v4696
    %v4698 = vpop.f32.mrb[0].mxu0
    %v4699 = vadd.f32 %v4658, %v4698
    %v4700 = vpop.f32.mrb[0].mxu0
    %v4701 = vpop.f32.mrb[0].mxu0
    %4702 = vdwg.mxu0
    %4703 = vmatprep.subr.bf16.mxu0 %v3938
    %4704 = vmatpush1.bf16.msra.mxu0 %v3937
    %4705 = vmatprep.subr.bf16.mxu0 %v3946
    %4706 = vmatpush1.bf16.msra.mxu0 %v3945
    %4707 = vmatprep.subr.bf16.mxu0 %v3954
    %4708 = vmatpush1.bf16.msra.mxu0 %v3953
    %4709 = vmatprep.subr.bf16.mxu0 %v3962
    %4710 = vmatpush1.bf16.msra.mxu0 %v3961
    %4711 = vmatprep.subr.bf16.mxu0 %v3970
    %4712 = vmatpush1.bf16.msra.mxu0 %v3969
    %4713 = vmatprep.subr.bf16.mxu0 %v3978
    %4714 = vmatpush1.bf16.msra.mxu0 %v3977
    %4715 = vmatprep.subr.bf16.mxu0 %v3986
    %4716 = vmatpush1.bf16.msra.mxu0 %v3985
    %4717 = vmatprep.subr.bf16.mxu0 %v3994
    %4718 = vmatpush1.bf16.msra.mxu0 %v3993
    %4719 = vmatprep.subr.bf16.mxu0 %v4002
    %4720 = vmatpush1.bf16.msra.mxu0 %v4001
    %4721 = vmatprep.subr.bf16.mxu0 %v4010
    %4722 = vmatpush1.bf16.msra.mxu0 %v4009
    %4723 = vmatprep.subr.bf16.mxu0 %v4018
    %4724 = vmatpush1.bf16.msra.mxu0 %v4017
    %4725 = vmatprep.subr.bf16.mxu0 %v4026
    %4726 = vmatpush1.bf16.msra.mxu0 %v4025
    %4727 = vmatprep.subr.bf16.mxu0 %v4034
    %4728 = vmatpush1.bf16.msra.mxu0 %v4033
    %4729 = vmatprep.subr.bf16.mxu0 %v4042
    %4730 = vmatpush1.bf16.msra.mxu0 %v4041
    %4731 = vmatprep.subr.bf16.mxu0 %v4050
    %4732 = vmatpush1.bf16.msra.mxu0 %v4049
    %4733 = vmatprep.subr.bf16.mxu0 %v4058
    %4734 = vmatpush1.bf16.msra.mxu0 %v4057
    %4735 = vmatprep.mubr.bf16.mxu0 %v4396
    %4736 = vmatmul.mubr.bf16.gmra.mrb[0].mxu0 %v4388
    %v4737 = vpop.f32.mrb[0].mxu0
    %v4738 = vadd.f32 %v4697, %v4737
    %v4739 = vpop.f32.mrb[0].mxu0
    %v4740 = vadd.f32 %v4699, %v4739
    %v4741 = vpop.f32.mrb[0].mxu0
    %v4742 = vpop.f32.mrb[0].mxu0
    %4743 = vdwg.mxu0
    %4744 = vmatprep.subr.bf16.mxu0 %v4066
    %4745 = vmatpush1.bf16.msra.mxu0 %v4065
    %4746 = vmatprep.subr.bf16.mxu0 %v4074
    %4747 = vmatpush1.bf16.msra.mxu0 %v4073
    %4748 = vmatprep.subr.bf16.mxu0 %v4082
    %4749 = vmatpush1.bf16.msra.mxu0 %v4081
    %4750 = vmatprep.subr.bf16.mxu0 %v4090
    %4751 = vmatpush1.bf16.msra.mxu0 %v4089
    %4752 = vmatprep.subr.bf16.mxu0 %v4098
    %4753 = vmatpush1.bf16.msra.mxu0 %v4097
    %4754 = vmatprep.subr.bf16.mxu0 %v4106
    %4755 = vmatpush1.bf16.msra.mxu0 %v4105
    %4756 = vmatprep.subr.bf16.mxu0 %v4114
    %4757 = vmatpush1.bf16.msra.mxu0 %v4113
    %4758 = vmatprep.subr.bf16.mxu0 %v4122
    %4759 = vmatpush1.bf16.msra.mxu0 %v4121
    %4760 = vmatprep.subr.bf16.mxu0 %v4130
    %4761 = vmatpush1.bf16.msra.mxu0 %v4129
    %4762 = vmatprep.subr.bf16.mxu0 %v4138
    %4763 = vmatpush1.bf16.msra.mxu0 %v4137
    %4764 = vmatprep.subr.bf16.mxu0 %v4146
    %4765 = vmatpush1.bf16.msra.mxu0 %v4145
    %4766 = vmatprep.subr.bf16.mxu0 %v4154
    %4767 = vmatpush1.bf16.msra.mxu0 %v4153
    %4768 = vmatprep.subr.bf16.mxu0 %v4162
    %4769 = vmatpush1.bf16.msra.mxu0 %v4161
    %4770 = vmatprep.subr.bf16.mxu0 %v4170
    %4771 = vmatpush1.bf16.msra.mxu0 %v4169
    %4772 = vmatprep.subr.bf16.mxu0 %v4178
    %4773 = vmatpush1.bf16.msra.mxu0 %v4177
    %4774 = vmatprep.subr.bf16.mxu0 %v4186
    %4775 = vmatpush1.bf16.msra.mxu0 %v4185
    %4776 = vmatprep.mubr.bf16.mxu0 %v4397
    %4777 = vmatmul.mubr.bf16.gmra.mrb[0].mxu0 %v4395
    %v4778 = vpop.f32.mrb[0].mxu0
    %v4779 = vadd.f32 %v4738, %v4778
    %v4780 = vpop.f32.mrb[0].mxu0
    %v4781 = vadd.f32 %v4740, %v4780
    %v4782 = vpop.f32.mrb[0].mxu0
    %v4783 = vpop.f32.mrb[0].mxu0
    %4784 = vdwg.mxu0
    %4785 = vmatprep.subr.bf16.mxu0 %v4194
    %4786 = vmatpush1.bf16.msra.mxu0 %v4193
    %4787 = vmatprep.subr.bf16.mxu0 %v4202
    %4788 = vmatpush1.bf16.msra.mxu0 %v4201
    %4789 = vmatprep.subr.bf16.mxu0 %v4210
    %4790 = vmatpush1.bf16.msra.mxu0 %v4209
    %4791 = vmatprep.subr.bf16.mxu0 %v4218
    %4792 = vmatpush1.bf16.msra.mxu0 %v4217
    %4793 = vmatprep.subr.bf16.mxu0 %v4226
    %4794 = vmatpush1.bf16.msra.mxu0 %v4225
    %4795 = vmatprep.subr.bf16.mxu0 %v4234
    %4796 = vmatpush1.bf16.msra.mxu0 %v4233
    %4797 = vmatprep.subr.bf16.mxu0 %v4242
    %4798 = vmatpush1.bf16.msra.mxu0 %v4241
    %4799 = vmatprep.subr.bf16.mxu0 %v4250
    %4800 = vmatpush1.bf16.msra.mxu0 %v4249
    %4801 = vmatprep.subr.bf16.mxu0 %v4258
    %4802 = vmatpush1.bf16.msra.mxu0 %v4257
    %4803 = vmatprep.subr.bf16.mxu0 %v4266
    %4804 = vmatpush1.bf16.msra.mxu0 %v4265
    %4805 = vmatprep.subr.bf16.mxu0 %v4274
    %4806 = vmatpush1.bf16.msra.mxu0 %v4273
    %4807 = vmatprep.subr.bf16.mxu0 %v4282
    %4808 = vmatpush1.bf16.msra.mxu0 %v4281
    %4809 = vmatprep.subr.bf16.mxu0 %v4290
    %4810 = vmatpush1.bf16.msra.mxu0 %v4289
    %4811 = vmatprep.subr.bf16.mxu0 %v4298
    %4812 = vmatpush1.bf16.msra.mxu0 %v4297
    %4813 = vmatprep.subr.bf16.mxu0 %v4306
    %4814 = vmatpush1.bf16.msra.mxu0 %v4305
    %4815 = vmatprep.subr.bf16.mxu0 %v4314
    %4816 = vmatpush1.bf16.msra.mxu0 %v4313
    %4817 = vmatprep.mubr.bf16.mxu0 %v4405
    %4818 = vmatmul.mubr.bf16.gmra.mrb[0].mxu0 %v4404
    %v4819 = vpop.f32.mrb[0].mxu0
    %v4820 = vadd.f32 %v4779, %v4819
    %v4821 = vpop.f32.mrb[0].mxu0
    %v4822 = vadd.f32 %v4781, %v4821
    %v4823 = vpop.f32.mrb[0].mxu0
    %v4824 = vpop.f32.mrb[0].mxu0
    %4825 = vdwg.mxu0
    %4826 = vmatprep.subr.bf16.mxu0 %v3684
    %4827 = vmatpush1.bf16.msra.mxu0 %v3683
    %4828 = vmatprep.subr.bf16.mxu0 %v3692
    %4829 = vmatpush1.bf16.msra.mxu0 %v3691
    %4830 = vmatprep.subr.bf16.mxu0 %v3700
    %4831 = vmatpush1.bf16.msra.mxu0 %v3699
    %4832 = vmatprep.subr.bf16.mxu0 %v3708
    %4833 = vmatpush1.bf16.msra.mxu0 %v3707
    %4834 = vmatprep.subr.bf16.mxu0 %v3716
    %4835 = vmatpush1.bf16.msra.mxu0 %v3715
    %4836 = vmatprep.subr.bf16.mxu0 %v3724
    %4837 = vmatpush1.bf16.msra.mxu0 %v3723
    %4838 = vmatprep.subr.bf16.mxu0 %v3732
    %4839 = vmatpush1.bf16.msra.mxu0 %v3731
    %4840 = vmatprep.subr.bf16.mxu0 %v3740
    %4841 = vmatpush1.bf16.msra.mxu0 %v3739
    %4842 = vmatprep.subr.bf16.mxu0 %v3748
    %4843 = vmatpush1.bf16.msra.mxu0 %v3747
    %4844 = vmatprep.subr.bf16.mxu0 %v3756
    %4845 = vmatpush1.bf16.msra.mxu0 %v3755
    %4846 = vmatprep.subr.bf16.mxu0 %v3764
    %4847 = vmatpush1.bf16.msra.mxu0 %v3763
    %4848 = vmatprep.subr.bf16.mxu0 %v3772
    %4849 = vmatpush1.bf16.msra.mxu0 %v3771
    %4850 = vmatprep.subr.bf16.mxu0 %v3780
    %4851 = vmatpush1.bf16.msra.mxu0 %v3779
    %4852 = vmatprep.subr.bf16.mxu0 %v3788
    %4853 = vmatpush1.bf16.msra.mxu0 %v3787
    %4854 = vmatprep.subr.bf16.mxu0 %v3796
    %4855 = vmatpush1.bf16.msra.mxu0 %v3795
    %4856 = vmatprep.subr.bf16.mxu0 %v3804
    %4857 = vmatpush1.bf16.msra.mxu0 %v3803
    %4858 = vmatprep.mubr.bf16.mxu0 %v4379
    %4859 = vmatmul.mubr.bf16.gmra.mrb[0].mxu0 %v4371
    %v4860 = vpop.f32.mrb[0].mxu0
    %v4861 = vadd.f32 %v4340, %v4860
    %v4862 = vpop.f32.mrb[0].mxu0
    %v4863 = vadd.f32 %v4344, %v4862
    %v4864 = vpop.f32.mrb[0].mxu0
    %v4865 = vpop.f32.mrb[0].mxu0
    %4866 = vdwg.mxu0
    %4867 = vmatprep.subr.bf16.mxu0 %v3812
    %4868 = vmatpush1.bf16.msra.mxu0 %v3811
    %4869 = vmatprep.subr.bf16.mxu0 %v3820
    %4870 = vmatpush1.bf16.msra.mxu0 %v3819
    %4871 = vmatprep.subr.bf16.mxu0 %v3828
    %4872 = vmatpush1.bf16.msra.mxu0 %v3827
    %4873 = vmatprep.subr.bf16.mxu0 %v3836
    %4874 = vmatpush1.bf16.msra.mxu0 %v3835
    %4875 = vmatprep.subr.bf16.mxu0 %v3844
    %4876 = vmatpush1.bf16.msra.mxu0 %v3843
    %4877 = vmatprep.subr.bf16.mxu0 %v3852
    %4878 = vmatpush1.bf16.msra.mxu0 %v3851
    %4879 = vmatprep.subr.bf16.mxu0 %v3860
    %4880 = vmatpush1.bf16.msra.mxu0 %v3859
    %4881 = vmatprep.subr.bf16.mxu0 %v3868
    %4882 = vmatpush1.bf16.msra.mxu0 %v3867
    %4883 = vmatprep.subr.bf16.mxu0 %v3876
    %4884 = vmatpush1.bf16.msra.mxu0 %v3875
    %4885 = vmatprep.subr.bf16.mxu0 %v3884
    %4886 = vmatpush1.bf16.msra.mxu0 %v3883
    %4887 = vmatprep.subr.bf16.mxu0 %v3892
    %4888 = vmatpush1.bf16.msra.mxu0 %v3891
    %4889 = vmatprep.subr.bf16.mxu0 %v3900
    %4890 = vmatpush1.bf16.msra.mxu0 %v3899
    %4891 = vmatprep.subr.bf16.mxu0 %v3908
    %4892 = vmatpush1.bf16.msra.mxu0 %v3907
    %4893 = vmatprep.subr.bf16.mxu0 %v3916
    %4894 = vmatpush1.bf16.msra.mxu0 %v3915
    %4895 = vmatprep.subr.bf16.mxu0 %v3924
    %4896 = vmatpush1.bf16.msra.mxu0 %v3923
    %4897 = vmatprep.subr.bf16.mxu0 %v3932
    %4898 = vmatpush1.bf16.msra.mxu0 %v3931
    %4899 = vmatprep.mubr.bf16.mxu0 %v4380
    %4900 = vmatmul.mubr.bf16.gmra.mrb[0].mxu0 %v4378
    %v4901 = vpop.f32.mrb[0].mxu0
    %v4902 = vadd.f32 %v4861, %v4901
    %v4903 = vpop.f32.mrb[0].mxu0
    %v4904 = vadd.f32 %v4863, %v4903
    %v4905 = vpop.f32.mrb[0].mxu0
    %v4906 = vpop.f32.mrb[0].mxu0
    %4907 = vdwg.mxu0
    %4908 = vmatprep.subr.bf16.mxu0 %v3940
    %4909 = vmatpush1.bf16.msra.mxu0 %v3939
    %4910 = vmatprep.subr.bf16.mxu0 %v3948
    %4911 = vmatpush1.bf16.msra.mxu0 %v3947
    %4912 = vmatprep.subr.bf16.mxu0 %v3956
    %4913 = vmatpush1.bf16.msra.mxu0 %v3955
    %4914 = vmatprep.subr.bf16.mxu0 %v3964
    %4915 = vmatpush1.bf16.msra.mxu0 %v3963
    %4916 = vmatprep.subr.bf16.mxu0 %v3972
    %4917 = vmatpush1.bf16.msra.mxu0 %v3971
    %4918 = vmatprep.subr.bf16.mxu0 %v3980
    %4919 = vmatpush1.bf16.msra.mxu0 %v3979
    %4920 = vmatprep.subr.bf16.mxu0 %v3988
    %4921 = vmatpush1.bf16.msra.mxu0 %v3987
    %4922 = vmatprep.subr.bf16.mxu0 %v3996
    %4923 = vmatpush1.bf16.msra.mxu0 %v3995
    %4924 = vmatprep.subr.bf16.mxu0 %v4004
    %4925 = vmatpush1.bf16.msra.mxu0 %v4003
    %4926 = vmatprep.subr.bf16.mxu0 %v4012
    %4927 = vmatpush1.bf16.msra.mxu0 %v4011
    %4928 = vmatprep.subr.bf16.mxu0 %v4020
    %4929 = vmatpush1.bf16.msra.mxu0 %v4019
    %4930 = vmatprep.subr.bf16.mxu0 %v4028
    %4931 = vmatpush1.bf16.msra.mxu0 %v4027
    %4932 = vmatprep.subr.bf16.mxu0 %v4036
    %4933 = vmatpush1.bf16.msra.mxu0 %v4035
    %4934 = vmatprep.subr.bf16.mxu0 %v4044
    %4935 = vmatpush1.bf16.msra.mxu0 %v4043
    %4936 = vmatprep.subr.bf16.mxu0 %v4052
    %4937 = vmatpush1.bf16.msra.mxu0 %v4051
    %4938 = vmatprep.subr.bf16.mxu0 %v4060
    %4939 = vmatpush1.bf16.msra.mxu0 %v4059
    %4940 = vmatprep.mubr.bf16.mxu0 %v4396
    %4941 = vmatmul.mubr.bf16.gmra.mrb[0].mxu0 %v4388
    %v4942 = vpop.f32.mrb[0].mxu0
    %v4943 = vadd.f32 %v4902, %v4942
    %v4944 = vpop.f32.mrb[0].mxu0
    %v4945 = vadd.f32 %v4904, %v4944
    %v4946 = vpop.f32.mrb[0].mxu0
    %v4947 = vpop.f32.mrb[0].mxu0
    %4948 = vdwg.mxu0
    %4949 = vmatprep.subr.bf16.mxu0 %v4068
    %4950 = vmatpush1.bf16.msra.mxu0 %v4067
    %4951 = vmatprep.subr.bf16.mxu0 %v4076
    %4952 = vmatpush1.bf16.msra.mxu0 %v4075
    %4953 = vmatprep.subr.bf16.mxu0 %v4084
    %4954 = vmatpush1.bf16.msra.mxu0 %v4083
    %4955 = vmatprep.subr.bf16.mxu0 %v4092
    %4956 = vmatpush1.bf16.msra.mxu0 %v4091
    %4957 = vmatprep.subr.bf16.mxu0 %v4100
    %4958 = vmatpush1.bf16.msra.mxu0 %v4099
    %4959 = vmatprep.subr.bf16.mxu0 %v4108
    %4960 = vmatpush1.bf16.msra.mxu0 %v4107
    %4961 = vmatprep.subr.bf16.mxu0 %v4116
    %4962 = vmatpush1.bf16.msra.mxu0 %v4115
    %4963 = vmatprep.subr.bf16.mxu0 %v4124
    %4964 = vmatpush1.bf16.msra.mxu0 %v4123
    %4965 = vmatprep.subr.bf16.mxu0 %v4132
    %4966 = vmatpush1.bf16.msra.mxu0 %v4131
    %4967 = vmatprep.subr.bf16.mxu0 %v4140
    %4968 = vmatpush1.bf16.msra.mxu0 %v4139
    %4969 = vmatprep.subr.bf16.mxu0 %v4148
    %4970 = vmatpush1.bf16.msra.mxu0 %v4147
    %4971 = vmatprep.subr.bf16.mxu0 %v4156
    %4972 = vmatpush1.bf16.msra.mxu0 %v4155
    %4973 = vmatprep.subr.bf16.mxu0 %v4164
    %4974 = vmatpush1.bf16.msra.mxu0 %v4163
    %4975 = vmatprep.subr.bf16.mxu0 %v4172
    %4976 = vmatpush1.bf16.msra.mxu0 %v4171
    %4977 = vmatprep.subr.bf16.mxu0 %v4180
    %4978 = vmatpush1.bf16.msra.mxu0 %v4179
    %4979 = vmatprep.subr.bf16.mxu0 %v4188
    %4980 = vmatpush1.bf16.msra.mxu0 %v4187
    %4981 = vmatprep.mubr.bf16.mxu0 %v4397
    %4982 = vmatmul.mubr.bf16.gmra.mrb[0].mxu0 %v4395
    %v4983 = vpop.f32.mrb[0].mxu0
    %v4984 = vadd.f32 %v4943, %v4983
    %v4985 = vpop.f32.mrb[0].mxu0
    %v4986 = vadd.f32 %v4945, %v4985
    %v4987 = vpop.f32.mrb[0].mxu0
    %v4988 = vpop.f32.mrb[0].mxu0
    %4989 = vdwg.mxu0
    %4990 = vmatprep.subr.bf16.mxu0 %v4196
    %4991 = vmatpush1.bf16.msra.mxu0 %v4195
    %4992 = vmatprep.subr.bf16.mxu0 %v4204
    %4993 = vmatpush1.bf16.msra.mxu0 %v4203
    %4994 = vmatprep.subr.bf16.mxu0 %v4212
    %4995 = vmatpush1.bf16.msra.mxu0 %v4211
    %4996 = vmatprep.subr.bf16.mxu0 %v4220
    %4997 = vmatpush1.bf16.msra.mxu0 %v4219
    %4998 = vmatprep.subr.bf16.mxu0 %v4228
    %4999 = vmatpush1.bf16.msra.mxu0 %v4227
    %5000 = vmatprep.subr.bf16.mxu0 %v4236
    %5001 = vmatpush1.bf16.msra.mxu0 %v4235
    %5002 = vmatprep.subr.bf16.mxu0 %v4244
    %5003 = vmatpush1.bf16.msra.mxu0 %v4243
    %5004 = vmatprep.subr.bf16.mxu0 %v4252
    %5005 = vmatpush1.bf16.msra.mxu0 %v4251
    %5006 = vmatprep.subr.bf16.mxu0 %v4260
    %5007 = vmatpush1.bf16.msra.mxu0 %v4259
    %5008 = vmatprep.subr.bf16.mxu0 %v4268
    %5009 = vmatpush1.bf16.msra.mxu0 %v4267
    %5010 = vmatprep.subr.bf16.mxu0 %v4276
    %5011 = vmatpush1.bf16.msra.mxu0 %v4275
    %5012 = vmatprep.subr.bf16.mxu0 %v4284
    %5013 = vmatpush1.bf16.msra.mxu0 %v4283
    %5014 = vmatprep.subr.bf16.mxu0 %v4292
    %5015 = vmatpush1.bf16.msra.mxu0 %v4291
    %5016 = vmatprep.subr.bf16.mxu0 %v4300
    %5017 = vmatpush1.bf16.msra.mxu0 %v4299
    %5018 = vmatprep.subr.bf16.mxu0 %v4308
    %5019 = vmatpush1.bf16.msra.mxu0 %v4307
    %5020 = vmatprep.subr.bf16.mxu0 %v4316
    %5021 = vmatpush1.bf16.msra.mxu0 %v4315
    %5022 = vmatprep.mubr.bf16.mxu0 %v4405
    %5023 = vmatmul.mubr.bf16.gmra.mrb[0].mxu0 %v4404
    %v5024 = vpop.f32.mrb[0].mxu0
    %v5025 = vadd.f32 %v4984, %v5024
    %v5026 = vpop.f32.mrb[0].mxu0
    %v5027 = vadd.f32 %v4986, %v5026
    %v5028 = vpop.f32.mrb[0].mxu0
    %v5029 = vpop.f32.mrb[0].mxu0
    %5030 = vdwg.mxu0
    %5031 = vmatprep.subr.bf16.mxu0 %v3686
    %5032 = vmatpush1.bf16.msra.mxu0 %v3685
    %5033 = vmatprep.subr.bf16.mxu0 %v3694
    %5034 = vmatpush1.bf16.msra.mxu0 %v3693
    %5035 = vmatprep.subr.bf16.mxu0 %v3702
    %5036 = vmatpush1.bf16.msra.mxu0 %v3701
    %5037 = vmatprep.subr.bf16.mxu0 %v3710
    %5038 = vmatpush1.bf16.msra.mxu0 %v3709
    %5039 = vmatprep.subr.bf16.mxu0 %v3718
    %5040 = vmatpush1.bf16.msra.mxu0 %v3717
    %5041 = vmatprep.subr.bf16.mxu0 %v3726
    %5042 = vmatpush1.bf16.msra.mxu0 %v3725
    %5043 = vmatprep.subr.bf16.mxu0 %v3734
    %5044 = vmatpush1.bf16.msra.mxu0 %v3733
    %5045 = vmatprep.subr.bf16.mxu0 %v3742
    %5046 = vmatpush1.bf16.msra.mxu0 %v3741
    %5047 = vmatprep.subr.bf16.mxu0 %v3750
    %5048 = vmatpush1.bf16.msra.mxu0 %v3749
    %5049 = vmatprep.subr.bf16.mxu0 %v3758
    %5050 = vmatpush1.bf16.msra.mxu0 %v3757
    %5051 = vmatprep.subr.bf16.mxu0 %v3766
    %5052 = vmatpush1.bf16.msra.mxu0 %v3765
    %5053 = vmatprep.subr.bf16.mxu0 %v3774
    %5054 = vmatpush1.bf16.msra.mxu0 %v3773
    %5055 = vmatprep.subr.bf16.mxu0 %v3782
    %5056 = vmatpush1.bf16.msra.mxu0 %v3781
    %5057 = vmatprep.subr.bf16.mxu0 %v3790
    %5058 = vmatpush1.bf16.msra.mxu0 %v3789
    %5059 = vmatprep.subr.bf16.mxu0 %v3798
    %5060 = vmatpush1.bf16.msra.mxu0 %v3797
    %5061 = vmatprep.subr.bf16.mxu0 %v3806
    %5062 = vmatpush1.bf16.msra.mxu0 %v3805
    %5063 = vmatprep.mubr.bf16.mxu0 %v4379
    %5064 = vmatmul.mubr.bf16.gmra.mrb[0].mxu0 %v4371
    %v5065 = vpop.f32.mrb[0].mxu0
    %v5066 = vadd.f32 %v4348, %v5065
    %v5067 = vpop.f32.mrb[0].mxu0
    %v5068 = vadd.f32 %v4352, %v5067
    %v5069 = vpop.f32.mrb[0].mxu0
    %v5070 = vpop.f32.mrb[0].mxu0
    %5071 = vdwg.mxu0
    %5072 = vmatprep.subr.bf16.mxu0 %v3814
    %5073 = vmatpush1.bf16.msra.mxu0 %v3813
    %5074 = vmatprep.subr.bf16.mxu0 %v3822
    %5075 = vmatpush1.bf16.msra.mxu0 %v3821
    %5076 = vmatprep.subr.bf16.mxu0 %v3830
    %5077 = vmatpush1.bf16.msra.mxu0 %v3829
    %5078 = vmatprep.subr.bf16.mxu0 %v3838
    %5079 = vmatpush1.bf16.msra.mxu0 %v3837
    %5080 = vmatprep.subr.bf16.mxu0 %v3846
    %5081 = vmatpush1.bf16.msra.mxu0 %v3845
    %5082 = vmatprep.subr.bf16.mxu0 %v3854
    %5083 = vmatpush1.bf16.msra.mxu0 %v3853
    %5084 = vmatprep.subr.bf16.mxu0 %v3862
    %5085 = vmatpush1.bf16.msra.mxu0 %v3861
    %5086 = vmatprep.subr.bf16.mxu0 %v3870
    %5087 = vmatpush1.bf16.msra.mxu0 %v3869
    %5088 = vmatprep.subr.bf16.mxu0 %v3878
    %5089 = vmatpush1.bf16.msra.mxu0 %v3877
    %5090 = vmatprep.subr.bf16.mxu0 %v3886
    %5091 = vmatpush1.bf16.msra.mxu0 %v3885
    %5092 = vmatprep.subr.bf16.mxu0 %v3894
    %5093 = vmatpush1.bf16.msra.mxu0 %v3893
    %5094 = vmatprep.subr.bf16.mxu0 %v3902
    %5095 = vmatpush1.bf16.msra.mxu0 %v3901
    %5096 = vmatprep.subr.bf16.mxu0 %v3910
    %5097 = vmatpush1.bf16.msra.mxu0 %v3909
    %5098 = vmatprep.subr.bf16.mxu0 %v3918
    %5099 = vmatpush1.bf16.msra.mxu0 %v3917
    %5100 = vmatprep.subr.bf16.mxu0 %v3926
    %5101 = vmatpush1.bf16.msra.mxu0 %v3925
    %5102 = vmatprep.subr.bf16.mxu0 %v3934
    %5103 = vmatpush1.bf16.msra.mxu0 %v3933
    %5104 = vmatprep.mubr.bf16.mxu0 %v4380
    %5105 = vmatmul.mubr.bf16.gmra.mrb[0].mxu0 %v4378
    %v5106 = vpop.f32.mrb[0].mxu0
    %v5107 = vadd.f32 %v5066, %v5106
    %v5108 = vpop.f32.mrb[0].mxu0
    %v5109 = vadd.f32 %v5068, %v5108
    %v5110 = vpop.f32.mrb[0].mxu0
    %v5111 = vpop.f32.mrb[0].mxu0
    %5112 = vdwg.mxu0
    %5113 = vmatprep.subr.bf16.mxu0 %v3942
    %5114 = vmatpush1.bf16.msra.mxu0 %v3941
    %5115 = vmatprep.subr.bf16.mxu0 %v3950
    %5116 = vmatpush1.bf16.msra.mxu0 %v3949
    %5117 = vmatprep.subr.bf16.mxu0 %v3958
    %5118 = vmatpush1.bf16.msra.mxu0 %v3957
    %5119 = vmatprep.subr.bf16.mxu0 %v3966
    %5120 = vmatpush1.bf16.msra.mxu0 %v3965
    %5121 = vmatprep.subr.bf16.mxu0 %v3974
    %5122 = vmatpush1.bf16.msra.mxu0 %v3973
    %5123 = vmatprep.subr.bf16.mxu0 %v3982
    %5124 = vmatpush1.bf16.msra.mxu0 %v3981
    %5125 = vmatprep.subr.bf16.mxu0 %v3990
    %5126 = vmatpush1.bf16.msra.mxu0 %v3989
    %5127 = vmatprep.subr.bf16.mxu0 %v3998
    %5128 = vmatpush1.bf16.msra.mxu0 %v3997
    %5129 = vmatprep.subr.bf16.mxu0 %v4006
    %5130 = vmatpush1.bf16.msra.mxu0 %v4005
    %5131 = vmatprep.subr.bf16.mxu0 %v4014
    %5132 = vmatpush1.bf16.msra.mxu0 %v4013
    %5133 = vmatprep.subr.bf16.mxu0 %v4022
    %5134 = vmatpush1.bf16.msra.mxu0 %v4021
    %5135 = vmatprep.subr.bf16.mxu0 %v4030
    %5136 = vmatpush1.bf16.msra.mxu0 %v4029
    %5137 = vmatprep.subr.bf16.mxu0 %v4038
    %5138 = vmatpush1.bf16.msra.mxu0 %v4037
    %5139 = vmatprep.subr.bf16.mxu0 %v4046
    %5140 = vmatpush1.bf16.msra.mxu0 %v4045
    %5141 = vmatprep.subr.bf16.mxu0 %v4054
    %5142 = vmatpush1.bf16.msra.mxu0 %v4053
    %5143 = vmatprep.subr.bf16.mxu0 %v4062
    %5144 = vmatpush1.bf16.msra.mxu0 %v4061
    %5145 = vmatprep.mubr.bf16.mxu0 %v4396
    %5146 = vmatmul.mubr.bf16.gmra.mrb[0].mxu0 %v4388
    %v5147 = vpop.f32.mrb[0].mxu0
    %v5148 = vadd.f32 %v5107, %v5147
    %v5149 = vpop.f32.mrb[0].mxu0
    %v5150 = vadd.f32 %v5109, %v5149
    %v5151 = vpop.f32.mrb[0].mxu0
    %v5152 = vpop.f32.mrb[0].mxu0
    %5153 = vdwg.mxu0
    %5154 = vmatprep.subr.bf16.mxu0 %v4070
    %5155 = vmatpush1.bf16.msra.mxu0 %v4069
    %5156 = vmatprep.subr.bf16.mxu0 %v4078
    %5157 = vmatpush1.bf16.msra.mxu0 %v4077
    %5158 = vmatprep.subr.bf16.mxu0 %v4086
    %5159 = vmatpush1.bf16.msra.mxu0 %v4085
    %5160 = vmatprep.subr.bf16.mxu0 %v4094
    %5161 = vmatpush1.bf16.msra.mxu0 %v4093
    %5162 = vmatprep.subr.bf16.mxu0 %v4102
    %5163 = vmatpush1.bf16.msra.mxu0 %v4101
    %5164 = vmatprep.subr.bf16.mxu0 %v4110
    %5165 = vmatpush1.bf16.msra.mxu0 %v4109
    %5166 = vmatprep.subr.bf16.mxu0 %v4118
    %5167 = vmatpush1.bf16.msra.mxu0 %v4117
    %5168 = vmatprep.subr.bf16.mxu0 %v4126
    %5169 = vmatpush1.bf16.msra.mxu0 %v4125
    %5170 = vmatprep.subr.bf16.mxu0 %v4134
    %5171 = vmatpush1.bf16.msra.mxu0 %v4133
    %5172 = vmatprep.subr.bf16.mxu0 %v4142
    %5173 = vmatpush1.bf16.msra.mxu0 %v4141
    %5174 = vmatprep.subr.bf16.mxu0 %v4150
    %5175 = vmatpush1.bf16.msra.mxu0 %v4149
    %5176 = vmatprep.subr.bf16.mxu0 %v4158
    %5177 = vmatpush1.bf16.msra.mxu0 %v4157
    %5178 = vmatprep.subr.bf16.mxu0 %v4166
    %5179 = vmatpush1.bf16.msra.mxu0 %v4165
    %5180 = vmatprep.subr.bf16.mxu0 %v4174
    %5181 = vmatpush1.bf16.msra.mxu0 %v4173
    %5182 = vmatprep.subr.bf16.mxu0 %v4182
    %5183 = vmatpush1.bf16.msra.mxu0 %v4181
    %5184 = vmatprep.subr.bf16.mxu0 %v4190
    %5185 = vmatpush1.bf16.msra.mxu0 %v4189
    %5186 = vmatprep.mubr.bf16.mxu0 %v4397
    %5187 = vmatmul.mubr.bf16.gmra.mrb[0].mxu0 %v4395
    %v5188 = vpop.f32.mrb[0].mxu0
    %v5189 = vadd.f32 %v5148, %v5188
    %v5190 = vpop.f32.mrb[0].mxu0
    %v5191 = vadd.f32 %v5150, %v5190
    %v5192 = vpop.f32.mrb[0].mxu0
    %v5193 = vpop.f32.mrb[0].mxu0
    %5194 = vdwg.mxu0
    %5195 = vmatprep.subr.bf16.mxu0 %v4198
    %5196 = vmatpush1.bf16.msra.mxu0 %v4197
    %5197 = vmatprep.subr.bf16.mxu0 %v4206
    %5198 = vmatpush1.bf16.msra.mxu0 %v4205
    %5199 = vmatprep.subr.bf16.mxu0 %v4214
    %5200 = vmatpush1.bf16.msra.mxu0 %v4213
    %5201 = vmatprep.subr.bf16.mxu0 %v4222
    %5202 = vmatpush1.bf16.msra.mxu0 %v4221
    %5203 = vmatprep.subr.bf16.mxu0 %v4230
    %5204 = vmatpush1.bf16.msra.mxu0 %v4229
    %5205 = vmatprep.subr.bf16.mxu0 %v4238
    %5206 = vmatpush1.bf16.msra.mxu0 %v4237
    %5207 = vmatprep.subr.bf16.mxu0 %v4246
    %5208 = vmatpush1.bf16.msra.mxu0 %v4245
    %5209 = vmatprep.subr.bf16.mxu0 %v4254
    %5210 = vmatpush1.bf16.msra.mxu0 %v4253
    %5211 = vmatprep.subr.bf16.mxu0 %v4262
    %5212 = vmatpush1.bf16.msra.mxu0 %v4261
    %5213 = vmatprep.subr.bf16.mxu0 %v4270
    %5214 = vmatpush1.bf16.msra.mxu0 %v4269
    %5215 = vmatprep.subr.bf16.mxu0 %v4278
    %5216 = vmatpush1.bf16.msra.mxu0 %v4277
    %5217 = vmatprep.subr.bf16.mxu0 %v4286
    %5218 = vmatpush1.bf16.msra.mxu0 %v4285
    %5219 = vmatprep.subr.bf16.mxu0 %v4294
    %5220 = vmatpush1.bf16.msra.mxu0 %v4293
    %5221 = vmatprep.subr.bf16.mxu0 %v4302
    %5222 = vmatpush1.bf16.msra.mxu0 %v4301
    %5223 = vmatprep.subr.bf16.mxu0 %v4310
    %5224 = vmatpush1.bf16.msra.mxu0 %v4309
    %5225 = vmatprep.subr.bf16.mxu0 %v4318
    %5226 = vmatpush1.bf16.msra.mxu0 %v4317
    %5227 = vmatprep.mubr.bf16.mxu0 %v4405
    %5228 = vmatmul.mubr.bf16.gmra.mrb[0].mxu0 %v4404
    %v5229 = vpop.f32.mrb[0].mxu0
    %v5230 = vadd.f32 %v5189, %v5229
    %v5231 = vpop.f32.mrb[0].mxu0
    %v5232 = vadd.f32 %v5191, %v5231
    %v5233 = vpop.f32.mrb[0].mxu0
    %v5234 = vpop.f32.mrb[0].mxu0
    %5235 = vdwg.mxu0
    %vm5236 = vcmp.ge.f32.partialorder %v4615, 0.0
    %vm5237 = vcmp.ge.f32.partialorder %v4617, 0.0
    %vm5238 = vcmp.ge.f32.partialorder %v4820, 0.0
    %vm5239 = vcmp.ge.f32.partialorder %v4822, 0.0
    %vm5240 = vcmp.ge.f32.partialorder %v5025, 0.0
    %vm5241 = vcmp.ge.f32.partialorder %v5027, 0.0
    %vm5242 = vcmp.ge.f32.partialorder %v5230, 0.0
    %vm5243 = vcmp.ge.f32.partialorder %v5232, 0.0
    %v5244 = vmul.f32 %v4615, 0.01
    %v5245 = vmul.f32 %v4617, 0.01
    %v5246 = vmul.f32 %v4820, 0.01
    %v5247 = vmul.f32 %v4822, 0.01
    %v5248 = vmul.f32 %v5025, 0.01
    %v5249 = vmul.f32 %v5027, 0.01
    %v5250 = vmul.f32 %v5230, 0.01
    %v5251 = vmul.f32 %v5232, 0.01
    %v5252 = vsel %vm5236, %v4615, %v5244
    %v5253 = vsel %vm5237, %v4617, %v5245
    %v5254 = vsel %vm5238, %v4820, %v5246
    %v5255 = vsel %vm5239, %v4822, %v5247
    %v5256 = vsel %vm5240, %v5025, %v5248
    %v5257 = vsel %vm5241, %v5027, %v5249
    %v5258 = vsel %vm5242, %v5230, %v5250
    %v5259 = vsel %vm5243, %v5232, %v5251
    %v5260 = vld [vmem:[%s10] sm:$0xff]
    %v5261 = vld [vmem:[%s10 + $0x8] sm:$0xff]
    %v5262 = vld [vmem:[%s10 + $0x10] sm:$0xff]
    %v5263 = vld [vmem:[%s10 + $0x18] sm:$0xff]
    %v5264 = vld [vmem:[%s10 + $0x20] sm:$0xff]
    %v5265 = vld [vmem:[%s10 + $0x28] sm:$0xff]
    %v5266 = vld [vmem:[%s10 + $0x30] sm:$0xff]
    %v5267 = vld [vmem:[%s10 + $0x38] sm:$0xff]
    %v5268 = vld [vmem:[%s10 + $0x40] sm:$0xff]
    %v5269 = vld [vmem:[%s10 + $0x48] sm:$0xff]
    %v5270 = vld [vmem:[%s10 + $0x50] sm:$0xff]
    %v5271 = vld [vmem:[%s10 + $0x58] sm:$0xff]
    %v5272 = vld [vmem:[%s10 + $0x60] sm:$0xff]
    %v5273 = vld [vmem:[%s10 + $0x68] sm:$0xff]
    %v5274 = vld [vmem:[%s10 + $0x70] sm:$0xff]
    %v5275 = vld [vmem:[%s10 + $0x78] sm:$0xff]
    %v5276 = vld [vmem:[%s10 + $0x80] sm:$0xff]
    %v5277 = vld [vmem:[%s10 + $0x88] sm:$0xff]
    %v5278 = vld [vmem:[%s10 + $0x90] sm:$0xff]
    %v5279 = vld [vmem:[%s10 + $0x98] sm:$0xff]
    %v5280 = vld [vmem:[%s10 + $0xa0] sm:$0xff]
    %v5281 = vld [vmem:[%s10 + $0xa8] sm:$0xff]
    %v5282 = vld [vmem:[%s10 + $0xb0] sm:$0xff]
    %v5283 = vld [vmem:[%s10 + $0xb8] sm:$0xff]
    %v5284 = vld [vmem:[%s10 + $0xc0] sm:$0xff]
    %v5285 = vld [vmem:[%s10 + $0xc8] sm:$0xff]
    %v5286 = vld [vmem:[%s10 + $0xd0] sm:$0xff]
    %v5287 = vld [vmem:[%s10 + $0xd8] sm:$0xff]
    %v5288 = vld [vmem:[%s10 + $0xe0] sm:$0xff]
    %v5289 = vld [vmem:[%s10 + $0xe8] sm:$0xff]
    %v5290 = vld [vmem:[%s10 + $0xf0] sm:$0xff]
    %v5291 = vld [vmem:[%s10 + $0xf8] sm:$0xff]
    %v5292 = vld [vmem:[%s10 + $0x100] sm:$0xff]
    %v5293 = vld [vmem:[%s10 + $0x108] sm:$0xff]
    %v5294 = vld [vmem:[%s10 + $0x110] sm:$0xff]
    %v5295 = vld [vmem:[%s10 + $0x118] sm:$0xff]
    %v5296 = vld [vmem:[%s10 + $0x120] sm:$0xff]
    %v5297 = vld [vmem:[%s10 + $0x128] sm:$0xff]
    %v5298 = vld [vmem:[%s10 + $0x130] sm:$0xff]
    %v5299 = vld [vmem:[%s10 + $0x138] sm:$0xff]
    %v5300 = vld [vmem:[%s10 + $0x140] sm:$0xff]
    %v5301 = vld [vmem:[%s10 + $0x148] sm:$0xff]
    %v5302 = vld [vmem:[%s10 + $0x150] sm:$0xff]
    %v5303 = vld [vmem:[%s10 + $0x158] sm:$0xff]
    %v5304 = vld [vmem:[%s10 + $0x160] sm:$0xff]
    %v5305 = vld [vmem:[%s10 + $0x168] sm:$0xff]
    %v5306 = vld [vmem:[%s10 + $0x170] sm:$0xff]
    %v5307 = vld [vmem:[%s10 + $0x178] sm:$0xff]
    %v5308 = vld [vmem:[%s10 + $0x180] sm:$0xff]
    %v5309 = vld [vmem:[%s10 + $0x188] sm:$0xff]
    %v5310 = vld [vmem:[%s10 + $0x190] sm:$0xff]
    %v5311 = vld [vmem:[%s10 + $0x198] sm:$0xff]
    %v5312 = vld [vmem:[%s10 + $0x1a0] sm:$0xff]
    %v5313 = vld [vmem:[%s10 + $0x1a8] sm:$0xff]
    %v5314 = vld [vmem:[%s10 + $0x1b0] sm:$0xff]
    %v5315 = vld [vmem:[%s10 + $0x1b8] sm:$0xff]
    %v5316 = vld [vmem:[%s10 + $0x1c0] sm:$0xff]
    %v5317 = vld [vmem:[%s10 + $0x1c8] sm:$0xff]
    %v5318 = vld [vmem:[%s10 + $0x1d0] sm:$0xff]
    %v5319 = vld [vmem:[%s10 + $0x1d8] sm:$0xff]
    %v5320 = vld [vmem:[%s10 + $0x1e0] sm:$0xff]
    %v5321 = vld [vmem:[%s10 + $0x1e8] sm:$0xff]
    %v5322 = vld [vmem:[%s10 + $0x1f0] sm:$0xff]
    %v5323 = vld [vmem:[%s10 + $0x1f8] sm:$0xff]
    %v5324 = vld [vmem:[%s10 + $0x200] sm:$0xff]
    %v5325 = vld [vmem:[%s10 + $0x208] sm:$0xff]
    %v5326 = vld [vmem:[%s10 + $0x210] sm:$0xff]
    %v5327 = vld [vmem:[%s10 + $0x218] sm:$0xff]
    %v5328 = vld [vmem:[%s10 + $0x220] sm:$0xff]
    %v5329 = vld [vmem:[%s10 + $0x228] sm:$0xff]
    %v5330 = vld [vmem:[%s10 + $0x230] sm:$0xff]
    %v5331 = vld [vmem:[%s10 + $0x238] sm:$0xff]
    %v5332 = vld [vmem:[%s10 + $0x240] sm:$0xff]
    %v5333 = vld [vmem:[%s10 + $0x248] sm:$0xff]
    %v5334 = vld [vmem:[%s10 + $0x250] sm:$0xff]
    %v5335 = vld [vmem:[%s10 + $0x258] sm:$0xff]
    %v5336 = vld [vmem:[%s10 + $0x260] sm:$0xff]
    %v5337 = vld [vmem:[%s10 + $0x268] sm:$0xff]
    %v5338 = vld [vmem:[%s10 + $0x270] sm:$0xff]
    %v5339 = vld [vmem:[%s10 + $0x278] sm:$0xff]
    %v5340 = vld [vmem:[%s10 + $0x280] sm:$0xff]
    %v5341 = vld [vmem:[%s10 + $0x288] sm:$0xff]
    %v5342 = vld [vmem:[%s10 + $0x290] sm:$0xff]
    %v5343 = vld [vmem:[%s10 + $0x298] sm:$0xff]
    %v5344 = vld [vmem:[%s10 + $0x2a0] sm:$0xff]
    %v5345 = vld [vmem:[%s10 + $0x2a8] sm:$0xff]
    %v5346 = vld [vmem:[%s10 + $0x2b0] sm:$0xff]
    %v5347 = vld [vmem:[%s10 + $0x2b8] sm:$0xff]
    %v5348 = vld [vmem:[%s10 + $0x2c0] sm:$0xff]
    %v5349 = vld [vmem:[%s10 + $0x2c8] sm:$0xff]
    %v5350 = vld [vmem:[%s10 + $0x2d0] sm:$0xff]
    %v5351 = vld [vmem:[%s10 + $0x2d8] sm:$0xff]
    %v5352 = vld [vmem:[%s10 + $0x2e0] sm:$0xff]
    %v5353 = vld [vmem:[%s10 + $0x2e8] sm:$0xff]
    %v5354 = vld [vmem:[%s10 + $0x2f0] sm:$0xff]
    %v5355 = vld [vmem:[%s10 + $0x2f8] sm:$0xff]
    %v5356 = vld [vmem:[%s10 + $0x300] sm:$0xff]
    %v5357 = vld [vmem:[%s10 + $0x308] sm:$0xff]
    %v5358 = vld [vmem:[%s10 + $0x310] sm:$0xff]
    %v5359 = vld [vmem:[%s10 + $0x318] sm:$0xff]
    %v5360 = vld [vmem:[%s10 + $0x320] sm:$0xff]
    %v5361 = vld [vmem:[%s10 + $0x328] sm:$0xff]
    %v5362 = vld [vmem:[%s10 + $0x330] sm:$0xff]
    %v5363 = vld [vmem:[%s10 + $0x338] sm:$0xff]
    %v5364 = vld [vmem:[%s10 + $0x340] sm:$0xff]
    %v5365 = vld [vmem:[%s10 + $0x348] sm:$0xff]
    %v5366 = vld [vmem:[%s10 + $0x350] sm:$0xff]
    %v5367 = vld [vmem:[%s10 + $0x358] sm:$0xff]
    %v5368 = vld [vmem:[%s10 + $0x360] sm:$0xff]
    %v5369 = vld [vmem:[%s10 + $0x368] sm:$0xff]
    %v5370 = vld [vmem:[%s10 + $0x370] sm:$0xff]
    %v5371 = vld [vmem:[%s10 + $0x378] sm:$0xff]
    %v5372 = vld [vmem:[%s10 + $0x380] sm:$0xff]
    %v5373 = vld [vmem:[%s10 + $0x388] sm:$0xff]
    %v5374 = vld [vmem:[%s10 + $0x390] sm:$0xff]
    %v5375 = vld [vmem:[%s10 + $0x398] sm:$0xff]
    %v5376 = vld [vmem:[%s10 + $0x3a0] sm:$0xff]
    %v5377 = vld [vmem:[%s10 + $0x3a8] sm:$0xff]
    %v5378 = vld [vmem:[%s10 + $0x3b0] sm:$0xff]
    %v5379 = vld [vmem:[%s10 + $0x3b8] sm:$0xff]
    %v5380 = vld [vmem:[%s10 + $0x3c0] sm:$0xff]
    %v5381 = vld [vmem:[%s10 + $0x3c8] sm:$0xff]
    %v5382 = vld [vmem:[%s10 + $0x3d0] sm:$0xff]
    %v5383 = vld [vmem:[%s10 + $0x3d8] sm:$0xff]
    %v5384 = vld [vmem:[%s10 + $0x3e0] sm:$0xff]
    %v5385 = vld [vmem:[%s10 + $0x3e8] sm:$0xff]
    %v5386 = vld [vmem:[%s10 + $0x3f0] sm:$0xff]
    %v5387 = vld [vmem:[%s10 + $0x3f8] sm:$0xff]
    %v5388 = vld [vmem:[#allocation20] sm:$0x1]
    %v5390 = vlaneseq
    %v5391 = vshrl.u32 %v5390, 7
    %v5392 = vsub.s32 0, %v5391
    %v5393 = vrot.slane %v5388, %v5392
    %5395 = vmatprep.subr.mxu0 0.0
    %5396 = vmatpush1.msra.mxu0 %v5260
    %5397 = vmatprep.subr.mxu0 0.0
    %5398 = vmatpush1.msra.mxu0 %v5261
    %5399 = vmatprep.subr.mxu0 0.0
    %5400 = vmatpush1.msra.mxu0 %v5262
    %5401 = vmatprep.subr.mxu0 0.0
    %5402 = vmatpush1.msra.mxu0 %v5263
    %5403 = vmatprep.subr.mxu0 0.0
    %5404 = vmatpush1.msra.mxu0 %v5264
    %5405 = vmatprep.subr.mxu0 0.0
    %5406 = vmatpush1.msra.mxu0 %v5265
    %5407 = vmatprep.subr.mxu0 0.0
    %5408 = vmatpush1.msra.mxu0 %v5266
    %5409 = vmatprep.subr.mxu0 0.0
    %5410 = vmatpush1.msra.mxu0 %v5267
    %5411 = vmatprep.subr.mxu0 0.0
    %5412 = vmatpush1.msra.mxu0 %v5268
    %5413 = vmatprep.subr.mxu0 0.0
    %5414 = vmatpush1.msra.mxu0 %v5269
    %5415 = vmatprep.subr.mxu0 0.0
    %5416 = vmatpush1.msra.mxu0 %v5270
    %5417 = vmatprep.subr.mxu0 0.0
    %5418 = vmatpush1.msra.mxu0 %v5271
    %5419 = vmatprep.subr.mxu0 0.0
    %5420 = vmatpush1.msra.mxu0 %v5272
    %5421 = vmatprep.subr.mxu0 0.0
    %5422 = vmatpush1.msra.mxu0 %v5273
    %5423 = vmatprep.subr.mxu0 0.0
    %5424 = vmatpush1.msra.mxu0 %v5274
    %5425 = vmatprep.subr.mxu0 0.0
    %5426 = vmatpush1.msra.mxu0 %v5275
    %5427 = vmatprep.subr.mxu0 0.0
    %5428 = vmatpush1.msra.mxu0 %v5276
    %5429 = vmatprep.subr.mxu0 0.0
    %5430 = vmatpush1.msra.mxu0 %v5277
    %5431 = vmatprep.subr.mxu0 0.0
    %5432 = vmatpush1.msra.mxu0 %v5278
    %5433 = vmatprep.subr.mxu0 0.0
    %5434 = vmatpush1.msra.mxu0 %v5279
    %5435 = vmatprep.subr.mxu0 0.0
    %5436 = vmatpush1.msra.mxu0 %v5280
    %5437 = vmatprep.subr.mxu0 0.0
    %5438 = vmatpush1.msra.mxu0 %v5281
    %5439 = vmatprep.subr.mxu0 0.0
    %5440 = vmatpush1.msra.mxu0 %v5282
    %5441 = vmatprep.subr.mxu0 0.0
    %5442 = vmatpush1.msra.mxu0 %v5283
    %5443 = vmatprep.subr.mxu0 0.0
    %5444 = vmatpush1.msra.mxu0 %v5284
    %5445 = vmatprep.subr.mxu0 0.0
    %5446 = vmatpush1.msra.mxu0 %v5285
    %5447 = vmatprep.subr.mxu0 0.0
    %5448 = vmatpush1.msra.mxu0 %v5286
    %5449 = vmatprep.subr.mxu0 0.0
    %5450 = vmatpush1.msra.mxu0 %v5287
    %5451 = vmatprep.subr.mxu0 0.0
    %5452 = vmatpush1.msra.mxu0 %v5288
    %5453 = vmatprep.subr.mxu0 0.0
    %5454 = vmatpush1.msra.mxu0 %v5289
    %5455 = vmatprep.subr.mxu0 0.0
    %5456 = vmatpush1.msra.mxu0 %v5290
    %5457 = vmatprep.subr.mxu0 0.0
    %5458 = vmatpush1.msra.mxu0 %v5291
    %5459 = vmatprep.mubr.f32.mxu0 %v5253
    %5460 = vmatmul.mubr.f32.gmra.mrb[0].mxu0 %v5252
    %v5461 = vpop.f32.mrb[0].mxu0
    %v5462 = vadd.f32 %v5393, %v5461
    %v5463 = vpop.f32.mrb[0].mxu0
    %5464 = vdwg.mxu0
    %5465 = vmatprep.subr.mxu0 0.0
    %5466 = vmatpush1.msra.mxu0 %v5292
    %5467 = vmatprep.subr.mxu0 0.0
    %5468 = vmatpush1.msra.mxu0 %v5293
    %5469 = vmatprep.subr.mxu0 0.0
    %5470 = vmatpush1.msra.mxu0 %v5294
    %5471 = vmatprep.subr.mxu0 0.0
    %5472 = vmatpush1.msra.mxu0 %v5295
    %5473 = vmatprep.subr.mxu0 0.0
    %5474 = vmatpush1.msra.mxu0 %v5296
    %5475 = vmatprep.subr.mxu0 0.0
    %5476 = vmatpush1.msra.mxu0 %v5297
    %5477 = vmatprep.subr.mxu0 0.0
    %5478 = vmatpush1.msra.mxu0 %v5298
    %5479 = vmatprep.subr.mxu0 0.0
    %5480 = vmatpush1.msra.mxu0 %v5299
    %5481 = vmatprep.subr.mxu0 0.0
    %5482 = vmatpush1.msra.mxu0 %v5300
    %5483 = vmatprep.subr.mxu0 0.0
    %5484 = vmatpush1.msra.mxu0 %v5301
    %5485 = vmatprep.subr.mxu0 0.0
    %5486 = vmatpush1.msra.mxu0 %v5302
    %5487 = vmatprep.subr.mxu0 0.0
    %5488 = vmatpush1.msra.mxu0 %v5303
    %5489 = vmatprep.subr.mxu0 0.0
    %5490 = vmatpush1.msra.mxu0 %v5304
    %5491 = vmatprep.subr.mxu0 0.0
    %5492 = vmatpush1.msra.mxu0 %v5305
    %5493 = vmatprep.subr.mxu0 0.0
    %5494 = vmatpush1.msra.mxu0 %v5306
    %5495 = vmatprep.subr.mxu0 0.0
    %5496 = vmatpush1.msra.mxu0 %v5307
    %5497 = vmatprep.subr.mxu0 0.0
    %5498 = vmatpush1.msra.mxu0 %v5308
    %5499 = vmatprep.subr.mxu0 0.0
    %5500 = vmatpush1.msra.mxu0 %v5309
    %5501 = vmatprep.subr.mxu0 0.0
    %5502 = vmatpush1.msra.mxu0 %v5310
    %5503 = vmatprep.subr.mxu0 0.0
    %5504 = vmatpush1.msra.mxu0 %v5311
    %5505 = vmatprep.subr.mxu0 0.0
    %5506 = vmatpush1.msra.mxu0 %v5312
    %5507 = vmatprep.subr.mxu0 0.0
    %5508 = vmatpush1.msra.mxu0 %v5313
    %5509 = vmatprep.subr.mxu0 0.0
    %5510 = vmatpush1.msra.mxu0 %v5314
    %5511 = vmatprep.subr.mxu0 0.0
    %5512 = vmatpush1.msra.mxu0 %v5315
    %5513 = vmatprep.subr.mxu0 0.0
    %5514 = vmatpush1.msra.mxu0 %v5316
    %5515 = vmatprep.subr.mxu0 0.0
    %5516 = vmatpush1.msra.mxu0 %v5317
    %5517 = vmatprep.subr.mxu0 0.0
    %5518 = vmatpush1.msra.mxu0 %v5318
    %5519 = vmatprep.subr.mxu0 0.0
    %5520 = vmatpush1.msra.mxu0 %v5319
    %5521 = vmatprep.subr.mxu0 0.0
    %5522 = vmatpush1.msra.mxu0 %v5320
    %5523 = vmatprep.subr.mxu0 0.0
    %5524 = vmatpush1.msra.mxu0 %v5321
    %5525 = vmatprep.subr.mxu0 0.0
    %5526 = vmatpush1.msra.mxu0 %v5322
    %5527 = vmatprep.subr.mxu0 0.0
    %5528 = vmatpush1.msra.mxu0 %v5323
    %5529 = vmatprep.mubr.f32.mxu0 %v5255
    %5530 = vmatmul.mubr.f32.gmra.mrb[0].mxu0 %v5254
    %v5531 = vpop.f32.mrb[0].mxu0
    %v5532 = vadd.f32 %v5462, %v5531
    %v5533 = vpop.f32.mrb[0].mxu0
    %5534 = vdwg.mxu0
    %5535 = vmatprep.subr.mxu0 0.0
    %5536 = vmatpush1.msra.mxu0 %v5324
    %5537 = vmatprep.subr.mxu0 0.0
    %5538 = vmatpush1.msra.mxu0 %v5325
    %5539 = vmatprep.subr.mxu0 0.0
    %5540 = vmatpush1.msra.mxu0 %v5326
    %5541 = vmatprep.subr.mxu0 0.0
    %5542 = vmatpush1.msra.mxu0 %v5327
    %5543 = vmatprep.subr.mxu0 0.0
    %5544 = vmatpush1.msra.mxu0 %v5328
    %5545 = vmatprep.subr.mxu0 0.0
    %5546 = vmatpush1.msra.mxu0 %v5329
    %5547 = vmatprep.subr.mxu0 0.0
    %5548 = vmatpush1.msra.mxu0 %v5330
    %5549 = vmatprep.subr.mxu0 0.0
    %5550 = vmatpush1.msra.mxu0 %v5331
    %5551 = vmatprep.subr.mxu0 0.0
    %5552 = vmatpush1.msra.mxu0 %v5332
    %5553 = vmatprep.subr.mxu0 0.0
    %5554 = vmatpush1.msra.mxu0 %v5333
    %5555 = vmatprep.subr.mxu0 0.0
    %5556 = vmatpush1.msra.mxu0 %v5334
    %5557 = vmatprep.subr.mxu0 0.0
    %5558 = vmatpush1.msra.mxu0 %v5335
    %5559 = vmatprep.subr.mxu0 0.0
    %5560 = vmatpush1.msra.mxu0 %v5336
    %5561 = vmatprep.subr.mxu0 0.0
    %5562 = vmatpush1.msra.mxu0 %v5337
    %5563 = vmatprep.subr.mxu0 0.0
    %5564 = vmatpush1.msra.mxu0 %v5338
    %5565 = vmatprep.subr.mxu0 0.0
    %5566 = vmatpush1.msra.mxu0 %v5339
    %5567 = vmatprep.subr.mxu0 0.0
    %5568 = vmatpush1.msra.mxu0 %v5340
    %5569 = vmatprep.subr.mxu0 0.0
    %5570 = vmatpush1.msra.mxu0 %v5341
    %5571 = vmatprep.subr.mxu0 0.0
    %5572 = vmatpush1.msra.mxu0 %v5342
    %5573 = vmatprep.subr.mxu0 0.0
    %5574 = vmatpush1.msra.mxu0 %v5343
    %5575 = vmatprep.subr.mxu0 0.0
    %5576 = vmatpush1.msra.mxu0 %v5344
    %5577 = vmatprep.subr.mxu0 0.0
    %5578 = vmatpush1.msra.mxu0 %v5345
    %5579 = vmatprep.subr.mxu0 0.0
    %5580 = vmatpush1.msra.mxu0 %v5346
    %5581 = vmatprep.subr.mxu0 0.0
    %5582 = vmatpush1.msra.mxu0 %v5347
    %5583 = vmatprep.subr.mxu0 0.0
    %5584 = vmatpush1.msra.mxu0 %v5348
    %5585 = vmatprep.subr.mxu0 0.0
    %5586 = vmatpush1.msra.mxu0 %v5349
    %5587 = vmatprep.subr.mxu0 0.0
    %5588 = vmatpush1.msra.mxu0 %v5350
    %5589 = vmatprep.subr.mxu0 0.0
    %5590 = vmatpush1.msra.mxu0 %v5351
    %5591 = vmatprep.subr.mxu0 0.0
    %5592 = vmatpush1.msra.mxu0 %v5352
    %5593 = vmatprep.subr.mxu0 0.0
    %5594 = vmatpush1.msra.mxu0 %v5353
    %5595 = vmatprep.subr.mxu0 0.0
    %5596 = vmatpush1.msra.mxu0 %v5354
    %5597 = vmatprep.subr.mxu0 0.0
    %5598 = vmatpush1.msra.mxu0 %v5355
    %5599 = vmatprep.mubr.f32.mxu0 %v5257
    %5600 = vmatmul.mubr.f32.gmra.mrb[0].mxu0 %v5256
    %v5601 = vpop.f32.mrb[0].mxu0
    %v5602 = vadd.f32 %v5532, %v5601
    %v5603 = vpop.f32.mrb[0].mxu0
    %5604 = vdwg.mxu0
    %5605 = vmatprep.subr.mxu0 0.0
    %5606 = vmatpush1.msra.mxu0 %v5356
    %5607 = vmatprep.subr.mxu0 0.0
    %5608 = vmatpush1.msra.mxu0 %v5357
    %5609 = vmatprep.subr.mxu0 0.0
    %5610 = vmatpush1.msra.mxu0 %v5358
    %5611 = vmatprep.subr.mxu0 0.0
    %5612 = vmatpush1.msra.mxu0 %v5359
    %5613 = vmatprep.subr.mxu0 0.0
    %5614 = vmatpush1.msra.mxu0 %v5360
    %5615 = vmatprep.subr.mxu0 0.0
    %5616 = vmatpush1.msra.mxu0 %v5361
    %5617 = vmatprep.subr.mxu0 0.0
    %5618 = vmatpush1.msra.mxu0 %v5362
    %5619 = vmatprep.subr.mxu0 0.0
    %5620 = vmatpush1.msra.mxu0 %v5363
    %5621 = vmatprep.subr.mxu0 0.0
    %5622 = vmatpush1.msra.mxu0 %v5364
    %5623 = vmatprep.subr.mxu0 0.0
    %5624 = vmatpush1.msra.mxu0 %v5365
    %5625 = vmatprep.subr.mxu0 0.0
    %5626 = vmatpush1.msra.mxu0 %v5366
    %5627 = vmatprep.subr.mxu0 0.0
    %5628 = vmatpush1.msra.mxu0 %v5367
    %5629 = vmatprep.subr.mxu0 0.0
    %5630 = vmatpush1.msra.mxu0 %v5368
    %5631 = vmatprep.subr.mxu0 0.0
    %5632 = vmatpush1.msra.mxu0 %v5369
    %5633 = vmatprep.subr.mxu0 0.0
    %5634 = vmatpush1.msra.mxu0 %v5370
    %5635 = vmatprep.subr.mxu0 0.0
    %5636 = vmatpush1.msra.mxu0 %v5371
    %5637 = vmatprep.subr.mxu0 0.0
    %5638 = vmatpush1.msra.mxu0 %v5372
    %5639 = vmatprep.subr.mxu0 0.0
    %5640 = vmatpush1.msra.mxu0 %v5373
    %5641 = vmatprep.subr.mxu0 0.0
    %5642 = vmatpush1.msra.mxu0 %v5374
    %5643 = vmatprep.subr.mxu0 0.0
    %5644 = vmatpush1.msra.mxu0 %v5375
    %5645 = vmatprep.subr.mxu0 0.0
    %5646 = vmatpush1.msra.mxu0 %v5376
    %5647 = vmatprep.subr.mxu0 0.0
    %5648 = vmatpush1.msra.mxu0 %v5377
    %5649 = vmatprep.subr.mxu0 0.0
    %5650 = vmatpush1.msra.mxu0 %v5378
    %5651 = vmatprep.subr.mxu0 0.0
    %5652 = vmatpush1.msra.mxu0 %v5379
    %5653 = vmatprep.subr.mxu0 0.0
    %5654 = vmatpush1.msra.mxu0 %v5380
    %5655 = vmatprep.subr.mxu0 0.0
    %5656 = vmatpush1.msra.mxu0 %v5381
    %5657 = vmatprep.subr.mxu0 0.0
    %5658 = vmatpush1.msra.mxu0 %v5382
    %5659 = vmatprep.subr.mxu0 0.0
    %5660 = vmatpush1.msra.mxu0 %v5383
    %5661 = vmatprep.subr.mxu0 0.0
    %5662 = vmatpush1.msra.mxu0 %v5384
    %5663 = vmatprep.subr.mxu0 0.0
    %5664 = vmatpush1.msra.mxu0 %v5385
    %5665 = vmatprep.subr.mxu0 0.0
    %5666 = vmatpush1.msra.mxu0 %v5386
    %5667 = vmatprep.subr.mxu0 0.0
    %5668 = vmatpush1.msra.mxu0 %v5387
    %5669 = vmatprep.mubr.f32.mxu0 %v5259
    %5670 = vmatmul.mubr.f32.gmra.mrb[0].mxu0 %v5258
    %v5671 = vpop.f32.mrb[0].mxu0
    %v5672 = vadd.f32 %v5602, %v5671
    %v5673 = vpop.f32.mrb[0].mxu0
    %5674 = vdwg.mxu0
    %vm5675 = vcmask 93184
    %5676 = vst.msk [vmem:[#allocation22] sm:$0xf] %vm5675, %v5672
    // Predicated region
    $region78: #{forward.1} parent=1 // pred_check
      _
    $region79: #{forward.1} parent=1 // pred_check_branch
      %5678 = sbr.rel (0) target = $region81
    $region80: #{forward.1} parent=1 // pred_region
      %s5680 = ssub.s32 64, 64
      %5681 = vsyncadd [#allocation10], %s5680
      %s5683 = sshll.u32 [#allocation22], 4
      %s5684 = int_to_ptr.vmem [resolvable:$true] %s5683
      %5686 = dma.vmem_to_hbm [thread:$0]  %s5684, 64, %s12, [#allocation10]
    $region81: #{forward.1} parent=1 // pred_fallthru
      _
    // Predicated region
    $region82: #{forward.1} parent=1 // pred_check
      _
    $region83: #{forward.1} parent=1 // pred_check_branch
      %5688 = sbr.rel (0) target = $region85
    $region84: #{forward.1} parent=1 // pred_region
      %5689 = dma.done [#allocation10], 64
    $region85: #{forward.1} parent=1 // pred_fallthru
      _
    %5690 = vsyncpa [#allocation9], 1
    %5691 = vsyncpa [#allocation12], 1
    %5692 = vsyncpa [#allocation15], 1
    %5693 = vsyncpa [#allocation18], 1
    %5694 = vsyncpa [#allocation21], 1
    %5695 = vsyncpa [#allocation10], 1
  %5696 = vsyncmov [#allocation7]
  %s5697 = vpop.sfrf %5696
  %p5698 = scmp.eq.s32.totalorder %s5697, 0
  %p5699 = pneg %p5698
  %5701 = shalt.err (%p5699)

</llo_original>
